<compile_context>
chip_gen: v6e
topology: v6e:2x2x1
jax: 0.10.0
libtpu: 0.0.40
codegen_flags: <defaults>
</compile_context>

<pallas_src>
import functools

import jax
import jax.numpy as jnp
from jax.experimental import pallas as pl
from jax.experimental.pallas import tpu as pltpu

DROPOUT_P = 0.2
N_EMBED = 384            # matches the reference module (multiple of 128)
HIDDEN = 4 * N_EMBED     # 1536


def _ffwd_kernel(seed_ref, x_ref, w1_ref, b1_ref, w2_ref, b2_ref, *rest,
                 training: bool, hw_prng: bool, h_chunk: int, dropout_p: float):
    """One (tm, C) row tile of Linear(C->H) -> ReLU -> Linear(H->C) -> Dropout."""
    if training and not hw_prng:
        bits_ref, o_ref = rest          # portable dropout path: bits come in as input
    else:
        (o_ref,) = rest

    tm = x_ref.shape[0]
    C = w2_ref.shape[1]
    H = w1_ref.shape[1]

    # MXU inputs in the weight dtype (bf16 by default); accumulate in f32.
    x = x_ref[...].astype(w1_ref.dtype)

    # Hidden-dim chunking: never materialize the full (tm, H) intermediate.
    #   y = sum_c relu(x @ W1[:, c] + b1[c]) @ W2[c, :]   (exact; ReLU is per-element)
    y = jnp.zeros((tm, C), jnp.float32)
    for c in range(H // h_chunk):                       # static, tiny trip count
        lo, hi = c * h_chunk, (c + 1) * h_chunk
        h = jnp.dot(x, w1_ref[:, lo:hi], preferred_element_type=jnp.float32)
        h = jnp.maximum(h + b1_ref[:, lo:hi], 0.0)      # bias + ReLU in f32 (VPU)
        y = y + jnp.dot(h.astype(w2_ref.dtype), w2_ref[lo:hi, :],
                        preferred_element_type=jnp.float32)
    y = y + b2_ref[...]

    if training:
        # Inverted dropout, matching torch.nn.Dropout(p) in training mode.
        if hw_prng:
            # Stride the per-tile seed so adjacent tiles use distant streams.
            pltpu.prng_seed(seed_ref[0] + pl.program_id(0) * 1000003)
            bits = pltpu.bitcast(pltpu.prng_random_bits(y.shape), jnp.uint32)
        else:
            bits = bits_ref[...]
        # keep prob = 1 - floor(p*2^32)/2^32 (off from 1-p by ~2e-10; negligible)
        threshold = jnp.uint32(int(dropout_p * (2 ** 32)))
        y = jnp.where(bits >= threshold, y * (1.0 / (1.0 - dropout_p)), 0.0)

    o_ref[...] = y.astype(o_ref.dtype)


def _pick_row_tile(M: int, row_align: int, tm_max: int = 1024) -> int:
    """Aligned divisor of M, <= tm_max; prefer even grid count (v7x megacore
    balance) and 128-multiple tiles (full MXU row occupancy on v5e)."""
    if M % row_align != 0:
        return M                        # full-extent block is always legal
    cands = [t for t in range(row_align, min(tm_max, M) + 1, row_align)
             if M % t == 0]
    if not cands:
        return M

    def score(t):
        g = M // t
        return (g >= 2 and g % 2 == 0, t % 128 == 0, t)

    return max(cands, key=score)


def feed_forward(x, w1, b1, w2, b2, *, seed: int = 0, training: bool = False,
                 tm: int | None = None, mxu_bf16: bool = True,
                 hw_prng: bool | None = None):
    """Linear(C->4C) -> ReLU -> Linear(4C->C) -> Dropout(0.2) on x[..., C]."""
    orig_shape = x.shape
    C = orig_shape[-1]
    H = w1.shape[1]
    x2 = x.reshape(-1, C)
    M = x2.shape[0]

    if hw_prng is None:
        hw_prng = jax.default_backend() == "tpu"   # in-kernel PRNG only on real TPU

    if mxu_bf16:
        w1 = w1.astype(jnp.bfloat16)
        w2 = w2.astype(jnp.bfloat16)
    b1 = b1.reshape(1, H).astype(jnp.float32)
    b2 = b2.reshape(1, C).astype(jnp.float32)

    # (8,128) tiling: f32 rows align to 8, bf16 rows to 16.
    row_align = 16 if x.dtype == jnp.bfloat16 else 8
    if tm is None:
        tm = _pick_row_tile(M, row_align)
    assert M % tm == 0, "row count must be divisible by the row tile"
    grid_m = M // tm

    # Hidden-dim chunk (lane-dense multiple of 128 when possible).
    h_chunk = next((c for c in (512, 384, 256, 128) if H % c == 0), H)

    # Footprint: double-buffered x/out tiles + resident (1-buffer) weights/biases
    # + per-chunk f32 hidden intermediate + f32 output accumulator (+ bits tile).
    act_item = jnp.dtype(x.dtype).itemsize
    w_item = jnp.dtype(w1.dtype).itemsize
    est_vmem = (2 * 2 * tm * C * act_item
                + 2 * C * H * w_item + (H + C) * 4
                + tm * h_chunk * 4
                + tm * C * 4)
    if training and not hw_prng:
        est_vmem += 2 * tm * C * 4
    try:
        vmem_cap = pltpu.get_tpu_info().vmem_capacity_bytes
    except Exception:  # CPU / interpret: no TPU to query
        vmem_cap = 128 << 20
    # Generation-aware limit: 2x headroom over the real footprint, capped at 75%
    # of physical VMEM (matters on v7x's 64 MiB). The 32 MiB floor is compile
    # robustness headroom only -- it is a limit, not an allocation.
    vmem_limit = int(min(max(2 * est_vmem, 32 << 20), (vmem_cap * 3) // 4))

    resident = dict(pipeline_mode=pl.Buffered(1))  # never-changing blocks: 1 buffer
    # TODO(synk): verify in the Mosaic dump that Buffered(1) weight blocks are not
    # re-DMAed per grid step; if they are, switch W1/W2 to memory_space=pl.ANY plus
    # a one-time make_async_copy into VMEM scratch.

    in_specs = [
        pl.BlockSpec((tm, C), lambda i, seed: (i, 0)),               # x tile
        pl.BlockSpec((C, H),  lambda i, seed: (0, 0), **resident),   # W1 (resident)
        pl.BlockSpec((1, H),  lambda i, seed: (0, 0), **resident),   # b1
        pl.BlockSpec((H, C),  lambda i, seed: (0, 0), **resident),   # W2 (resident)
        pl.BlockSpec((1, C),  lambda i, seed: (0, 0), **resident),   # b2
    ]
    args = [jnp.array([seed], dtype=jnp.int32), x2, w1, b1, w2, b2]
    if training and not hw_prng:
        # Portable dropout path (interpret / non-TPU): stream precomputed bits.
        bits = jax.random.bits(jax.random.PRNGKey(seed), (M, C), dtype=jnp.uint32)
        in_specs.append(pl.BlockSpec((tm, C), lambda i, seed: (i, 0)))
        args.append(bits)

    kernel = functools.partial(_ffwd_kernel, training=training, hw_prng=hw_prng,
                               h_chunk=h_chunk, dropout_p=DROPOUT_P)
    out = pl.pallas_call(
        kernel,
        out_shape=jax.ShapeDtypeStruct((M, C), x.dtype),
        grid_spec=pltpu.PrefetchScalarGridSpec(
            num_scalar_prefetch=1,                 # dropout seed, lands in SMEM
            grid=(grid_m,),
            in_specs=in_specs,
            out_specs=pl.BlockSpec((tm, C), lambda i, seed: (i, 0)),
        ),
        compiler_params=pltpu.CompilerParams(
            dimension_semantics=("parallel",),     # row tiles are independent
            vmem_limit_bytes=vmem_limit,
        ),
    )(*args)
    return out.reshape(orig_shape)


def init_params(key, n_embed, dtype=jnp.float32):
    """Init mimicking torch.nn.Linear default (U[-1/sqrt(fan_in), 1/sqrt(fan_in)])."""
    hidden = 4 * n_embed
    k1, k2, k3, k4 = jax.random.split(key, 4)
    lim1 = 1.0 / jnp.sqrt(n_embed)
    lim2 = 1.0 / jnp.sqrt(hidden)
    w1 = jax.random.uniform(k1, (n_embed, hidden), dtype, -lim1, lim1)
    b1 = jax.random.uniform(k2, (1, hidden), dtype, -lim1, lim1)
    w2 = jax.random.uniform(k3, (hidden, n_embed), dtype, -lim2, lim2)
    b2 = jax.random.uniform(k4, (1, n_embed), dtype, -lim2, lim2)
    return w1, b1, w2, b2


if __name__ == "__main__":
    key = jax.random.PRNGKey(0)
    kx, kp = jax.random.split(key)

    # Small demo shapes (batch=2, seq=8, n_embed=384 -> hidden=1536).
    # NOTE: perf characteristics should be judged at realistic M (>= a few
    # thousand rows), not at M=16 — here we only validate correctness.
    B, T = 2, 8
    x = jax.random.normal(kx, (B, T, N_EMBED), dtype=jnp.float32)
    w1, b1, w2, b2 = init_params(kp, N_EMBED)
    x2 = x.reshape(-1, N_EMBED)

    # --- eval mode, default bf16-MXU path vs a bf16-simulated reference -------
    out = jax.block_until_ready(feed_forward(x, w1, b1, w2, b2, training=False))
    assert out.shape == x.shape and out.dtype == x.dtype
    h_ref = jnp.maximum(
        jnp.dot(x2.astype(jnp.bfloat16), w1.astype(jnp.bfloat16),
                preferred_element_type=jnp.float32) + b1, 0.0)
    ref = (jnp.dot(h_ref.astype(jnp.bfloat16), w2.astype(jnp.bfloat16),
                   preferred_element_type=jnp.float32) + b2).reshape(x.shape)
    assert jnp.allclose(out, ref, atol=1e-2, rtol=1e-2), "bf16 path mismatch"

    # --- eval mode, f32-MXU path vs the full-precision reference --------------
    out_f32 = jax.block_until_ready(
        feed_forward(x, w1, b1, w2, b2, training=False, mxu_bf16=False))
    hi = jax.lax.Precision.HIGHEST
    h32 = jnp.maximum(jnp.dot(x2, w1, precision=hi) + b1, 0.0)
    ref32 = (jnp.dot(h32, w2, precision=hi) + b2).reshape(x.shape)
    assert jnp.allclose(out_f32, ref32, atol=2e-3, rtol=2e-3), "f32 path mismatch"

    # --- training mode: exercises the fused inverted-dropout path -------------
    out_tr = jax.block_until_ready(
        feed_forward(x, w1, b1, w2, b2, seed=123, training=True))
    keep_rate = float(jnp.mean((out_tr != 0).astype(jnp.float32)))
    assert 0.70 < keep_rate < 0.90, f"dropout keep rate {keep_rate} out of range"

    print("KERNEL_OK")
</pallas_src>

<mosaic_0001>
module attributes {stable_mosaic.version = 11 : i64} {
  func.func @_ffwd_kernel(%arg0: i32, %arg1: memref<1xi32, #tpu.memory_space<smem>>, %arg2: memref<8x384xf32, #tpu.memory_space<vmem>>, %arg3: memref<384x1536xbf16, #tpu.memory_space<vmem>>, %arg4: memref<1x1536xf32, #tpu.memory_space<vmem>>, %arg5: memref<1536x384xbf16, #tpu.memory_space<vmem>>, %arg6: memref<1x384xf32, #tpu.memory_space<vmem>>, %arg7: memref<8x384xf32, #tpu.memory_space<vmem>>) attributes {dimension_semantics = [#tpu.dimension_semantics<parallel>], iteration_bounds = array<i64: 2>, scalar_prefetch = 1 : i64, scratch_operands = 0 : i64, tpu.core_type = #tpu.core_type<tc>, window_params = [{transform_indices = @transform_0, window_bounds = array<i64: 8, 384>}, {pipeline_mode = #tpu.pipeline_mode<synchronous>, transform_indices = @transform_1, window_bounds = array<i64: 384, 1536>}, {pipeline_mode = #tpu.pipeline_mode<synchronous>, transform_indices = @transform_2, window_bounds = array<i64: 1, 1536>}, {pipeline_mode = #tpu.pipeline_mode<synchronous>, transform_indices = @transform_3, window_bounds = array<i64: 1536, 384>}, {pipeline_mode = #tpu.pipeline_mode<synchronous>, transform_indices = @transform_4, window_bounds = array<i64: 1, 384>}, {transform_indices = @transform_5, window_bounds = array<i64: 8, 384>}]} {
    %c0 = arith.constant 0 : index
    %c0_0 = arith.constant 0 : index
    %0 = vector.load %arg2[%c0, %c0_0] : memref<8x384xf32, #tpu.memory_space<vmem>>, vector<8x384xf32>
    %1 = arith.truncf %0 : vector<8x384xf32> to vector<8x384xbf16>
    %cst = arith.constant 0.000000e+00 : f32
    %2 = vector.broadcast %cst : f32 to vector<8x384xf32>
    %c0_1 = arith.constant 0 : index
    %c0_2 = arith.constant 0 : index
    %3 = vector.load %arg3[%c0_1, %c0_2] : memref<384x1536xbf16, #tpu.memory_space<vmem>>, vector<384x512xbf16>
    %cst_3 = arith.constant dense<0.000000e+00> : vector<8x512xf32>
    %4 = tpu.matmul %1, %3, %cst_3 {dimension_numbers = #tpu.dot_dimension_numbers<[1], [0], [0], [1], [0, 0, 1, 1], [], []>} : vector<8x384xbf16>, vector<384x512xbf16>, vector<8x512xf32> -> vector<8x512xf32>
    %c0_4 = arith.constant 0 : index
    %c0_5 = arith.constant 0 : index
    %5 = vector.load %arg4[%c0_4, %c0_5] : memref<1x1536xf32, #tpu.memory_space<vmem>>, vector<1x512xf32>
    %6 = vector.broadcast %5 : vector<1x512xf32> to vector<8x512xf32>
    %7 = arith.addf %4, %6 : vector<8x512xf32>
    %cst_6 = arith.constant 0.000000e+00 : f32
    %8 = vector.broadcast %cst_6 : f32 to vector<8x512xf32>
    %9 = arith.maximumf %7, %8 : vector<8x512xf32>
    %10 = arith.truncf %9 : vector<8x512xf32> to vector<8x512xbf16>
    %c0_7 = arith.constant 0 : index
    %c0_8 = arith.constant 0 : index
    %11 = vector.load %arg5[%c0_7, %c0_8] : memref<1536x384xbf16, #tpu.memory_space<vmem>>, vector<512x384xbf16>
    %cst_9 = arith.constant dense<0.000000e+00> : vector<8x384xf32>
    %12 = tpu.matmul %10, %11, %cst_9 {dimension_numbers = #tpu.dot_dimension_numbers<[1], [0], [0], [1], [0, 0, 1, 1], [], []>} : vector<8x512xbf16>, vector<512x384xbf16>, vector<8x384xf32> -> vector<8x384xf32>
    %13 = arith.addf %2, %12 : vector<8x384xf32>
    %c0_10 = arith.constant 0 : index
    %c512 = arith.constant 512 : index
    %14 = vector.load %arg3[%c0_10, %c512] : memref<384x1536xbf16, #tpu.memory_space<vmem>>, vector<384x512xbf16>
    %cst_11 = arith.constant dense<0.000000e+00> : vector<8x512xf32>
    %15 = tpu.matmul %1, %14, %cst_11 {dimension_numbers = #tpu.dot_dimension_numbers<[1], [0], [0], [1], [0, 0, 1, 1], [], []>} : vector<8x384xbf16>, vector<384x512xbf16>, vector<8x512xf32> -> vector<8x512xf32>
    %c0_12 = arith.constant 0 : index
    %c512_13 = arith.constant 512 : index
    %16 = vector.load %arg4[%c0_12, %c512_13] : memref<1x1536xf32, #tpu.memory_space<vmem>>, vector<1x512xf32>
    %17 = vector.broadcast %16 : vector<1x512xf32> to vector<8x512xf32>
    %18 = arith.addf %15, %17 : vector<8x512xf32>
    %cst_14 = arith.constant 0.000000e+00 : f32
    %19 = vector.broadcast %cst_14 : f32 to vector<8x512xf32>
    %20 = arith.maximumf %18, %19 : vector<8x512xf32>
    %21 = arith.truncf %20 : vector<8x512xf32> to vector<8x512xbf16>
    %c512_15 = arith.constant 512 : index
    %c0_16 = arith.constant 0 : index
    %22 = vector.load %arg5[%c512_15, %c0_16] : memref<1536x384xbf16, #tpu.memory_space<vmem>>, vector<512x384xbf16>
    %cst_17 = arith.constant dense<0.000000e+00> : vector<8x384xf32>
    %23 = tpu.matmul %21, %22, %cst_17 {dimension_numbers = #tpu.dot_dimension_numbers<[1], [0], [0], [1], [0, 0, 1, 1], [], []>} : vector<8x512xbf16>, vector<512x384xbf16>, vector<8x384xf32> -> vector<8x384xf32>
    %24 = arith.addf %13, %23 : vector<8x384xf32>
    %c0_18 = arith.constant 0 : index
    %c1024 = arith.constant 1024 : index
    %25 = vector.load %arg3[%c0_18, %c1024] : memref<384x1536xbf16, #tpu.memory_space<vmem>>, vector<384x512xbf16>
    %cst_19 = arith.constant dense<0.000000e+00> : vector<8x512xf32>
    %26 = tpu.matmul %1, %25, %cst_19 {dimension_numbers = #tpu.dot_dimension_numbers<[1], [0], [0], [1], [0, 0, 1, 1], [], []>} : vector<8x384xbf16>, vector<384x512xbf16>, vector<8x512xf32> -> vector<8x512xf32>
    %c0_20 = arith.constant 0 : index
    %c1024_21 = arith.constant 1024 : index
    %27 = vector.load %arg4[%c0_20, %c1024_21] : memref<1x1536xf32, #tpu.memory_space<vmem>>, vector<1x512xf32>
    %28 = vector.broadcast %27 : vector<1x512xf32> to vector<8x512xf32>
    %29 = arith.addf %26, %28 : vector<8x512xf32>
    %cst_22 = arith.constant 0.000000e+00 : f32
    %30 = vector.broadcast %cst_22 : f32 to vector<8x512xf32>
    %31 = arith.maximumf %29, %30 : vector<8x512xf32>
    %32 = arith.truncf %31 : vector<8x512xf32> to vector<8x512xbf16>
    %c1024_23 = arith.constant 1024 : index
    %c0_24 = arith.constant 0 : index
    %33 = vector.load %arg5[%c1024_23, %c0_24] : memref<1536x384xbf16, #tpu.memory_space<vmem>>, vector<512x384xbf16>
    %cst_25 = arith.constant dense<0.000000e+00> : vector<8x384xf32>
    %34 = tpu.matmul %32, %33, %cst_25 {dimension_numbers = #tpu.dot_dimension_numbers<[1], [0], [0], [1], [0, 0, 1, 1], [], []>} : vector<8x512xbf16>, vector<512x384xbf16>, vector<8x384xf32> -> vector<8x384xf32>
    %35 = arith.addf %24, %34 : vector<8x384xf32>
    %c0_26 = arith.constant 0 : index
    %c0_27 = arith.constant 0 : index
    %36 = vector.load %arg6[%c0_26, %c0_27] : memref<1x384xf32, #tpu.memory_space<vmem>>, vector<1x384xf32>
    %37 = vector.broadcast %36 : vector<1x384xf32> to vector<8x384xf32>
    %38 = arith.addf %35, %37 : vector<8x384xf32>
    %c0_28 = arith.constant 0 : index
    %c0_29 = arith.constant 0 : index
    %39 = vector.load %arg7[%c0_28, %c0_29] : memref<8x384xf32, #tpu.memory_space<vmem>>, vector<8x384xf32>
    tpu.vector_store %arg7[%c0_28, %c0_29], %38 {strides = array<i32>} : memref<8x384xf32, #tpu.memory_space<vmem>>, vector<8x384xf32>,
    return
  }
  func.func @transform_0(%arg0: i32, %arg1: memref<1xi32, #tpu.memory_space<smem>>) -> (i32, i32) {
    %c0_i32 = arith.constant 0 : i32
    %c0_i32_0 = arith.constant 0 : i32
    return %arg0, %c0_i32 : i32, i32
  }
  func.func @transform_1(%arg0: i32, %arg1: memref<1xi32, #tpu.memory_space<smem>>) -> (i32, i32) {
    %c0_i32 = arith.constant 0 : i32
    %c0_i32_0 = arith.constant 0 : i32
    %c0_i32_1 = arith.constant 0 : i32
    return %c0_i32, %c0_i32_0 : i32, i32
  }
  func.func @transform_2(%arg0: i32, %arg1: memref<1xi32, #tpu.memory_space<smem>>) -> (i32, i32) {
    %c0_i32 = arith.constant 0 : i32
    %c0_i32_0 = arith.constant 0 : i32
    %c0_i32_1 = arith.constant 0 : i32
    return %c0_i32, %c0_i32_0 : i32, i32
  }
  func.func @transform_3(%arg0: i32, %arg1: memref<1xi32, #tpu.memory_space<smem>>) -> (i32, i32) {
    %c0_i32 = arith.constant 0 : i32
    %c0_i32_0 = arith.constant 0 : i32
    %c0_i32_1 = arith.constant 0 : i32
    return %c0_i32, %c0_i32_0 : i32, i32
  }
  func.func @transform_4(%arg0: i32, %arg1: memref<1xi32, #tpu.memory_space<smem>>) -> (i32, i32) {
    %c0_i32 = arith.constant 0 : i32
    %c0_i32_0 = arith.constant 0 : i32
    %c0_i32_1 = arith.constant 0 : i32
    return %c0_i32, %c0_i32_0 : i32, i32
  }
  func.func @transform_5(%arg0: i32, %arg1: memref<1xi32, #tpu.memory_space<smem>>) -> (i32, i32) {
    %c0_i32 = arith.constant 0 : i32
    %c0_i32_0 = arith.constant 0 : i32
    return %arg0, %c0_i32 : i32, i32
  }
}

</mosaic_0001>

<llo_original>
// kernel: tpu_custom_call.1
$region0: #{tpu_custom_call.1}
  #allocation0 [shape = 'u32[]', space=smem, size = 0x4, offset = 0x4, fixed_abs, tag = 'smem constant byte address 0x4 - core index']
  #allocation1 [shape = 'u32[144,128]{1,0:T(1,128)}', space=vmem, size = 0x12000, scoped, tag = 'internal scratch']
  #allocation2 [shape = 's32[1]{0}', space=sflag, size = 0x4, scoped, tag = 'scoped memory for tpu_custom_call.1']
  #allocation3 [shape = 's32[1]{0:T(128)S(6)}', space=smem, size = 0x200, scoped, tag = 'prefetched SMEM operand 0']
  %s0 = inlined_call_operand.<no memory space> [shape: s32[1], index: 0, kind: input, shape index: {}]
  %s1 = inlined_call_operand.hbm [shape: f32[16,384], index: 1, kind: input, shape index: {}]
  %s2 = inlined_call_operand.hbm [shape: bf16[384,1536], index: 2, kind: input, shape index: {}]
  %s3 = inlined_call_operand.hbm [shape: f32[1,1536], index: 3, kind: input, shape index: {}]
  %s4 = inlined_call_operand.hbm [shape: bf16[1536,384], index: 4, kind: input, shape index: {}]
  %s5 = inlined_call_operand.hbm [shape: f32[1,384], index: 5, kind: input, shape index: {}]
  %s6 = inlined_call_operand.hbm [shape: f32[16,384], index: 6, kind: output, shape index: {}]
  %s7 = sld [smem:[#allocation0]]
  $region73: #{tpu_custom_call.1} parent=0
    _
  %s9 = ssub.s32 1, %s7
  %s10 = scalar_select 0, %s9, %s7
  %11 = sst [smem:[#allocation3]] %s0
  $region1: #{tpu_custom_call.1} parent=0
    #allocation4 [shape = 'u8[24576]{0}', space=vmem, size = 0x6000, scoped, tag = 'input window, operand 1']
    #allocation5 [shape = 's32[2]{0}', space=sflag, size = 0x8, scoped, tag = 'scoped memory for tpu_custom_call.1']
    #allocation6 [shape = 's32[2]{0}', space=sflag, size = 0x8, scoped, tag = 'scoped memory for tpu_custom_call.1']
    #allocation7 [shape = 'u8[1179648]{0}', space=vmem, size = 0x120000, scoped, tag = 'input window, operand 2, single buffered']
    #allocation8 [shape = 's32[1]{0}', space=sflag, size = 0x4, scoped, tag = 'scoped memory for tpu_custom_call.1']
    #allocation9 [shape = 'u8[6144]{0}', space=vmem, size = 0x1800, scoped, tag = 'input window, operand 3, single buffered']
    #allocation10 [shape = 'u8[1179648]{0}', space=vmem, size = 0x120000, scoped, tag = 'input window, operand 4, single buffered']
    #allocation11 [shape = 's32[1]{0}', space=sflag, size = 0x4, scoped, tag = 'scoped memory for tpu_custom_call.1']
    #allocation12 [shape = 'u8[1536]{0}', space=vmem, size = 0x800, scoped, tag = 'input window, operand 5, single buffered']
    #allocation13 [shape = 'u8[24576]{0}', space=vmem, size = 0x6000, scoped, tag = 'output window, operand 0']
    %12 = vsyncpa [#allocation5], 0
    %s13 = scalar_lea.sflag [#allocation5], 1
    %14 = vsyncpa %s13, 0
    %15 = vsyncpa [#allocation8], 0
    %16 = vsyncpa [#allocation11], 0
    %17 = vsyncpa [#allocation6], 0
    %s18 = scalar_lea.sflag [#allocation6], 1
    %19 = vsyncpa %s18, 0
    loop: start=0, step=1, limit=4
    $region2: #{tpu_custom_call.1} parent=1 // loop_pre_header
      _
    $region3: #{tpu_custom_call.1} parent=1 // loop_header
      %s21 = sphi 0, %s25
      %p22 = scmp.ge.s32.totalorder %s21, 4
      %s31 = sphi 0, %s33
      %s34 = sphi 0, %s31
      %s35 = sphi 0, %s34
      %s51 = sphi 0, %s35
      %s55 = sphi 0, %s55
      %s57 = sphi 0, %s55
      %s58 = sphi 0, %s57
      %s72 = sphi 0, %s58
      %s76 = sphi 0, %s76
      %s78 = sphi 0, %s76
      %s79 = sphi 0, %s78
      %s93 = sphi 0, %s79
      %s97 = sphi 0, %s97
      %s99 = sphi 0, %s97
      %s100 = sphi 0, %s99
      %s114 = sphi 0, %s100
      %s118 = sphi 0, %s118
      %s120 = sphi 0, %s118
      %s121 = sphi 0, %s120
      %s135 = sphi 0, %s121
      %s141 = sphi 0, %s143
      %s144 = sphi 0, %s141
      %s145 = sphi 0, %s144
      %s161 = sphi 0, %s145
    $region4: #{tpu_custom_call.1} parent=1 // loop_header_branch
      %24 = sbr.rel (%p22) target = $region8
    $region5: #{tpu_custom_call.1} parent=1 // loop_body
      %s26 = ssub.s32 %s21, 1
      %s27 = ssub.s32 %s21, 2
      %s28 = sadd.s32 %s21, 1
      %s29 = ssub.s32 %s21, %s28
      %p30 = scmp.eq.s32.totalorder %s29, 0
      %s32 = sadd.s32 %s31, 1
      %s33 = scalar_select %p30, %s31, %s32
      %p36 = pneg %p30
      %p37 = scmp.eq.s32.totalorder %s21, 1
      %p38 = por %p36, %p37
      %p39 = scmp.ne.s32.totalorder %s31, %s34
      %p40 = scmp.eq.s32.totalorder %s21, 0
      %p41 = por %p39, %p40
      %p42 = scmp.ne.s32.totalorder %s31, %s34
      %p43 = scmp.eq.s32.totalorder %s26, 1
      %p44 = por %p42, %p43
      %p45 = scmp.ne.s32.totalorder %s34, %s35
      %p46 = scmp.eq.s32.totalorder %s26, 0
      %p47 = por %p45, %p46
      %p48 = scmp.ne.s32.totalorder %s34, %s35
      %p49 = scmp.eq.s32.totalorder %s27, 1
      %p50 = por %p48, %p49
      %p52 = scmp.ne.s32.totalorder %s35, %s51
      %p53 = scmp.eq.s32.totalorder %s27, 0
      %p54 = por %p52, %p53
      %s56 = sadd.s32 %s55, 1
      %p59 = scmp.eq.s32.totalorder %s21, 1
      %p60 = scmp.ne.s32.totalorder %s55, %s57
      %p61 = scmp.eq.s32.totalorder %s21, 0
      %p62 = por %p60, %p61
      %p63 = scmp.ne.s32.totalorder %s55, %s57
      %p64 = scmp.eq.s32.totalorder %s26, 1
      %p65 = por %p63, %p64
      %p66 = scmp.ne.s32.totalorder %s57, %s58
      %p67 = scmp.eq.s32.totalorder %s26, 0
      %p68 = por %p66, %p67
      %p69 = scmp.ne.s32.totalorder %s57, %s58
      %p70 = scmp.eq.s32.totalorder %s27, 1
      %p71 = por %p69, %p70
      %p73 = scmp.ne.s32.totalorder %s58, %s72
      %p74 = scmp.eq.s32.totalorder %s27, 0
      %p75 = por %p73, %p74
      %s77 = sadd.s32 %s76, 1
      %p80 = scmp.eq.s32.totalorder %s21, 1
      %p81 = scmp.ne.s32.totalorder %s76, %s78
      %p82 = scmp.eq.s32.totalorder %s21, 0
      %p83 = por %p81, %p82
      %p84 = scmp.ne.s32.totalorder %s76, %s78
      %p85 = scmp.eq.s32.totalorder %s26, 1
      %p86 = por %p84, %p85
      %p87 = scmp.ne.s32.totalorder %s78, %s79
      %p88 = scmp.eq.s32.totalorder %s26, 0
      %p89 = por %p87, %p88
      %p90 = scmp.ne.s32.totalorder %s78, %s79
      %p91 = scmp.eq.s32.totalorder %s27, 1
      %p92 = por %p90, %p91
      %p94 = scmp.ne.s32.totalorder %s79, %s93
      %p95 = scmp.eq.s32.totalorder %s27, 0
      %p96 = por %p94, %p95
      %s98 = sadd.s32 %s97, 1
      %p101 = scmp.eq.s32.totalorder %s21, 1
      %p102 = scmp.ne.s32.totalorder %s97, %s99
      %p103 = scmp.eq.s32.totalorder %s21, 0
      %p104 = por %p102, %p103
      %p105 = scmp.ne.s32.totalorder %s97, %s99
      %p106 = scmp.eq.s32.totalorder %s26, 1
      %p107 = por %p105, %p106
      %p108 = scmp.ne.s32.totalorder %s99, %s100
      %p109 = scmp.eq.s32.totalorder %s26, 0
      %p110 = por %p108, %p109
      %p111 = scmp.ne.s32.totalorder %s99, %s100
      %p112 = scmp.eq.s32.totalorder %s27, 1
      %p113 = por %p111, %p112
      %p115 = scmp.ne.s32.totalorder %s100, %s114
      %p116 = scmp.eq.s32.totalorder %s27, 0
      %p117 = por %p115, %p116
      %s119 = sadd.s32 %s118, 1
      %p122 = scmp.eq.s32.totalorder %s21, 1
      %p123 = scmp.ne.s32.totalorder %s118, %s120
      %p124 = scmp.eq.s32.totalorder %s21, 0
      %p125 = por %p123, %p124
      %p126 = scmp.ne.s32.totalorder %s118, %s120
      %p127 = scmp.eq.s32.totalorder %s26, 1
      %p128 = por %p126, %p127
      %p129 = scmp.ne.s32.totalorder %s120, %s121
      %p130 = scmp.eq.s32.totalorder %s26, 0
      %p131 = por %p129, %p130
      %p132 = scmp.ne.s32.totalorder %s120, %s121
      %p133 = scmp.eq.s32.totalorder %s27, 1
      %p134 = por %p132, %p133
      %p136 = scmp.ne.s32.totalorder %s121, %s135
      %p137 = scmp.eq.s32.totalorder %s27, 0
      %p138 = por %p136, %p137
      %s139 = ssub.s32 %s21, %s28
      %p140 = scmp.eq.s32.totalorder %s139, 0
      %s142 = sadd.s32 %s141, 1
      %s143 = scalar_select %p140, %s141, %s142
      %p146 = pneg %p140
      %p147 = scmp.eq.s32.totalorder %s21, 1
      %p148 = por %p146, %p147
      %p149 = scmp.ne.s32.totalorder %s141, %s144
      %p150 = scmp.eq.s32.totalorder %s21, 0
      %p151 = por %p149, %p150
      %p152 = scmp.ne.s32.totalorder %s141, %s144
      %p153 = scmp.eq.s32.totalorder %s26, 1
      %p154 = por %p152, %p153
      %p155 = scmp.ne.s32.totalorder %s144, %s145
      %p156 = scmp.eq.s32.totalorder %s26, 0
      %p157 = por %p155, %p156
      %p158 = scmp.ne.s32.totalorder %s144, %s145
      %p159 = scmp.eq.s32.totalorder %s27, 1
      %p160 = por %p158, %p159
      %p162 = scmp.ne.s32.totalorder %s145, %s161
      %p163 = scmp.eq.s32.totalorder %s27, 0
      %p164 = por %p162, %p163
      %p165 = scmp.le.s32.totalorder 1, %s21
      %p166 = scmp.lt.s32.totalorder %s21, 3
      %p167 = pnand %p165, %p166
      %p168 = pneg %p167
      // Predicated region
      $region9: #{tpu_custom_call.1} parent=5 // pred_check
        _
      $region10: #{tpu_custom_call.1} parent=5 // pred_check_branch
        %170 = sbr.rel (%p167) target = $region12
      $region11: #{tpu_custom_call.1} parent=5 // pred_region
        %s171 = ssub.s32 %s21, 1
        // Predicated region
        $region13: #{tpu_custom_call.1} parent=11 // pred_check
          %p172 = pneg %p68
        $region14: #{tpu_custom_call.1} parent=11 // pred_check_branch
          %174 = sbr.rel (%p172) target = $region16
        $region15: #{tpu_custom_call.1} parent=11 // pred_region
          %s176 = ssub.s32 36864, 36864
          %177 = vsyncadd [#allocation8], %s176
          %s178 = sshll.u32 [#allocation7], 4
          %s179 = int_to_ptr.vmem [resolvable:$true] %s178
          %184 = dma.hbm_to_vmem [thread:$0]  %s2, 36864, %s179, [#allocation8], 768, 768, 48
        $region16: #{tpu_custom_call.1} parent=11 // pred_fallthru
          _
        // Predicated region
        $region17: #{tpu_custom_call.1} parent=11 // pred_check
          %p185 = pneg %p89
        $region18: #{tpu_custom_call.1} parent=11 // pred_check_branch
          %187 = sbr.rel (%p185) target = $region20
        $region19: #{tpu_custom_call.1} parent=11 // pred_region
          %s189 = ssub.s32 192, 192
          %190 = vsyncadd [#allocation8], %s189
          %s192 = sshll.u32 [#allocation9], 4
          %s193 = int_to_ptr.vmem [resolvable:$true] %s192
          %195 = dma.hbm_to_vmem [thread:$0]  %s3, 192, %s193, [#allocation8]
        $region20: #{tpu_custom_call.1} parent=11 // pred_fallthru
          _
        // Predicated region
        $region21: #{tpu_custom_call.1} parent=11 // pred_check
          %p196 = pneg %p110
        $region22: #{tpu_custom_call.1} parent=11 // pred_check_branch
          %198 = sbr.rel (%p196) target = $region24
        $region23: #{tpu_custom_call.1} parent=11 // pred_region
          %s200 = ssub.s32 36864, 36864
          %201 = vsyncadd [#allocation11], %s200
          %s202 = sshll.u32 [#allocation10], 4
          %s203 = int_to_ptr.vmem [resolvable:$true] %s202
          %208 = dma.hbm_to_vmem [thread:$0]  %s4, 36864, %s203, [#allocation11], 192, 192, 12
        $region24: #{tpu_custom_call.1} parent=11 // pred_fallthru
          _
        // Predicated region
        $region25: #{tpu_custom_call.1} parent=11 // pred_check
          %p209 = pneg %p131
        $region26: #{tpu_custom_call.1} parent=11 // pred_check_branch
          %211 = sbr.rel (%p209) target = $region28
        $region27: #{tpu_custom_call.1} parent=11 // pred_region
          %s213 = ssub.s32 48, 48
          %214 = vsyncadd [#allocation11], %s213
          %s216 = sshll.u32 [#allocation12], 4
          %s217 = int_to_ptr.vmem [resolvable:$true] %s216
          %219 = dma.hbm_to_vmem [thread:$0]  %s5, 48, %s217, [#allocation11]
        $region28: #{tpu_custom_call.1} parent=11 // pred_fallthru
          _
      $region12: #{tpu_custom_call.1} parent=5 // pred_fallthru
        _
      %p220 = scmp.lt.s32.totalorder %s21, 2
      // Predicated region
      $region29: #{tpu_custom_call.1} parent=5 // pred_check
        %p221 = pneg %p220
      $region30: #{tpu_custom_call.1} parent=5 // pred_check_branch
        %223 = sbr.rel (%p221) target = $region32
      $region31: #{tpu_custom_call.1} parent=5 // pred_region
        // Predicated region
        $region33: #{tpu_custom_call.1} parent=31 // pred_check
          %p224 = pneg %p41
        $region34: #{tpu_custom_call.1} parent=31 // pred_check_branch
          %226 = sbr.rel (%p224) target = $region36
        $region35: #{tpu_custom_call.1} parent=31 // pred_region
          %s227 = sand.u32 %s31, 1
          %s228 = scalar_lea.sflag [#allocation5], %s227
          %s229 = sand.u32 %s31, 1
          %s230 = smul.addr %s229, 24
          %s231 = scalar_lea.vmem [#allocation4], %s230
          %s233 = ssub.s32 384, 384
          %234 = vsyncadd %s228, %s233
          %s235 = smul.addr %s21, 3
          %s236 = smul.addr %s235, 128
          %s237 = scalar_lea.hbm %s1, %s236
          %s239 = sshll.u32 %s231, 4
          %s240 = int_to_ptr.vmem [resolvable:$true] %s239
          %242 = dma.hbm_to_vmem [thread:$0]  %s237, 384, %s240, %s228
        $region36: #{tpu_custom_call.1} parent=31 // pred_fallthru
          _
      $region32: #{tpu_custom_call.1} parent=5 // pred_fallthru
        _
      %p243 = scmp.le.s32.totalorder 1, %s21
      %p244 = scmp.lt.s32.totalorder %s21, 3
      %p245 = pnand %p243, %p244
      %p246 = pneg %p245
      // Predicated region
      $region37: #{tpu_custom_call.1} parent=5 // pred_check
        _
      $region38: #{tpu_custom_call.1} parent=5 // pred_check_branch
        %248 = sbr.rel (%p245) target = $region40
      $region39: #{tpu_custom_call.1} parent=5 // pred_region
        %s249 = ssub.s32 %s21, 1
        %s250 = sand.u32 %s34, 1
        %s251 = scalar_lea.sflag [#allocation5], %s250
        %s252 = sand.u32 %s34, 1
        %s253 = smul.addr %s252, 24
        %s254 = scalar_lea.vmem [#allocation4], %s253
        // Predicated region
        $region41: #{tpu_custom_call.1} parent=39 // pred_check
          %p255 = pneg %p47
        $region42: #{tpu_custom_call.1} parent=39 // pred_check_branch
          %257 = sbr.rel (%p255) target = $region44
        $region43: #{tpu_custom_call.1} parent=39 // pred_region
          %258 = dma.done %s251, 384
        $region44: #{tpu_custom_call.1} parent=39 // pred_fallthru
          _
        // Predicated region
        $region45: #{tpu_custom_call.1} parent=39 // pred_check
          %p259 = pneg %p68
        $region46: #{tpu_custom_call.1} parent=39 // pred_check_branch
          %261 = sbr.rel (%p259) target = $region48
        $region47: #{tpu_custom_call.1} parent=39 // pred_region
          %262 = dma.done [#allocation8], 36864
        $region48: #{tpu_custom_call.1} parent=39 // pred_fallthru
          _
        // Predicated region
        $region49: #{tpu_custom_call.1} parent=39 // pred_check
          %p263 = pneg %p89
        $region50: #{tpu_custom_call.1} parent=39 // pred_check_branch
          %265 = sbr.rel (%p263) target = $region52
        $region51: #{tpu_custom_call.1} parent=39 // pred_region
          %266 = dma.done [#allocation8], 192
        $region52: #{tpu_custom_call.1} parent=39 // pred_fallthru
          _
        // Predicated region
        $region53: #{tpu_custom_call.1} parent=39 // pred_check
          %p267 = pneg %p110
        $region54: #{tpu_custom_call.1} parent=39 // pred_check_branch
          %269 = sbr.rel (%p267) target = $region56
        $region55: #{tpu_custom_call.1} parent=39 // pred_region
          %270 = dma.done [#allocation11], 36864
        $region56: #{tpu_custom_call.1} parent=39 // pred_fallthru
          _
        // Predicated region
        $region57: #{tpu_custom_call.1} parent=39 // pred_check
          %p271 = pneg %p131
        $region58: #{tpu_custom_call.1} parent=39 // pred_check_branch
          %273 = sbr.rel (%p271) target = $region60
        $region59: #{tpu_custom_call.1} parent=39 // pred_region
          %274 = dma.done [#allocation11], 48
        $region60: #{tpu_custom_call.1} parent=39 // pred_fallthru
          _
        %s275 = sand.u32 %s34, 1
        %s276 = scalar_lea.sflag [#allocation5], %s275
        %s277 = sand.u32 %s34, 1
        %s278 = smul.addr %s277, 24
        %s279 = scalar_lea.vmem [#allocation4], %s278
        %p280 = pneg %p47
        %p281 = pneg %p44
        %p282 = pneg %p68
        %p283 = pneg %p65
        %p284 = pneg %p89
        %p285 = pneg %p86
        %p286 = pneg %p110
        %p287 = pneg %p107
        %p288 = pneg %p131
        %p289 = pneg %p128
        %p290 = pneg %p157
        %p291 = pneg %p154
        %s292 = sand.u32 %s144, 1
        %s293 = scalar_lea.sflag [#allocation6], %s292
        %s294 = sand.u32 %s144, 1
        %s295 = smul.addr %s294, 24
        %s296 = scalar_lea.vmem [#allocation13], %s295
        %v298 = vld [vmem:[%s254] sm:$0xff]
        %v299 = vld [vmem:[%s254 + $0x8] sm:$0xff]
        %v300 = vld [vmem:[%s254 + $0x10] sm:$0xff]
        %v301 = vpack.c.bf16 %v298, %v298
        %v302 = vpack.c.bf16 %v299, %v299
        %v303 = vpack.c.bf16 %v300, %v300
        %v304 = vld [vmem:[#allocation7] sm:$0xff]
        %v305 = vld [vmem:[#allocation7 + $0x8] sm:$0xff]
        %v306 = vld [vmem:[#allocation7 + $0x30] sm:$0xff]
        %v307 = vld [vmem:[#allocation7 + $0x38] sm:$0xff]
        %v308 = vld [vmem:[#allocation7 + $0x60] sm:$0xff]
        %v309 = vld [vmem:[#allocation7 + $0x68] sm:$0xff]
        %v310 = vld [vmem:[#allocation7 + $0x90] sm:$0xff]
        %v311 = vld [vmem:[#allocation7 + $0x98] sm:$0xff]
        %v312 = vld [vmem:[#allocation7 + $0xc0] sm:$0xff]
        %v313 = vld [vmem:[#allocation7 + $0xc8] sm:$0xff]
        %v314 = vld [vmem:[#allocation7 + $0xf0] sm:$0xff]
        %v315 = vld [vmem:[#allocation7 + $0xf8] sm:$0xff]
        %v316 = vld [vmem:[#allocation7 + $0x120] sm:$0xff]
        %v317 = vld [vmem:[#allocation7 + $0x128] sm:$0xff]
        %v318 = vld [vmem:[#allocation7 + $0x150] sm:$0xff]
        %v319 = vld [vmem:[#allocation7 + $0x158] sm:$0xff]
        %v320 = vld [vmem:[#allocation7 + $0x180] sm:$0xff]
        %v321 = vld [vmem:[#allocation7 + $0x188] sm:$0xff]
        %v322 = vld [vmem:[#allocation7 + $0x1b0] sm:$0xff]
        %v323 = vld [vmem:[#allocation7 + $0x1b8] sm:$0xff]
        %v324 = vld [vmem:[#allocation7 + $0x1e0] sm:$0xff]
        %v325 = vld [vmem:[#allocation7 + $0x1e8] sm:$0xff]
        %v326 = vld [vmem:[#allocation7 + $0x210] sm:$0xff]
        %v327 = vld [vmem:[#allocation7 + $0x218] sm:$0xff]
        %v328 = vld [vmem:[#allocation7 + $0x240] sm:$0xff]
        %v329 = vld [vmem:[#allocation7 + $0x248] sm:$0xff]
        %v330 = vld [vmem:[#allocation7 + $0x270] sm:$0xff]
        %v331 = vld [vmem:[#allocation7 + $0x278] sm:$0xff]
        %v332 = vld [vmem:[#allocation7 + $0x2a0] sm:$0xff]
        %v333 = vld [vmem:[#allocation7 + $0x2a8] sm:$0xff]
        %v334 = vld [vmem:[#allocation7 + $0x2d0] sm:$0xff]
        %v335 = vld [vmem:[#allocation7 + $0x2d8] sm:$0xff]
        %v336 = vld [vmem:[#allocation7 + $0x300] sm:$0xff]
        %v337 = vld [vmem:[#allocation7 + $0x308] sm:$0xff]
        %v338 = vld [vmem:[#allocation7 + $0x330] sm:$0xff]
        %v339 = vld [vmem:[#allocation7 + $0x338] sm:$0xff]
        %v340 = vld [vmem:[#allocation7 + $0x360] sm:$0xff]
        %v341 = vld [vmem:[#allocation7 + $0x368] sm:$0xff]
        %v342 = vld [vmem:[#allocation7 + $0x390] sm:$0xff]
        %v343 = vld [vmem:[#allocation7 + $0x398] sm:$0xff]
        %v344 = vld [vmem:[#allocation7 + $0x3c0] sm:$0xff]
        %v345 = vld [vmem:[#allocation7 + $0x3c8] sm:$0xff]
        %v346 = vld [vmem:[#allocation7 + $0x3f0] sm:$0xff]
        %v347 = vld [vmem:[#allocation7 + $0x3f8] sm:$0xff]
        %v348 = vld [vmem:[#allocation7 + $0x420] sm:$0xff]
        %v349 = vld [vmem:[#allocation7 + $0x428] sm:$0xff]
        %v350 = vld [vmem:[#allocation7 + $0x450] sm:$0xff]
        %v351 = vld [vmem:[#allocation7 + $0x458] sm:$0xff]
        %v352 = vld [vmem:[#allocation7 + $0x480] sm:$0xff]
        %v353 = vld [vmem:[#allocation7 + $0x488] sm:$0xff]
        %v354 = vld [vmem:[#allocation7 + $0x4b0] sm:$0xff]
        %v355 = vld [vmem:[#allocation7 + $0x4b8] sm:$0xff]
        %v356 = vld [vmem:[#allocation7 + $0x4e0] sm:$0xff]
        %v357 = vld [vmem:[#allocation7 + $0x4e8] sm:$0xff]
        %v358 = vld [vmem:[#allocation7 + $0x510] sm:$0xff]
        %v359 = vld [vmem:[#allocation7 + $0x518] sm:$0xff]
        %v360 = vld [vmem:[#allocation7 + $0x540] sm:$0xff]
        %v361 = vld [vmem:[#allocation7 + $0x548] sm:$0xff]
        %v362 = vld [vmem:[#allocation7 + $0x570] sm:$0xff]
        %v363 = vld [vmem:[#allocation7 + $0x578] sm:$0xff]
        %v364 = vld [vmem:[#allocation7 + $0x5a0] sm:$0xff]
        %v365 = vld [vmem:[#allocation7 + $0x5a8] sm:$0xff]
        %v366 = vld [vmem:[#allocation7 + $0x5d0] sm:$0xff]
        %v367 = vld [vmem:[#allocation7 + $0x5d8] sm:$0xff]
        %v368 = vld [vmem:[#allocation7 + $0x600] sm:$0xff]
        %v369 = vld [vmem:[#allocation7 + $0x608] sm:$0xff]
        %v370 = vld [vmem:[#allocation7 + $0x630] sm:$0xff]
        %v371 = vld [vmem:[#allocation7 + $0x638] sm:$0xff]
        %v372 = vld [vmem:[#allocation7 + $0x660] sm:$0xff]
        %v373 = vld [vmem:[#allocation7 + $0x668] sm:$0xff]
        %v374 = vld [vmem:[#allocation7 + $0x690] sm:$0xff]
        %v375 = vld [vmem:[#allocation7 + $0x698] sm:$0xff]
        %v376 = vld [vmem:[#allocation7 + $0x6c0] sm:$0xff]
        %v377 = vld [vmem:[#allocation7 + $0x6c8] sm:$0xff]
        %v378 = vld [vmem:[#allocation7 + $0x6f0] sm:$0xff]
        %v379 = vld [vmem:[#allocation7 + $0x6f8] sm:$0xff]
        %v380 = vld [vmem:[#allocation7 + $0x720] sm:$0xff]
        %v381 = vld [vmem:[#allocation7 + $0x728] sm:$0xff]
        %v382 = vld [vmem:[#allocation7 + $0x750] sm:$0xff]
        %v383 = vld [vmem:[#allocation7 + $0x758] sm:$0xff]
        %v384 = vld [vmem:[#allocation7 + $0x780] sm:$0xff]
        %v385 = vld [vmem:[#allocation7 + $0x788] sm:$0xff]
        %v386 = vld [vmem:[#allocation7 + $0x7b0] sm:$0xff]
        %v387 = vld [vmem:[#allocation7 + $0x7b8] sm:$0xff]
        %v388 = vld [vmem:[#allocation7 + $0x7e0] sm:$0xff]
        %v389 = vld [vmem:[#allocation7 + $0x7e8] sm:$0xff]
        %v390 = vld [vmem:[#allocation7 + $0x810] sm:$0xff]
        %v391 = vld [vmem:[#allocation7 + $0x818] sm:$0xff]
        %v392 = vld [vmem:[#allocation7 + $0x840] sm:$0xff]
        %v393 = vld [vmem:[#allocation7 + $0x848] sm:$0xff]
        %v394 = vld [vmem:[#allocation7 + $0x870] sm:$0xff]
        %v395 = vld [vmem:[#allocation7 + $0x878] sm:$0xff]
        %v396 = vld [vmem:[#allocation7 + $0x8a0] sm:$0xff]
        %v397 = vld [vmem:[#allocation7 + $0x8a8] sm:$0xff]
        %v398 = vld [vmem:[#allocation7 + $0x8d0] sm:$0xff]
        %v399 = vld [vmem:[#allocation7 + $0x8d8] sm:$0xff]
        %v400 = vld [vmem:[#allocation9] sm:$0xf]
        %v402 = vlaneseq
        %v403 = vshrl.u32 %v402, 7
        %v404 = vsub.s32 0, %v403
        %v405 = vrot.slane %v400, %v404
        %v406 = vlaneseq
        %v407 = vshrl.u32 %v406, 7
        %v408 = vsub.s32 1, %v407
        %v409 = vrot.slane %v400, %v408
        %v410 = vlaneseq
        %v411 = vshrl.u32 %v410, 7
        %v412 = vsub.s32 2, %v411
        %v413 = vrot.slane %v400, %v412
        %v414 = vlaneseq
        %v415 = vshrl.u32 %v414, 7
        %v416 = vsub.s32 3, %v415
        %v417 = vrot.slane %v400, %v416
        %v518 = vunpack.c.l.b16 %v304
        %v519 = vunpack.c.h.b16 %v304
        %v520 = vunpack.c.l.b16 %v305
        %v521 = vunpack.c.h.b16 %v305
        %v522 = vunpack.c.l.b16 %v306
        %v523 = vunpack.c.h.b16 %v306
        %v524 = vunpack.c.l.b16 %v307
        %v525 = vunpack.c.h.b16 %v307
        %v526 = vunpack.c.l.b16 %v308
        %v527 = vunpack.c.h.b16 %v308
        %v528 = vunpack.c.l.b16 %v309
        %v529 = vunpack.c.h.b16 %v309
        %v530 = vunpack.c.l.b16 %v310
        %v531 = vunpack.c.h.b16 %v310
        %v532 = vunpack.c.l.b16 %v311
        %v533 = vunpack.c.h.b16 %v311
        %v534 = vunpack.c.l.b16 %v312
        %v535 = vunpack.c.h.b16 %v312
        %v536 = vunpack.c.l.b16 %v313
        %v537 = vunpack.c.h.b16 %v313
        %v538 = vunpack.c.l.b16 %v314
        %v539 = vunpack.c.h.b16 %v314
        %v540 = vunpack.c.l.b16 %v315
        %v541 = vunpack.c.h.b16 %v315
        %v542 = vunpack.c.l.b16 %v316
        %v543 = vunpack.c.h.b16 %v316
        %v544 = vunpack.c.l.b16 %v317
        %v545 = vunpack.c.h.b16 %v317
        %v546 = vunpack.c.l.b16 %v318
        %v547 = vunpack.c.h.b16 %v318
        %v548 = vunpack.c.l.b16 %v319
        %v549 = vunpack.c.h.b16 %v319
        %v550 = vunpack.c.l.b16 %v320
        %v551 = vunpack.c.h.b16 %v320
        %v552 = vunpack.c.l.b16 %v321
        %v553 = vunpack.c.h.b16 %v321
        %v554 = vunpack.c.l.b16 %v322
        %v555 = vunpack.c.h.b16 %v322
        %v556 = vunpack.c.l.b16 %v323
        %v557 = vunpack.c.h.b16 %v323
        %v558 = vunpack.c.l.b16 %v324
        %v559 = vunpack.c.h.b16 %v324
        %v560 = vunpack.c.l.b16 %v325
        %v561 = vunpack.c.h.b16 %v325
        %v562 = vunpack.c.l.b16 %v326
        %v563 = vunpack.c.h.b16 %v326
        %v564 = vunpack.c.l.b16 %v327
        %v565 = vunpack.c.h.b16 %v327
        %v566 = vunpack.c.l.b16 %v328
        %v567 = vunpack.c.h.b16 %v328
        %v568 = vunpack.c.l.b16 %v329
        %v569 = vunpack.c.h.b16 %v329
        %v570 = vunpack.c.l.b16 %v330
        %v571 = vunpack.c.h.b16 %v330
        %v572 = vunpack.c.l.b16 %v331
        %v573 = vunpack.c.h.b16 %v331
        %v574 = vunpack.c.l.b16 %v332
        %v575 = vunpack.c.h.b16 %v332
        %v576 = vunpack.c.l.b16 %v333
        %v577 = vunpack.c.h.b16 %v333
        %v578 = vunpack.c.l.b16 %v334
        %v579 = vunpack.c.h.b16 %v334
        %v580 = vunpack.c.l.b16 %v335
        %v581 = vunpack.c.h.b16 %v335
        %v582 = vunpack.c.l.b16 %v336
        %v583 = vunpack.c.h.b16 %v336
        %v584 = vunpack.c.l.b16 %v337
        %v585 = vunpack.c.h.b16 %v337
        %v586 = vunpack.c.l.b16 %v338
        %v587 = vunpack.c.h.b16 %v338
        %v588 = vunpack.c.l.b16 %v339
        %v589 = vunpack.c.h.b16 %v339
        %v590 = vunpack.c.l.b16 %v340
        %v591 = vunpack.c.h.b16 %v340
        %v592 = vunpack.c.l.b16 %v341
        %v593 = vunpack.c.h.b16 %v341
        %v594 = vunpack.c.l.b16 %v342
        %v595 = vunpack.c.h.b16 %v342
        %v596 = vunpack.c.l.b16 %v343
        %v597 = vunpack.c.h.b16 %v343
        %v598 = vunpack.c.l.b16 %v344
        %v599 = vunpack.c.h.b16 %v344
        %v600 = vunpack.c.l.b16 %v345
        %v601 = vunpack.c.h.b16 %v345
        %v602 = vunpack.c.l.b16 %v346
        %v603 = vunpack.c.h.b16 %v346
        %v604 = vunpack.c.l.b16 %v347
        %v605 = vunpack.c.h.b16 %v347
        %v606 = vunpack.c.l.b16 %v348
        %v607 = vunpack.c.h.b16 %v348
        %v608 = vunpack.c.l.b16 %v349
        %v609 = vunpack.c.h.b16 %v349
        %v610 = vunpack.c.l.b16 %v350
        %v611 = vunpack.c.h.b16 %v350
        %v612 = vunpack.c.l.b16 %v351
        %v613 = vunpack.c.h.b16 %v351
        %v614 = vunpack.c.l.b16 %v352
        %v615 = vunpack.c.h.b16 %v352
        %v616 = vunpack.c.l.b16 %v353
        %v617 = vunpack.c.h.b16 %v353
        %v618 = vunpack.c.l.b16 %v354
        %v619 = vunpack.c.h.b16 %v354
        %v620 = vunpack.c.l.b16 %v355
        %v621 = vunpack.c.h.b16 %v355
        %v622 = vunpack.c.l.b16 %v356
        %v623 = vunpack.c.h.b16 %v356
        %v624 = vunpack.c.l.b16 %v357
        %v625 = vunpack.c.h.b16 %v357
        %v626 = vunpack.c.l.b16 %v358
        %v627 = vunpack.c.h.b16 %v358
        %v628 = vunpack.c.l.b16 %v359
        %v629 = vunpack.c.h.b16 %v359
        %v630 = vunpack.c.l.b16 %v360
        %v631 = vunpack.c.h.b16 %v360
        %v632 = vunpack.c.l.b16 %v361
        %v633 = vunpack.c.h.b16 %v361
        %v634 = vunpack.c.l.b16 %v362
        %v635 = vunpack.c.h.b16 %v362
        %v636 = vunpack.c.l.b16 %v363
        %v637 = vunpack.c.h.b16 %v363
        %v638 = vunpack.c.l.b16 %v364
        %v639 = vunpack.c.h.b16 %v364
        %v640 = vunpack.c.l.b16 %v365
        %v641 = vunpack.c.h.b16 %v365
        %v642 = vunpack.c.l.b16 %v366
        %v643 = vunpack.c.h.b16 %v366
        %v644 = vunpack.c.l.b16 %v367
        %v645 = vunpack.c.h.b16 %v367
        %v646 = vunpack.c.l.b16 %v368
        %v647 = vunpack.c.h.b16 %v368
        %v648 = vunpack.c.l.b16 %v369
        %v649 = vunpack.c.h.b16 %v369
        %v650 = vunpack.c.l.b16 %v370
        %v651 = vunpack.c.h.b16 %v370
        %v652 = vunpack.c.l.b16 %v371
        %v653 = vunpack.c.h.b16 %v371
        %v654 = vunpack.c.l.b16 %v372
        %v655 = vunpack.c.h.b16 %v372
        %v656 = vunpack.c.l.b16 %v373
        %v657 = vunpack.c.h.b16 %v373
        %v658 = vunpack.c.l.b16 %v374
        %v659 = vunpack.c.h.b16 %v374
        %v660 = vunpack.c.l.b16 %v375
        %v661 = vunpack.c.h.b16 %v375
        %v662 = vunpack.c.l.b16 %v376
        %v663 = vunpack.c.h.b16 %v376
        %v664 = vunpack.c.l.b16 %v377
        %v665 = vunpack.c.h.b16 %v377
        %v666 = vunpack.c.l.b16 %v378
        %v667 = vunpack.c.h.b16 %v378
        %v668 = vunpack.c.l.b16 %v379
        %v669 = vunpack.c.h.b16 %v379
        %v670 = vunpack.c.l.b16 %v380
        %v671 = vunpack.c.h.b16 %v380
        %v672 = vunpack.c.l.b16 %v381
        %v673 = vunpack.c.h.b16 %v381
        %v674 = vunpack.c.l.b16 %v382
        %v675 = vunpack.c.h.b16 %v382
        %v676 = vunpack.c.l.b16 %v383
        %v677 = vunpack.c.h.b16 %v383
        %v678 = vunpack.c.l.b16 %v384
        %v679 = vunpack.c.h.b16 %v384
        %v680 = vunpack.c.l.b16 %v385
        %v681 = vunpack.c.h.b16 %v385
        %v682 = vunpack.c.l.b16 %v386
        %v683 = vunpack.c.h.b16 %v386
        %v684 = vunpack.c.l.b16 %v387
        %v685 = vunpack.c.h.b16 %v387
        %v686 = vunpack.c.l.b16 %v388
        %v687 = vunpack.c.h.b16 %v388
        %v688 = vunpack.c.l.b16 %v389
        %v689 = vunpack.c.h.b16 %v389
        %v690 = vunpack.c.l.b16 %v390
        %v691 = vunpack.c.h.b16 %v390
        %v692 = vunpack.c.l.b16 %v391
        %v693 = vunpack.c.h.b16 %v391
        %v694 = vunpack.c.l.b16 %v392
        %v695 = vunpack.c.h.b16 %v392
        %v696 = vunpack.c.l.b16 %v393
        %v697 = vunpack.c.h.b16 %v393
        %v698 = vunpack.c.l.b16 %v394
        %v699 = vunpack.c.h.b16 %v394
        %v700 = vunpack.c.l.b16 %v395
        %v701 = vunpack.c.h.b16 %v395
        %v702 = vunpack.c.l.b16 %v396
        %v703 = vunpack.c.h.b16 %v396
        %v704 = vunpack.c.l.b16 %v397
        %v705 = vunpack.c.h.b16 %v397
        %v706 = vunpack.c.l.b16 %v398
        %v707 = vunpack.c.h.b16 %v398
        %v708 = vunpack.c.l.b16 %v399
        %v709 = vunpack.c.h.b16 %v399
        %v710 = vpack.c.b16 %v522, %v518
        %v711 = vpack.c.b16 %v523, %v519
        %v712 = vpack.c.b16 %v524, %v520
        %v713 = vpack.c.b16 %v525, %v521
        %v714 = vpack.c.b16 %v530, %v526
        %v715 = vpack.c.b16 %v531, %v527
        %v716 = vpack.c.b16 %v532, %v528
        %v717 = vpack.c.b16 %v533, %v529
        %v718 = vpack.c.b16 %v538, %v534
        %v719 = vpack.c.b16 %v539, %v535
        %v720 = vpack.c.b16 %v540, %v536
        %v721 = vpack.c.b16 %v541, %v537
        %v722 = vpack.c.b16 %v546, %v542
        %v723 = vpack.c.b16 %v547, %v543
        %v724 = vpack.c.b16 %v548, %v544
        %v725 = vpack.c.b16 %v549, %v545
        %v726 = vpack.c.b16 %v554, %v550
        %v727 = vpack.c.b16 %v555, %v551
        %v728 = vpack.c.b16 %v556, %v552
        %v729 = vpack.c.b16 %v557, %v553
        %v730 = vpack.c.b16 %v562, %v558
        %v731 = vpack.c.b16 %v563, %v559
        %v732 = vpack.c.b16 %v564, %v560
        %v733 = vpack.c.b16 %v565, %v561
        %v734 = vpack.c.b16 %v570, %v566
        %v735 = vpack.c.b16 %v571, %v567
        %v736 = vpack.c.b16 %v572, %v568
        %v737 = vpack.c.b16 %v573, %v569
        %v738 = vpack.c.b16 %v578, %v574
        %v739 = vpack.c.b16 %v579, %v575
        %v740 = vpack.c.b16 %v580, %v576
        %v741 = vpack.c.b16 %v581, %v577
        %v742 = vpack.c.b16 %v586, %v582
        %v743 = vpack.c.b16 %v587, %v583
        %v744 = vpack.c.b16 %v588, %v584
        %v745 = vpack.c.b16 %v589, %v585
        %v746 = vpack.c.b16 %v594, %v590
        %v747 = vpack.c.b16 %v595, %v591
        %v748 = vpack.c.b16 %v596, %v592
        %v749 = vpack.c.b16 %v597, %v593
        %v750 = vpack.c.b16 %v602, %v598
        %v751 = vpack.c.b16 %v603, %v599
        %v752 = vpack.c.b16 %v604, %v600
        %v753 = vpack.c.b16 %v605, %v601
        %v754 = vpack.c.b16 %v610, %v606
        %v755 = vpack.c.b16 %v611, %v607
        %v756 = vpack.c.b16 %v612, %v608
        %v757 = vpack.c.b16 %v613, %v609
        %v758 = vpack.c.b16 %v618, %v614
        %v759 = vpack.c.b16 %v619, %v615
        %v760 = vpack.c.b16 %v620, %v616
        %v761 = vpack.c.b16 %v621, %v617
        %v762 = vpack.c.b16 %v626, %v622
        %v763 = vpack.c.b16 %v627, %v623
        %v764 = vpack.c.b16 %v628, %v624
        %v765 = vpack.c.b16 %v629, %v625
        %v766 = vpack.c.b16 %v634, %v630
        %v767 = vpack.c.b16 %v635, %v631
        %v768 = vpack.c.b16 %v636, %v632
        %v769 = vpack.c.b16 %v637, %v633
        %v770 = vpack.c.b16 %v642, %v638
        %v771 = vpack.c.b16 %v643, %v639
        %v772 = vpack.c.b16 %v644, %v640
        %v773 = vpack.c.b16 %v645, %v641
        %v774 = vpack.c.b16 %v650, %v646
        %v775 = vpack.c.b16 %v651, %v647
        %v776 = vpack.c.b16 %v652, %v648
        %v777 = vpack.c.b16 %v653, %v649
        %v778 = vpack.c.b16 %v658, %v654
        %v779 = vpack.c.b16 %v659, %v655
        %v780 = vpack.c.b16 %v660, %v656
        %v781 = vpack.c.b16 %v661, %v657
        %v782 = vpack.c.b16 %v666, %v662
        %v783 = vpack.c.b16 %v667, %v663
        %v784 = vpack.c.b16 %v668, %v664
        %v785 = vpack.c.b16 %v669, %v665
        %v786 = vpack.c.b16 %v674, %v670
        %v787 = vpack.c.b16 %v675, %v671
        %v788 = vpack.c.b16 %v676, %v672
        %v789 = vpack.c.b16 %v677, %v673
        %v790 = vpack.c.b16 %v682, %v678
        %v791 = vpack.c.b16 %v683, %v679
        %v792 = vpack.c.b16 %v684, %v680
        %v793 = vpack.c.b16 %v685, %v681
        %v794 = vpack.c.b16 %v690, %v686
        %v795 = vpack.c.b16 %v691, %v687
        %v796 = vpack.c.b16 %v692, %v688
        %v797 = vpack.c.b16 %v693, %v689
        %v798 = vpack.c.b16 %v698, %v694
        %v799 = vpack.c.b16 %v699, %v695
        %v800 = vpack.c.b16 %v700, %v696
        %v801 = vpack.c.b16 %v701, %v697
        %v802 = vpack.c.b16 %v706, %v702
        %v803 = vpack.c.b16 %v707, %v703
        %v804 = vpack.c.b16 %v708, %v704
        %v805 = vpack.c.b16 %v709, %v705
        %902 = vmatprep.subr.bf16.mxu0 %v739
        %903 = vmatpush1.bf16.msra.mxu0 %v738
        %904 = vmatprep.subr.bf16.mxu0 %v735
        %905 = vmatpush1.bf16.msra.mxu0 %v734
        %906 = vmatprep.subr.bf16.mxu0 %v731
        %907 = vmatpush1.bf16.msra.mxu0 %v730
        %908 = vmatprep.subr.bf16.mxu0 %v727
        %909 = vmatpush1.bf16.msra.mxu0 %v726
        %910 = vmatprep.subr.bf16.mxu0 %v723
        %911 = vmatpush1.bf16.msra.mxu0 %v722
        %912 = vmatprep.subr.bf16.mxu0 %v719
        %913 = vmatpush1.bf16.msra.mxu0 %v718
        %914 = vmatprep.subr.bf16.mxu0 %v715
        %915 = vmatpush1.bf16.msra.mxu0 %v714
        %916 = vmatprep.subr.bf16.mxu0 %v711
        %917 = vmatpush1.bf16.msra.mxu0 %v710
        %918 = vmatprep.subr.bf16.mxu0 %v771
        %919 = vmatpush2.bf16.msra.mxu0 %v770
        %920 = vmatprep.subr.bf16.mxu0 %v767
        %921 = vmatpush2.bf16.msra.mxu0 %v766
        %922 = vmatprep.subr.bf16.mxu0 %v763
        %923 = vmatpush2.bf16.msra.mxu0 %v762
        %924 = vmatprep.subr.bf16.mxu0 %v759
        %925 = vmatpush2.bf16.msra.mxu0 %v758
        %926 = vmatprep.subr.bf16.mxu0 %v755
        %927 = vmatpush2.bf16.msra.mxu0 %v754
        %928 = vmatprep.subr.bf16.mxu0 %v751
        %929 = vmatpush2.bf16.msra.mxu0 %v750
        %930 = vmatprep.subr.bf16.mxu0 %v747
        %931 = vmatpush2.bf16.msra.mxu0 %v746
        %932 = vmatprep.subr.bf16.mxu0 %v743
        %933 = vmatpush2.bf16.msra.mxu0 %v742
        %934 = vmatprep.mubr.bf16.mxu0 %v302
        %935 = vmatmul.mubr.bf16.gmra.mxu0 %v301
        %v936 = vpop.f32.mrf.mxu0
        %v937 = vadd.f32 %v405, %v936
        %v938 = vpop.f32.mrf.mxu0
        %v939 = vadd.f32 %v409, %v938
        %v940 = vpop.f32.mrf.mxu0
        %v941 = vpop.f32.mrf.mxu0
        %942 = vdwg.mxu0
        %943 = vmatprep.subr.bf16.mxu0 %v803
        %944 = vmatpush1.bf16.msra.mxu0 %v802
        %945 = vmatprep.subr.bf16.mxu0 %v799
        %946 = vmatpush1.bf16.msra.mxu0 %v798
        %947 = vmatprep.subr.bf16.mxu0 %v795
        %948 = vmatpush1.bf16.msra.mxu0 %v794
        %949 = vmatprep.subr.bf16.mxu0 %v791
        %950 = vmatpush1.bf16.msra.mxu0 %v790
        %951 = vmatprep.subr.bf16.mxu0 %v787
        %952 = vmatpush1.bf16.msra.mxu0 %v786
        %953 = vmatprep.subr.bf16.mxu0 %v783
        %954 = vmatpush1.bf16.msra.mxu0 %v782
        %955 = vmatprep.subr.bf16.mxu0 %v779
        %956 = vmatpush1.bf16.msra.mxu0 %v778
        %957 = vmatprep.subr.bf16.mxu0 %v775
        %958 = vmatpush1.bf16.msra.mxu0 %v774
        %959 = vmatprep.subr.bf16.mxu0 0
        %960 = vmatpush2.bf16.msra.mxu0 0
        %961 = vmatprep.subr.bf16.mxu0 0
        %962 = vmatpush2.bf16.msra.mxu0 0
        %963 = vmatprep.subr.bf16.mxu0 0
        %964 = vmatpush2.bf16.msra.mxu0 0
        %965 = vmatprep.subr.bf16.mxu0 0
        %966 = vmatpush2.bf16.msra.mxu0 0
        %967 = vmatprep.subr.bf16.mxu0 0
        %968 = vmatpush2.bf16.msra.mxu0 0
        %969 = vmatprep.subr.bf16.mxu0 0
        %970 = vmatpush2.bf16.msra.mxu0 0
        %971 = vmatprep.subr.bf16.mxu0 0
        %972 = vmatpush2.bf16.msra.mxu0 0
        %973 = vmatprep.subr.bf16.mxu0 0
        %974 = vmatpush2.bf16.msra.mxu0 0
        %975 = vmatprep.mubr.bf16.mxu0 0
        %976 = vmatmul.mubr.bf16.gmra.mxu0 %v303
        %v977 = vpop.f32.mrf.mxu0
        %v978 = vadd.f32 %v937, %v977
        %v979 = vpop.f32.mrf.mxu0
        %v980 = vadd.f32 %v939, %v979
        %v981 = vpop.f32.mrf.mxu0
        %v982 = vpop.f32.mrf.mxu0
        %983 = vdwg.mxu0
        %984 = vmatprep.subr.bf16.mxu0 %v741
        %985 = vmatpush1.bf16.msra.mxu0 %v740
        %986 = vmatprep.subr.bf16.mxu0 %v737
        %987 = vmatpush1.bf16.msra.mxu0 %v736
        %988 = vmatprep.subr.bf16.mxu0 %v733
        %989 = vmatpush1.bf16.msra.mxu0 %v732
        %990 = vmatprep.subr.bf16.mxu0 %v729
        %991 = vmatpush1.bf16.msra.mxu0 %v728
        %992 = vmatprep.subr.bf16.mxu0 %v725
        %993 = vmatpush1.bf16.msra.mxu0 %v724
        %994 = vmatprep.subr.bf16.mxu0 %v721
        %995 = vmatpush1.bf16.msra.mxu0 %v720
        %996 = vmatprep.subr.bf16.mxu0 %v717
        %997 = vmatpush1.bf16.msra.mxu0 %v716
        %998 = vmatprep.subr.bf16.mxu0 %v713
        %999 = vmatpush1.bf16.msra.mxu0 %v712
        %1000 = vmatprep.subr.bf16.mxu0 %v773
        %1001 = vmatpush2.bf16.msra.mxu0 %v772
        %1002 = vmatprep.subr.bf16.mxu0 %v769
        %1003 = vmatpush2.bf16.msra.mxu0 %v768
        %1004 = vmatprep.subr.bf16.mxu0 %v765
        %1005 = vmatpush2.bf16.msra.mxu0 %v764
        %1006 = vmatprep.subr.bf16.mxu0 %v761
        %1007 = vmatpush2.bf16.msra.mxu0 %v760
        %1008 = vmatprep.subr.bf16.mxu0 %v757
        %1009 = vmatpush2.bf16.msra.mxu0 %v756
        %1010 = vmatprep.subr.bf16.mxu0 %v753
        %1011 = vmatpush2.bf16.msra.mxu0 %v752
        %1012 = vmatprep.subr.bf16.mxu0 %v749
        %1013 = vmatpush2.bf16.msra.mxu0 %v748
        %1014 = vmatprep.subr.bf16.mxu0 %v745
        %1015 = vmatpush2.bf16.msra.mxu0 %v744
        %1016 = vmatprep.mubr.bf16.mxu0 %v302
        %1017 = vmatmul.mubr.bf16.gmra.mxu0 %v301
        %v1018 = vpop.f32.mrf.mxu0
        %v1019 = vadd.f32 %v413, %v1018
        %v1020 = vpop.f32.mrf.mxu0
        %v1021 = vadd.f32 %v417, %v1020
        %v1022 = vpop.f32.mrf.mxu0
        %v1023 = vpop.f32.mrf.mxu0
        %1024 = vdwg.mxu0
        %1025 = vmatprep.subr.bf16.mxu0 %v805
        %1026 = vmatpush1.bf16.msra.mxu0 %v804
        %1027 = vmatprep.subr.bf16.mxu0 %v801
        %1028 = vmatpush1.bf16.msra.mxu0 %v800
        %1029 = vmatprep.subr.bf16.mxu0 %v797
        %1030 = vmatpush1.bf16.msra.mxu0 %v796
        %1031 = vmatprep.subr.bf16.mxu0 %v793
        %1032 = vmatpush1.bf16.msra.mxu0 %v792
        %1033 = vmatprep.subr.bf16.mxu0 %v789
        %1034 = vmatpush1.bf16.msra.mxu0 %v788
        %1035 = vmatprep.subr.bf16.mxu0 %v785
        %1036 = vmatpush1.bf16.msra.mxu0 %v784
        %1037 = vmatprep.subr.bf16.mxu0 %v781
        %1038 = vmatpush1.bf16.msra.mxu0 %v780
        %1039 = vmatprep.subr.bf16.mxu0 %v777
        %1040 = vmatpush1.bf16.msra.mxu0 %v776
        %1041 = vmatprep.subr.bf16.mxu0 0
        %1042 = vmatpush2.bf16.msra.mxu0 0
        %1043 = vmatprep.subr.bf16.mxu0 0
        %1044 = vmatpush2.bf16.msra.mxu0 0
        %1045 = vmatprep.subr.bf16.mxu0 0
        %1046 = vmatpush2.bf16.msra.mxu0 0
        %1047 = vmatprep.subr.bf16.mxu0 0
        %1048 = vmatpush2.bf16.msra.mxu0 0
        %1049 = vmatprep.subr.bf16.mxu0 0
        %1050 = vmatpush2.bf16.msra.mxu0 0
        %1051 = vmatprep.subr.bf16.mxu0 0
        %1052 = vmatpush2.bf16.msra.mxu0 0
        %1053 = vmatprep.subr.bf16.mxu0 0
        %1054 = vmatpush2.bf16.msra.mxu0 0
        %1055 = vmatprep.subr.bf16.mxu0 0
        %1056 = vmatpush2.bf16.msra.mxu0 0
        %1057 = vmatprep.mubr.bf16.mxu0 0
        %1058 = vmatmul.mubr.bf16.gmra.mxu0 %v303
        %v1059 = vpop.f32.mrf.mxu0
        %v1060 = vadd.f32 %v1019, %v1059
        %v1061 = vpop.f32.mrf.mxu0
        %v1062 = vadd.f32 %v1021, %v1061
        %v1063 = vpop.f32.mrf.mxu0
        %v1064 = vpop.f32.mrf.mxu0
        %1065 = vdwg.mxu0
        %v1066 = vmax.f32 %v978, 0.0
        %v1067 = vmax.f32 %v980, 0.0
        %v1068 = vmax.f32 %v1060, 0.0
        %v1069 = vmax.f32 %v1062, 0.0
        %v1070 = vpack.c.bf16 %v1066, %v1066
        %v1071 = vpack.c.bf16 %v1067, %v1067
        %v1072 = vpack.c.bf16 %v1068, %v1068
        %v1073 = vpack.c.bf16 %v1069, %v1069
        %v1074 = vld [vmem:[#allocation10] sm:$0xff]
        %v1075 = vld [vmem:[#allocation10 + $0x8] sm:$0xf]
        %v1076 = vld [vmem:[#allocation10 + $0xc] sm:$0xff]
        %v1077 = vld [vmem:[#allocation10 + $0x14] sm:$0xf]
        %v1078 = vld [vmem:[#allocation10 + $0x18] sm:$0xff]
        %v1079 = vld [vmem:[#allocation10 + $0x20] sm:$0xf]
        %v1080 = vld [vmem:[#allocation10 + $0x24] sm:$0xff]
        %v1081 = vld [vmem:[#allocation10 + $0x2c] sm:$0xf]
        %v1082 = vld [vmem:[#allocation10 + $0x30] sm:$0xff]
        %v1083 = vld [vmem:[#allocation10 + $0x38] sm:$0xf]
        %v1084 = vld [vmem:[#allocation10 + $0x3c] sm:$0xff]
        %v1085 = vld [vmem:[#allocation10 + $0x44] sm:$0xf]
        %v1086 = vld [vmem:[#allocation10 + $0x48] sm:$0xff]
        %v1087 = vld [vmem:[#allocation10 + $0x50] sm:$0xf]
        %v1088 = vld [vmem:[#allocation10 + $0x54] sm:$0xff]
        %v1089 = vld [vmem:[#allocation10 + $0x5c] sm:$0xf]
        %v1090 = vld [vmem:[#allocation10 + $0x60] sm:$0xff]
        %v1091 = vld [vmem:[#allocation10 + $0x68] sm:$0xf]
        %v1092 = vld [vmem:[#allocation10 + $0x6c] sm:$0xff]
        %v1093 = vld [vmem:[#allocation10 + $0x74] sm:$0xf]
        %v1094 = vld [vmem:[#allocation10 + $0x78] sm:$0xff]
        %v1095 = vld [vmem:[#allocation10 + $0x80] sm:$0xf]
        %v1096 = vld [vmem:[#allocation10 + $0x84] sm:$0xff]
        %v1097 = vld [vmem:[#allocation10 + $0x8c] sm:$0xf]
        %v1098 = vld [vmem:[#allocation10 + $0x90] sm:$0xff]
        %v1099 = vld [vmem:[#allocation10 + $0x98] sm:$0xf]
        %v1100 = vld [vmem:[#allocation10 + $0x9c] sm:$0xff]
        %v1101 = vld [vmem:[#allocation10 + $0xa4] sm:$0xf]
        %v1102 = vld [vmem:[#allocation10 + $0xa8] sm:$0xff]
        %v1103 = vld [vmem:[#allocation10 + $0xb0] sm:$0xf]
        %v1104 = vld [vmem:[#allocation10 + $0xb4] sm:$0xff]
        %v1105 = vld [vmem:[#allocation10 + $0xbc] sm:$0xf]
        %v1106 = vld [vmem:[#allocation10 + $0xc0] sm:$0xff]
        %v1107 = vld [vmem:[#allocation10 + $0xc8] sm:$0xf]
        %v1108 = vld [vmem:[#allocation10 + $0xcc] sm:$0xff]
        %v1109 = vld [vmem:[#allocation10 + $0xd4] sm:$0xf]
        %v1110 = vld [vmem:[#allocation10 + $0xd8] sm:$0xff]
        %v1111 = vld [vmem:[#allocation10 + $0xe0] sm:$0xf]
        %v1112 = vld [vmem:[#allocation10 + $0xe4] sm:$0xff]
        %v1113 = vld [vmem:[#allocation10 + $0xec] sm:$0xf]
        %v1114 = vld [vmem:[#allocation10 + $0xf0] sm:$0xff]
        %v1115 = vld [vmem:[#allocation10 + $0xf8] sm:$0xf]
        %v1116 = vld [vmem:[#allocation10 + $0xfc] sm:$0xff]
        %v1117 = vld [vmem:[#allocation10 + $0x104] sm:$0xf]
        %v1118 = vld [vmem:[#allocation10 + $0x108] sm:$0xff]
        %v1119 = vld [vmem:[#allocation10 + $0x110] sm:$0xf]
        %v1120 = vld [vmem:[#allocation10 + $0x114] sm:$0xff]
        %v1121 = vld [vmem:[#allocation10 + $0x11c] sm:$0xf]
        %v1122 = vld [vmem:[#allocation10 + $0x120] sm:$0xff]
        %v1123 = vld [vmem:[#allocation10 + $0x128] sm:$0xf]
        %v1124 = vld [vmem:[#allocation10 + $0x12c] sm:$0xff]
        %v1125 = vld [vmem:[#allocation10 + $0x134] sm:$0xf]
        %v1126 = vld [vmem:[#allocation10 + $0x138] sm:$0xff]
        %v1127 = vld [vmem:[#allocation10 + $0x140] sm:$0xf]
        %v1128 = vld [vmem:[#allocation10 + $0x144] sm:$0xff]
        %v1129 = vld [vmem:[#allocation10 + $0x14c] sm:$0xf]
        %v1130 = vld [vmem:[#allocation10 + $0x150] sm:$0xff]
        %v1131 = vld [vmem:[#allocation10 + $0x158] sm:$0xf]
        %v1132 = vld [vmem:[#allocation10 + $0x15c] sm:$0xff]
        %v1133 = vld [vmem:[#allocation10 + $0x164] sm:$0xf]
        %v1134 = vld [vmem:[#allocation10 + $0x168] sm:$0xff]
        %v1135 = vld [vmem:[#allocation10 + $0x170] sm:$0xf]
        %v1136 = vld [vmem:[#allocation10 + $0x174] sm:$0xff]
        %v1137 = vld [vmem:[#allocation10 + $0x17c] sm:$0xf]
        %v1138 = vld [vmem:[#allocation10 + $0x180] sm:$0xff]
        %v1139 = vld [vmem:[#allocation10 + $0x188] sm:$0xf]
        %v1140 = vld [vmem:[#allocation10 + $0x18c] sm:$0xff]
        %v1141 = vld [vmem:[#allocation10 + $0x194] sm:$0xf]
        %v1142 = vld [vmem:[#allocation10 + $0x198] sm:$0xff]
        %v1143 = vld [vmem:[#allocation10 + $0x1a0] sm:$0xf]
        %v1144 = vld [vmem:[#allocation10 + $0x1a4] sm:$0xff]
        %v1145 = vld [vmem:[#allocation10 + $0x1ac] sm:$0xf]
        %v1146 = vld [vmem:[#allocation10 + $0x1b0] sm:$0xff]
        %v1147 = vld [vmem:[#allocation10 + $0x1b8] sm:$0xf]
        %v1148 = vld [vmem:[#allocation10 + $0x1bc] sm:$0xff]
        %v1149 = vld [vmem:[#allocation10 + $0x1c4] sm:$0xf]
        %v1150 = vld [vmem:[#allocation10 + $0x1c8] sm:$0xff]
        %v1151 = vld [vmem:[#allocation10 + $0x1d0] sm:$0xf]
        %v1152 = vld [vmem:[#allocation10 + $0x1d4] sm:$0xff]
        %v1153 = vld [vmem:[#allocation10 + $0x1dc] sm:$0xf]
        %v1154 = vld [vmem:[#allocation10 + $0x1e0] sm:$0xff]
        %v1155 = vld [vmem:[#allocation10 + $0x1e8] sm:$0xf]
        %v1156 = vld [vmem:[#allocation10 + $0x1ec] sm:$0xff]
        %v1157 = vld [vmem:[#allocation10 + $0x1f4] sm:$0xf]
        %v1158 = vld [vmem:[#allocation10 + $0x1f8] sm:$0xff]
        %v1159 = vld [vmem:[#allocation10 + $0x200] sm:$0xf]
        %v1160 = vld [vmem:[#allocation10 + $0x204] sm:$0xff]
        %v1161 = vld [vmem:[#allocation10 + $0x20c] sm:$0xf]
        %v1162 = vld [vmem:[#allocation10 + $0x210] sm:$0xff]
        %v1163 = vld [vmem:[#allocation10 + $0x218] sm:$0xf]
        %v1164 = vld [vmem:[#allocation10 + $0x21c] sm:$0xff]
        %v1165 = vld [vmem:[#allocation10 + $0x224] sm:$0xf]
        %v1166 = vld [vmem:[#allocation10 + $0x228] sm:$0xff]
        %v1167 = vld [vmem:[#allocation10 + $0x230] sm:$0xf]
        %v1168 = vld [vmem:[#allocation10 + $0x234] sm:$0xff]
        %v1169 = vld [vmem:[#allocation10 + $0x23c] sm:$0xf]
        %v1170 = vld [vmem:[#allocation10 + $0x240] sm:$0xff]
        %v1171 = vld [vmem:[#allocation10 + $0x248] sm:$0xf]
        %v1172 = vld [vmem:[#allocation10 + $0x24c] sm:$0xff]
        %v1173 = vld [vmem:[#allocation10 + $0x254] sm:$0xf]
        %v1174 = vld [vmem:[#allocation10 + $0x258] sm:$0xff]
        %v1175 = vld [vmem:[#allocation10 + $0x260] sm:$0xf]
        %v1176 = vld [vmem:[#allocation10 + $0x264] sm:$0xff]
        %v1177 = vld [vmem:[#allocation10 + $0x26c] sm:$0xf]
        %v1178 = vld [vmem:[#allocation10 + $0x270] sm:$0xff]
        %v1179 = vld [vmem:[#allocation10 + $0x278] sm:$0xf]
        %v1180 = vld [vmem:[#allocation10 + $0x27c] sm:$0xff]
        %v1181 = vld [vmem:[#allocation10 + $0x284] sm:$0xf]
        %v1182 = vld [vmem:[#allocation10 + $0x288] sm:$0xff]
        %v1183 = vld [vmem:[#allocation10 + $0x290] sm:$0xf]
        %v1184 = vld [vmem:[#allocation10 + $0x294] sm:$0xff]
        %v1185 = vld [vmem:[#allocation10 + $0x29c] sm:$0xf]
        %v1186 = vld [vmem:[#allocation10 + $0x2a0] sm:$0xff]
        %v1187 = vld [vmem:[#allocation10 + $0x2a8] sm:$0xf]
        %v1188 = vld [vmem:[#allocation10 + $0x2ac] sm:$0xff]
        %v1189 = vld [vmem:[#allocation10 + $0x2b4] sm:$0xf]
        %v1190 = vld [vmem:[#allocation10 + $0x2b8] sm:$0xff]
        %v1191 = vld [vmem:[#allocation10 + $0x2c0] sm:$0xf]
        %v1192 = vld [vmem:[#allocation10 + $0x2c4] sm:$0xff]
        %v1193 = vld [vmem:[#allocation10 + $0x2cc] sm:$0xf]
        %v1194 = vld [vmem:[#allocation10 + $0x2d0] sm:$0xff]
        %v1195 = vld [vmem:[#allocation10 + $0x2d8] sm:$0xf]
        %v1196 = vld [vmem:[#allocation10 + $0x2dc] sm:$0xff]
        %v1197 = vld [vmem:[#allocation10 + $0x2e4] sm:$0xf]
        %v1198 = vld [vmem:[#allocation10 + $0x2e8] sm:$0xff]
        %v1199 = vld [vmem:[#allocation10 + $0x2f0] sm:$0xf]
        %v1200 = vld [vmem:[#allocation10 + $0x2f4] sm:$0xff]
        %v1201 = vld [vmem:[#allocation10 + $0x2fc] sm:$0xf]
        %v1202 = vld [vmem:[#allocation7 + $0x10] sm:$0xff]
        %v1203 = vld [vmem:[#allocation7 + $0x18] sm:$0xff]
        %v1204 = vld [vmem:[#allocation7 + $0x40] sm:$0xff]
        %v1205 = vld [vmem:[#allocation7 + $0x48] sm:$0xff]
        %v1206 = vld [vmem:[#allocation7 + $0x70] sm:$0xff]
        %v1207 = vld [vmem:[#allocation7 + $0x78] sm:$0xff]
        %v1208 = vld [vmem:[#allocation7 + $0xa0] sm:$0xff]
        %v1209 = vld [vmem:[#allocation7 + $0xa8] sm:$0xff]
        %v1210 = vld [vmem:[#allocation7 + $0xd0] sm:$0xff]
        %v1211 = vld [vmem:[#allocation7 + $0xd8] sm:$0xff]
        %v1212 = vld [vmem:[#allocation7 + $0x100] sm:$0xff]
        %v1213 = vld [vmem:[#allocation7 + $0x108] sm:$0xff]
        %v1214 = vld [vmem:[#allocation7 + $0x130] sm:$0xff]
        %v1215 = vld [vmem:[#allocation7 + $0x138] sm:$0xff]
        %v1216 = vld [vmem:[#allocation7 + $0x160] sm:$0xff]
        %v1217 = vld [vmem:[#allocation7 + $0x168] sm:$0xff]
        %v1218 = vld [vmem:[#allocation7 + $0x190] sm:$0xff]
        %v1219 = vld [vmem:[#allocation7 + $0x198] sm:$0xff]
        %v1220 = vld [vmem:[#allocation7 + $0x1c0] sm:$0xff]
        %v1221 = vld [vmem:[#allocation7 + $0x1c8] sm:$0xff]
        %v1222 = vld [vmem:[#allocation7 + $0x1f0] sm:$0xff]
        %v1223 = vld [vmem:[#allocation7 + $0x1f8] sm:$0xff]
        %v1224 = vld [vmem:[#allocation7 + $0x220] sm:$0xff]
        %v1225 = vld [vmem:[#allocation7 + $0x228] sm:$0xff]
        %v1226 = vld [vmem:[#allocation7 + $0x250] sm:$0xff]
        %v1227 = vld [vmem:[#allocation7 + $0x258] sm:$0xff]
        %v1228 = vld [vmem:[#allocation7 + $0x280] sm:$0xff]
        %v1229 = vld [vmem:[#allocation7 + $0x288] sm:$0xff]
        %v1230 = vld [vmem:[#allocation7 + $0x2b0] sm:$0xff]
        %v1231 = vld [vmem:[#allocation7 + $0x2b8] sm:$0xff]
        %v1232 = vld [vmem:[#allocation7 + $0x2e0] sm:$0xff]
        %v1233 = vld [vmem:[#allocation7 + $0x2e8] sm:$0xff]
        %v1234 = vld [vmem:[#allocation7 + $0x310] sm:$0xff]
        %v1235 = vld [vmem:[#allocation7 + $0x318] sm:$0xff]
        %v1236 = vld [vmem:[#allocation7 + $0x340] sm:$0xff]
        %v1237 = vld [vmem:[#allocation7 + $0x348] sm:$0xff]
        %v1238 = vld [vmem:[#allocation7 + $0x370] sm:$0xff]
        %v1239 = vld [vmem:[#allocation7 + $0x378] sm:$0xff]
        %v1240 = vld [vmem:[#allocation7 + $0x3a0] sm:$0xff]
        %v1241 = vld [vmem:[#allocation7 + $0x3a8] sm:$0xff]
        %v1242 = vld [vmem:[#allocation7 + $0x3d0] sm:$0xff]
        %v1243 = vld [vmem:[#allocation7 + $0x3d8] sm:$0xff]
        %v1244 = vld [vmem:[#allocation7 + $0x400] sm:$0xff]
        %v1245 = vld [vmem:[#allocation7 + $0x408] sm:$0xff]
        %v1246 = vld [vmem:[#allocation7 + $0x430] sm:$0xff]
        %v1247 = vld [vmem:[#allocation7 + $0x438] sm:$0xff]
        %v1248 = vld [vmem:[#allocation7 + $0x460] sm:$0xff]
        %v1249 = vld [vmem:[#allocation7 + $0x468] sm:$0xff]
        %v1250 = vld [vmem:[#allocation7 + $0x490] sm:$0xff]
        %v1251 = vld [vmem:[#allocation7 + $0x498] sm:$0xff]
        %v1252 = vld [vmem:[#allocation7 + $0x4c0] sm:$0xff]
        %v1253 = vld [vmem:[#allocation7 + $0x4c8] sm:$0xff]
        %v1254 = vld [vmem:[#allocation7 + $0x4f0] sm:$0xff]
        %v1255 = vld [vmem:[#allocation7 + $0x4f8] sm:$0xff]
        %v1256 = vld [vmem:[#allocation7 + $0x520] sm:$0xff]
        %v1257 = vld [vmem:[#allocation7 + $0x528] sm:$0xff]
        %v1258 = vld [vmem:[#allocation7 + $0x550] sm:$0xff]
        %v1259 = vld [vmem:[#allocation7 + $0x558] sm:$0xff]
        %v1260 = vld [vmem:[#allocation7 + $0x580] sm:$0xff]
        %v1261 = vld [vmem:[#allocation7 + $0x588] sm:$0xff]
        %v1262 = vld [vmem:[#allocation7 + $0x5b0] sm:$0xff]
        %v1263 = vld [vmem:[#allocation7 + $0x5b8] sm:$0xff]
        %v1264 = vld [vmem:[#allocation7 + $0x5e0] sm:$0xff]
        %v1265 = vld [vmem:[#allocation7 + $0x5e8] sm:$0xff]
        %v1266 = vld [vmem:[#allocation7 + $0x610] sm:$0xff]
        %v1267 = vld [vmem:[#allocation7 + $0x618] sm:$0xff]
        %v1268 = vld [vmem:[#allocation7 + $0x640] sm:$0xff]
        %v1269 = vld [vmem:[#allocation7 + $0x648] sm:$0xff]
        %v1270 = vld [vmem:[#allocation7 + $0x670] sm:$0xff]
        %v1271 = vld [vmem:[#allocation7 + $0x678] sm:$0xff]
        %v1272 = vld [vmem:[#allocation7 + $0x6a0] sm:$0xff]
        %v1273 = vld [vmem:[#allocation7 + $0x6a8] sm:$0xff]
        %v1274 = vld [vmem:[#allocation7 + $0x6d0] sm:$0xff]
        %v1275 = vld [vmem:[#allocation7 + $0x6d8] sm:$0xff]
        %v1276 = vld [vmem:[#allocation7 + $0x700] sm:$0xff]
        %v1277 = vld [vmem:[#allocation7 + $0x708] sm:$0xff]
        %v1278 = vld [vmem:[#allocation7 + $0x730] sm:$0xff]
        %v1279 = vld [vmem:[#allocation7 + $0x738] sm:$0xff]
        %v1280 = vld [vmem:[#allocation7 + $0x760] sm:$0xff]
        %v1281 = vld [vmem:[#allocation7 + $0x768] sm:$0xff]
        %v1282 = vld [vmem:[#allocation7 + $0x790] sm:$0xff]
        %v1283 = vld [vmem:[#allocation7 + $0x798] sm:$0xff]
        %v1284 = vld [vmem:[#allocation7 + $0x7c0] sm:$0xff]
        %v1285 = vld [vmem:[#allocation7 + $0x7c8] sm:$0xff]
        %v1286 = vld [vmem:[#allocation7 + $0x7f0] sm:$0xff]
        %v1287 = vld [vmem:[#allocation7 + $0x7f8] sm:$0xff]
        %v1288 = vld [vmem:[#allocation7 + $0x820] sm:$0xff]
        %v1289 = vld [vmem:[#allocation7 + $0x828] sm:$0xff]
        %v1290 = vld [vmem:[#allocation7 + $0x850] sm:$0xff]
        %v1291 = vld [vmem:[#allocation7 + $0x858] sm:$0xff]
        %v1292 = vld [vmem:[#allocation7 + $0x880] sm:$0xff]
        %v1293 = vld [vmem:[#allocation7 + $0x888] sm:$0xff]
        %v1294 = vld [vmem:[#allocation7 + $0x8b0] sm:$0xff]
        %v1295 = vld [vmem:[#allocation7 + $0x8b8] sm:$0xff]
        %v1296 = vld [vmem:[#allocation7 + $0x8e0] sm:$0xff]
        %v1297 = vld [vmem:[#allocation7 + $0x8e8] sm:$0xff]
        %v1298 = vld [vmem:[#allocation9 + $0x4] sm:$0xf]
        %v1300 = vlaneseq
        %v1301 = vshrl.u32 %v1300, 7
        %v1302 = vsub.s32 0, %v1301
        %v1303 = vrot.slane %v1298, %v1302
        %v1304 = vlaneseq
        %v1305 = vshrl.u32 %v1304, 7
        %v1306 = vsub.s32 1, %v1305
        %v1307 = vrot.slane %v1298, %v1306
        %v1308 = vlaneseq
        %v1309 = vshrl.u32 %v1308, 7
        %v1310 = vsub.s32 2, %v1309
        %v1311 = vrot.slane %v1298, %v1310
        %v1312 = vlaneseq
        %v1313 = vshrl.u32 %v1312, 7
        %v1314 = vsub.s32 3, %v1313
        %v1315 = vrot.slane %v1298, %v1314
        %v1416 = vunpack.c.l.b16 %v1202
        %v1417 = vunpack.c.h.b16 %v1202
        %v1418 = vunpack.c.l.b16 %v1203
        %v1419 = vunpack.c.h.b16 %v1203
        %v1420 = vunpack.c.l.b16 %v1204
        %v1421 = vunpack.c.h.b16 %v1204
        %v1422 = vunpack.c.l.b16 %v1205
        %v1423 = vunpack.c.h.b16 %v1205
        %v1424 = vunpack.c.l.b16 %v1206
        %v1425 = vunpack.c.h.b16 %v1206
        %v1426 = vunpack.c.l.b16 %v1207
        %v1427 = vunpack.c.h.b16 %v1207
        %v1428 = vunpack.c.l.b16 %v1208
        %v1429 = vunpack.c.h.b16 %v1208
        %v1430 = vunpack.c.l.b16 %v1209
        %v1431 = vunpack.c.h.b16 %v1209
        %v1432 = vunpack.c.l.b16 %v1210
        %v1433 = vunpack.c.h.b16 %v1210
        %v1434 = vunpack.c.l.b16 %v1211
        %v1435 = vunpack.c.h.b16 %v1211
        %v1436 = vunpack.c.l.b16 %v1212
        %v1437 = vunpack.c.h.b16 %v1212
        %v1438 = vunpack.c.l.b16 %v1213
        %v1439 = vunpack.c.h.b16 %v1213
        %v1440 = vunpack.c.l.b16 %v1214
        %v1441 = vunpack.c.h.b16 %v1214
        %v1442 = vunpack.c.l.b16 %v1215
        %v1443 = vunpack.c.h.b16 %v1215
        %v1444 = vunpack.c.l.b16 %v1216
        %v1445 = vunpack.c.h.b16 %v1216
        %v1446 = vunpack.c.l.b16 %v1217
        %v1447 = vunpack.c.h.b16 %v1217
        %v1448 = vunpack.c.l.b16 %v1218
        %v1449 = vunpack.c.h.b16 %v1218
        %v1450 = vunpack.c.l.b16 %v1219
        %v1451 = vunpack.c.h.b16 %v1219
        %v1452 = vunpack.c.l.b16 %v1220
        %v1453 = vunpack.c.h.b16 %v1220
        %v1454 = vunpack.c.l.b16 %v1221
        %v1455 = vunpack.c.h.b16 %v1221
        %v1456 = vunpack.c.l.b16 %v1222
        %v1457 = vunpack.c.h.b16 %v1222
        %v1458 = vunpack.c.l.b16 %v1223
        %v1459 = vunpack.c.h.b16 %v1223
        %v1460 = vunpack.c.l.b16 %v1224
        %v1461 = vunpack.c.h.b16 %v1224
        %v1462 = vunpack.c.l.b16 %v1225
        %v1463 = vunpack.c.h.b16 %v1225
        %v1464 = vunpack.c.l.b16 %v1226
        %v1465 = vunpack.c.h.b16 %v1226
        %v1466 = vunpack.c.l.b16 %v1227
        %v1467 = vunpack.c.h.b16 %v1227
        %v1468 = vunpack.c.l.b16 %v1228
        %v1469 = vunpack.c.h.b16 %v1228
        %v1470 = vunpack.c.l.b16 %v1229
        %v1471 = vunpack.c.h.b16 %v1229
        %v1472 = vunpack.c.l.b16 %v1230
        %v1473 = vunpack.c.h.b16 %v1230
        %v1474 = vunpack.c.l.b16 %v1231
        %v1475 = vunpack.c.h.b16 %v1231
        %v1476 = vunpack.c.l.b16 %v1232
        %v1477 = vunpack.c.h.b16 %v1232
        %v1478 = vunpack.c.l.b16 %v1233
        %v1479 = vunpack.c.h.b16 %v1233
        %v1480 = vunpack.c.l.b16 %v1234
        %v1481 = vunpack.c.h.b16 %v1234
        %v1482 = vunpack.c.l.b16 %v1235
        %v1483 = vunpack.c.h.b16 %v1235
        %v1484 = vunpack.c.l.b16 %v1236
        %v1485 = vunpack.c.h.b16 %v1236
        %v1486 = vunpack.c.l.b16 %v1237
        %v1487 = vunpack.c.h.b16 %v1237
        %v1488 = vunpack.c.l.b16 %v1238
        %v1489 = vunpack.c.h.b16 %v1238
        %v1490 = vunpack.c.l.b16 %v1239
        %v1491 = vunpack.c.h.b16 %v1239
        %v1492 = vunpack.c.l.b16 %v1240
        %v1493 = vunpack.c.h.b16 %v1240
        %v1494 = vunpack.c.l.b16 %v1241
        %v1495 = vunpack.c.h.b16 %v1241
        %v1496 = vunpack.c.l.b16 %v1242
        %v1497 = vunpack.c.h.b16 %v1242
        %v1498 = vunpack.c.l.b16 %v1243
        %v1499 = vunpack.c.h.b16 %v1243
        %v1500 = vunpack.c.l.b16 %v1244
        %v1501 = vunpack.c.h.b16 %v1244
        %v1502 = vunpack.c.l.b16 %v1245
        %v1503 = vunpack.c.h.b16 %v1245
        %v1504 = vunpack.c.l.b16 %v1246
        %v1505 = vunpack.c.h.b16 %v1246
        %v1506 = vunpack.c.l.b16 %v1247
        %v1507 = vunpack.c.h.b16 %v1247
        %v1508 = vunpack.c.l.b16 %v1248
        %v1509 = vunpack.c.h.b16 %v1248
        %v1510 = vunpack.c.l.b16 %v1249
        %v1511 = vunpack.c.h.b16 %v1249
        %v1512 = vunpack.c.l.b16 %v1250
        %v1513 = vunpack.c.h.b16 %v1250
        %v1514 = vunpack.c.l.b16 %v1251
        %v1515 = vunpack.c.h.b16 %v1251
        %v1516 = vunpack.c.l.b16 %v1252
        %v1517 = vunpack.c.h.b16 %v1252
        %v1518 = vunpack.c.l.b16 %v1253
        %v1519 = vunpack.c.h.b16 %v1253
        %v1520 = vunpack.c.l.b16 %v1254
        %v1521 = vunpack.c.h.b16 %v1254
        %v1522 = vunpack.c.l.b16 %v1255
        %v1523 = vunpack.c.h.b16 %v1255
        %v1524 = vunpack.c.l.b16 %v1256
        %v1525 = vunpack.c.h.b16 %v1256
        %v1526 = vunpack.c.l.b16 %v1257
        %v1527 = vunpack.c.h.b16 %v1257
        %v1528 = vunpack.c.l.b16 %v1258
        %v1529 = vunpack.c.h.b16 %v1258
        %v1530 = vunpack.c.l.b16 %v1259
        %v1531 = vunpack.c.h.b16 %v1259
        %v1532 = vunpack.c.l.b16 %v1260
        %v1533 = vunpack.c.h.b16 %v1260
        %v1534 = vunpack.c.l.b16 %v1261
        %v1535 = vunpack.c.h.b16 %v1261
        %v1536 = vunpack.c.l.b16 %v1262
        %v1537 = vunpack.c.h.b16 %v1262
        %v1538 = vunpack.c.l.b16 %v1263
        %v1539 = vunpack.c.h.b16 %v1263
        %v1540 = vunpack.c.l.b16 %v1264
        %v1541 = vunpack.c.h.b16 %v1264
        %v1542 = vunpack.c.l.b16 %v1265
        %v1543 = vunpack.c.h.b16 %v1265
        %v1544 = vunpack.c.l.b16 %v1266
        %v1545 = vunpack.c.h.b16 %v1266
        %v1546 = vunpack.c.l.b16 %v1267
        %v1547 = vunpack.c.h.b16 %v1267
        %v1548 = vunpack.c.l.b16 %v1268
        %v1549 = vunpack.c.h.b16 %v1268
        %v1550 = vunpack.c.l.b16 %v1269
        %v1551 = vunpack.c.h.b16 %v1269
        %v1552 = vunpack.c.l.b16 %v1270
        %v1553 = vunpack.c.h.b16 %v1270
        %v1554 = vunpack.c.l.b16 %v1271
        %v1555 = vunpack.c.h.b16 %v1271
        %v1556 = vunpack.c.l.b16 %v1272
        %v1557 = vunpack.c.h.b16 %v1272
        %v1558 = vunpack.c.l.b16 %v1273
        %v1559 = vunpack.c.h.b16 %v1273
        %v1560 = vunpack.c.l.b16 %v1274
        %v1561 = vunpack.c.h.b16 %v1274
        %v1562 = vunpack.c.l.b16 %v1275
        %v1563 = vunpack.c.h.b16 %v1275
        %v1564 = vunpack.c.l.b16 %v1276
        %v1565 = vunpack.c.h.b16 %v1276
        %v1566 = vunpack.c.l.b16 %v1277
        %v1567 = vunpack.c.h.b16 %v1277
        %v1568 = vunpack.c.l.b16 %v1278
        %v1569 = vunpack.c.h.b16 %v1278
        %v1570 = vunpack.c.l.b16 %v1279
        %v1571 = vunpack.c.h.b16 %v1279
        %v1572 = vunpack.c.l.b16 %v1280
        %v1573 = vunpack.c.h.b16 %v1280
        %v1574 = vunpack.c.l.b16 %v1281
        %v1575 = vunpack.c.h.b16 %v1281
        %v1576 = vunpack.c.l.b16 %v1282
        %v1577 = vunpack.c.h.b16 %v1282
        %v1578 = vunpack.c.l.b16 %v1283
        %v1579 = vunpack.c.h.b16 %v1283
        %v1580 = vunpack.c.l.b16 %v1284
        %v1581 = vunpack.c.h.b16 %v1284
        %v1582 = vunpack.c.l.b16 %v1285
        %v1583 = vunpack.c.h.b16 %v1285
        %v1584 = vunpack.c.l.b16 %v1286
        %v1585 = vunpack.c.h.b16 %v1286
        %v1586 = vunpack.c.l.b16 %v1287
        %v1587 = vunpack.c.h.b16 %v1287
        %v1588 = vunpack.c.l.b16 %v1288
        %v1589 = vunpack.c.h.b16 %v1288
        %v1590 = vunpack.c.l.b16 %v1289
        %v1591 = vunpack.c.h.b16 %v1289
        %v1592 = vunpack.c.l.b16 %v1290
        %v1593 = vunpack.c.h.b16 %v1290
        %v1594 = vunpack.c.l.b16 %v1291
        %v1595 = vunpack.c.h.b16 %v1291
        %v1596 = vunpack.c.l.b16 %v1292
        %v1597 = vunpack.c.h.b16 %v1292
        %v1598 = vunpack.c.l.b16 %v1293
        %v1599 = vunpack.c.h.b16 %v1293
        %v1600 = vunpack.c.l.b16 %v1294
        %v1601 = vunpack.c.h.b16 %v1294
        %v1602 = vunpack.c.l.b16 %v1295
        %v1603 = vunpack.c.h.b16 %v1295
        %v1604 = vunpack.c.l.b16 %v1296
        %v1605 = vunpack.c.h.b16 %v1296
        %v1606 = vunpack.c.l.b16 %v1297
        %v1607 = vunpack.c.h.b16 %v1297
        %v1608 = vpack.c.b16 %v1420, %v1416
        %v1609 = vpack.c.b16 %v1421, %v1417
        %v1610 = vpack.c.b16 %v1422, %v1418
        %v1611 = vpack.c.b16 %v1423, %v1419
        %v1612 = vpack.c.b16 %v1428, %v1424
        %v1613 = vpack.c.b16 %v1429, %v1425
        %v1614 = vpack.c.b16 %v1430, %v1426
        %v1615 = vpack.c.b16 %v1431, %v1427
        %v1616 = vpack.c.b16 %v1436, %v1432
        %v1617 = vpack.c.b16 %v1437, %v1433
        %v1618 = vpack.c.b16 %v1438, %v1434
        %v1619 = vpack.c.b16 %v1439, %v1435
        %v1620 = vpack.c.b16 %v1444, %v1440
        %v1621 = vpack.c.b16 %v1445, %v1441
        %v1622 = vpack.c.b16 %v1446, %v1442
        %v1623 = vpack.c.b16 %v1447, %v1443
        %v1624 = vpack.c.b16 %v1452, %v1448
        %v1625 = vpack.c.b16 %v1453, %v1449
        %v1626 = vpack.c.b16 %v1454, %v1450
        %v1627 = vpack.c.b16 %v1455, %v1451
        %v1628 = vpack.c.b16 %v1460, %v1456
        %v1629 = vpack.c.b16 %v1461, %v1457
        %v1630 = vpack.c.b16 %v1462, %v1458
        %v1631 = vpack.c.b16 %v1463, %v1459
        %v1632 = vpack.c.b16 %v1468, %v1464
        %v1633 = vpack.c.b16 %v1469, %v1465
        %v1634 = vpack.c.b16 %v1470, %v1466
        %v1635 = vpack.c.b16 %v1471, %v1467
        %v1636 = vpack.c.b16 %v1476, %v1472
        %v1637 = vpack.c.b16 %v1477, %v1473
        %v1638 = vpack.c.b16 %v1478, %v1474
        %v1639 = vpack.c.b16 %v1479, %v1475
        %v1640 = vpack.c.b16 %v1484, %v1480
        %v1641 = vpack.c.b16 %v1485, %v1481
        %v1642 = vpack.c.b16 %v1486, %v1482
        %v1643 = vpack.c.b16 %v1487, %v1483
        %v1644 = vpack.c.b16 %v1492, %v1488
        %v1645 = vpack.c.b16 %v1493, %v1489
        %v1646 = vpack.c.b16 %v1494, %v1490
        %v1647 = vpack.c.b16 %v1495, %v1491
        %v1648 = vpack.c.b16 %v1500, %v1496
        %v1649 = vpack.c.b16 %v1501, %v1497
        %v1650 = vpack.c.b16 %v1502, %v1498
        %v1651 = vpack.c.b16 %v1503, %v1499
        %v1652 = vpack.c.b16 %v1508, %v1504
        %v1653 = vpack.c.b16 %v1509, %v1505
        %v1654 = vpack.c.b16 %v1510, %v1506
        %v1655 = vpack.c.b16 %v1511, %v1507
        %v1656 = vpack.c.b16 %v1516, %v1512
        %v1657 = vpack.c.b16 %v1517, %v1513
        %v1658 = vpack.c.b16 %v1518, %v1514
        %v1659 = vpack.c.b16 %v1519, %v1515
        %v1660 = vpack.c.b16 %v1524, %v1520
        %v1661 = vpack.c.b16 %v1525, %v1521
        %v1662 = vpack.c.b16 %v1526, %v1522
        %v1663 = vpack.c.b16 %v1527, %v1523
        %v1664 = vpack.c.b16 %v1532, %v1528
        %v1665 = vpack.c.b16 %v1533, %v1529
        %v1666 = vpack.c.b16 %v1534, %v1530
        %v1667 = vpack.c.b16 %v1535, %v1531
        %v1668 = vpack.c.b16 %v1540, %v1536
        %v1669 = vpack.c.b16 %v1541, %v1537
        %v1670 = vpack.c.b16 %v1542, %v1538
        %v1671 = vpack.c.b16 %v1543, %v1539
        %v1672 = vpack.c.b16 %v1548, %v1544
        %v1673 = vpack.c.b16 %v1549, %v1545
        %v1674 = vpack.c.b16 %v1550, %v1546
        %v1675 = vpack.c.b16 %v1551, %v1547
        %v1676 = vpack.c.b16 %v1556, %v1552
        %v1677 = vpack.c.b16 %v1557, %v1553
        %v1678 = vpack.c.b16 %v1558, %v1554
        %v1679 = vpack.c.b16 %v1559, %v1555
        %v1680 = vpack.c.b16 %v1564, %v1560
        %v1681 = vpack.c.b16 %v1565, %v1561
        %v1682 = vpack.c.b16 %v1566, %v1562
        %v1683 = vpack.c.b16 %v1567, %v1563
        %v1684 = vpack.c.b16 %v1572, %v1568
        %v1685 = vpack.c.b16 %v1573, %v1569
        %v1686 = vpack.c.b16 %v1574, %v1570
        %v1687 = vpack.c.b16 %v1575, %v1571
        %v1688 = vpack.c.b16 %v1580, %v1576
        %v1689 = vpack.c.b16 %v1581, %v1577
        %v1690 = vpack.c.b16 %v1582, %v1578
        %v1691 = vpack.c.b16 %v1583, %v1579
        %v1692 = vpack.c.b16 %v1588, %v1584
        %v1693 = vpack.c.b16 %v1589, %v1585
        %v1694 = vpack.c.b16 %v1590, %v1586
        %v1695 = vpack.c.b16 %v1591, %v1587
        %v1696 = vpack.c.b16 %v1596, %v1592
        %v1697 = vpack.c.b16 %v1597, %v1593
        %v1698 = vpack.c.b16 %v1598, %v1594
        %v1699 = vpack.c.b16 %v1599, %v1595
        %v1700 = vpack.c.b16 %v1604, %v1600
        %v1701 = vpack.c.b16 %v1605, %v1601
        %v1702 = vpack.c.b16 %v1606, %v1602
        %v1703 = vpack.c.b16 %v1607, %v1603
        %1800 = vmatprep.subr.bf16.mxu0 %v1637
        %1801 = vmatpush1.bf16.msra.mxu0 %v1636
        %1802 = vmatprep.subr.bf16.mxu0 %v1633
        %1803 = vmatpush1.bf16.msra.mxu0 %v1632
        %1804 = vmatprep.subr.bf16.mxu0 %v1629
        %1805 = vmatpush1.bf16.msra.mxu0 %v1628
        %1806 = vmatprep.subr.bf16.mxu0 %v1625
        %1807 = vmatpush1.bf16.msra.mxu0 %v1624
        %1808 = vmatprep.subr.bf16.mxu0 %v1621
        %1809 = vmatpush1.bf16.msra.mxu0 %v1620
        %1810 = vmatprep.subr.bf16.mxu0 %v1617
        %1811 = vmatpush1.bf16.msra.mxu0 %v1616
        %1812 = vmatprep.subr.bf16.mxu0 %v1613
        %1813 = vmatpush1.bf16.msra.mxu0 %v1612
        %1814 = vmatprep.subr.bf16.mxu0 %v1609
        %1815 = vmatpush1.bf16.msra.mxu0 %v1608
        %1816 = vmatprep.subr.bf16.mxu0 %v1669
        %1817 = vmatpush2.bf16.msra.mxu0 %v1668
        %1818 = vmatprep.subr.bf16.mxu0 %v1665
        %1819 = vmatpush2.bf16.msra.mxu0 %v1664
        %1820 = vmatprep.subr.bf16.mxu0 %v1661
        %1821 = vmatpush2.bf16.msra.mxu0 %v1660
        %1822 = vmatprep.subr.bf16.mxu0 %v1657
        %1823 = vmatpush2.bf16.msra.mxu0 %v1656
        %1824 = vmatprep.subr.bf16.mxu0 %v1653
        %1825 = vmatpush2.bf16.msra.mxu0 %v1652
        %1826 = vmatprep.subr.bf16.mxu0 %v1649
        %1827 = vmatpush2.bf16.msra.mxu0 %v1648
        %1828 = vmatprep.subr.bf16.mxu0 %v1645
        %1829 = vmatpush2.bf16.msra.mxu0 %v1644
        %1830 = vmatprep.subr.bf16.mxu0 %v1641
        %1831 = vmatpush2.bf16.msra.mxu0 %v1640
        %1832 = vmatprep.mubr.bf16.mxu0 %v302
        %1833 = vmatmul.mubr.bf16.gmra.mxu0 %v301
        %v1834 = vpop.f32.mrf.mxu0
        %v1835 = vadd.f32 %v1303, %v1834
        %v1836 = vpop.f32.mrf.mxu0
        %v1837 = vadd.f32 %v1307, %v1836
        %v1838 = vpop.f32.mrf.mxu0
        %v1839 = vpop.f32.mrf.mxu0
        %1840 = vdwg.mxu0
        %1841 = vmatprep.subr.bf16.mxu0 %v1701
        %1842 = vmatpush1.bf16.msra.mxu0 %v1700
        %1843 = vmatprep.subr.bf16.mxu0 %v1697
        %1844 = vmatpush1.bf16.msra.mxu0 %v1696
        %1845 = vmatprep.subr.bf16.mxu0 %v1693
        %1846 = vmatpush1.bf16.msra.mxu0 %v1692
        %1847 = vmatprep.subr.bf16.mxu0 %v1689
        %1848 = vmatpush1.bf16.msra.mxu0 %v1688
        %1849 = vmatprep.subr.bf16.mxu0 %v1685
        %1850 = vmatpush1.bf16.msra.mxu0 %v1684
        %1851 = vmatprep.subr.bf16.mxu0 %v1681
        %1852 = vmatpush1.bf16.msra.mxu0 %v1680
        %1853 = vmatprep.subr.bf16.mxu0 %v1677
        %1854 = vmatpush1.bf16.msra.mxu0 %v1676
        %1855 = vmatprep.subr.bf16.mxu0 %v1673
        %1856 = vmatpush1.bf16.msra.mxu0 %v1672
        %1857 = vmatprep.subr.bf16.mxu0 0
        %1858 = vmatpush2.bf16.msra.mxu0 0
        %1859 = vmatprep.subr.bf16.mxu0 0
        %1860 = vmatpush2.bf16.msra.mxu0 0
        %1861 = vmatprep.subr.bf16.mxu0 0
        %1862 = vmatpush2.bf16.msra.mxu0 0
        %1863 = vmatprep.subr.bf16.mxu0 0
        %1864 = vmatpush2.bf16.msra.mxu0 0
        %1865 = vmatprep.subr.bf16.mxu0 0
        %1866 = vmatpush2.bf16.msra.mxu0 0
        %1867 = vmatprep.subr.bf16.mxu0 0
        %1868 = vmatpush2.bf16.msra.mxu0 0
        %1869 = vmatprep.subr.bf16.mxu0 0
        %1870 = vmatpush2.bf16.msra.mxu0 0
        %1871 = vmatprep.subr.bf16.mxu0 0
        %1872 = vmatpush2.bf16.msra.mxu0 0
        %1873 = vmatprep.mubr.bf16.mxu0 0
        %1874 = vmatmul.mubr.bf16.gmra.mxu0 %v303
        %v1875 = vpop.f32.mrf.mxu0
        %v1876 = vadd.f32 %v1835, %v1875
        %v1877 = vpop.f32.mrf.mxu0
        %v1878 = vadd.f32 %v1837, %v1877
        %v1879 = vpop.f32.mrf.mxu0
        %v1880 = vpop.f32.mrf.mxu0
        %1881 = vdwg.mxu0
        %1882 = vmatprep.subr.bf16.mxu0 %v1639
        %1883 = vmatpush1.bf16.msra.mxu0 %v1638
        %1884 = vmatprep.subr.bf16.mxu0 %v1635
        %1885 = vmatpush1.bf16.msra.mxu0 %v1634
        %1886 = vmatprep.subr.bf16.mxu0 %v1631
        %1887 = vmatpush1.bf16.msra.mxu0 %v1630
        %1888 = vmatprep.subr.bf16.mxu0 %v1627
        %1889 = vmatpush1.bf16.msra.mxu0 %v1626
        %1890 = vmatprep.subr.bf16.mxu0 %v1623
        %1891 = vmatpush1.bf16.msra.mxu0 %v1622
        %1892 = vmatprep.subr.bf16.mxu0 %v1619
        %1893 = vmatpush1.bf16.msra.mxu0 %v1618
        %1894 = vmatprep.subr.bf16.mxu0 %v1615
        %1895 = vmatpush1.bf16.msra.mxu0 %v1614
        %1896 = vmatprep.subr.bf16.mxu0 %v1611
        %1897 = vmatpush1.bf16.msra.mxu0 %v1610
        %1898 = vmatprep.subr.bf16.mxu0 %v1671
        %1899 = vmatpush2.bf16.msra.mxu0 %v1670
        %1900 = vmatprep.subr.bf16.mxu0 %v1667
        %1901 = vmatpush2.bf16.msra.mxu0 %v1666
        %1902 = vmatprep.subr.bf16.mxu0 %v1663
        %1903 = vmatpush2.bf16.msra.mxu0 %v1662
        %1904 = vmatprep.subr.bf16.mxu0 %v1659
        %1905 = vmatpush2.bf16.msra.mxu0 %v1658
        %1906 = vmatprep.subr.bf16.mxu0 %v1655
        %1907 = vmatpush2.bf16.msra.mxu0 %v1654
        %1908 = vmatprep.subr.bf16.mxu0 %v1651
        %1909 = vmatpush2.bf16.msra.mxu0 %v1650
        %1910 = vmatprep.subr.bf16.mxu0 %v1647
        %1911 = vmatpush2.bf16.msra.mxu0 %v1646
        %1912 = vmatprep.subr.bf16.mxu0 %v1643
        %1913 = vmatpush2.bf16.msra.mxu0 %v1642
        %1914 = vmatprep.mubr.bf16.mxu0 %v302
        %1915 = vmatmul.mubr.bf16.gmra.mxu0 %v301
        %v1916 = vpop.f32.mrf.mxu0
        %v1917 = vadd.f32 %v1311, %v1916
        %v1918 = vpop.f32.mrf.mxu0
        %v1919 = vadd.f32 %v1315, %v1918
        %v1920 = vpop.f32.mrf.mxu0
        %v1921 = vpop.f32.mrf.mxu0
        %1922 = vdwg.mxu0
        %1923 = vmatprep.subr.bf16.mxu0 %v1703
        %1924 = vmatpush1.bf16.msra.mxu0 %v1702
        %1925 = vmatprep.subr.bf16.mxu0 %v1699
        %1926 = vmatpush1.bf16.msra.mxu0 %v1698
        %1927 = vmatprep.subr.bf16.mxu0 %v1695
        %1928 = vmatpush1.bf16.msra.mxu0 %v1694
        %1929 = vmatprep.subr.bf16.mxu0 %v1691
        %1930 = vmatpush1.bf16.msra.mxu0 %v1690
        %1931 = vmatprep.subr.bf16.mxu0 %v1687
        %1932 = vmatpush1.bf16.msra.mxu0 %v1686
        %1933 = vmatprep.subr.bf16.mxu0 %v1683
        %1934 = vmatpush1.bf16.msra.mxu0 %v1682
        %1935 = vmatprep.subr.bf16.mxu0 %v1679
        %1936 = vmatpush1.bf16.msra.mxu0 %v1678
        %1937 = vmatprep.subr.bf16.mxu0 %v1675
        %1938 = vmatpush1.bf16.msra.mxu0 %v1674
        %1939 = vmatprep.subr.bf16.mxu0 0
        %1940 = vmatpush2.bf16.msra.mxu0 0
        %1941 = vmatprep.subr.bf16.mxu0 0
        %1942 = vmatpush2.bf16.msra.mxu0 0
        %1943 = vmatprep.subr.bf16.mxu0 0
        %1944 = vmatpush2.bf16.msra.mxu0 0
        %1945 = vmatprep.subr.bf16.mxu0 0
        %1946 = vmatpush2.bf16.msra.mxu0 0
        %1947 = vmatprep.subr.bf16.mxu0 0
        %1948 = vmatpush2.bf16.msra.mxu0 0
        %1949 = vmatprep.subr.bf16.mxu0 0
        %1950 = vmatpush2.bf16.msra.mxu0 0
        %1951 = vmatprep.subr.bf16.mxu0 0
        %1952 = vmatpush2.bf16.msra.mxu0 0
        %1953 = vmatprep.subr.bf16.mxu0 0
        %1954 = vmatpush2.bf16.msra.mxu0 0
        %1955 = vmatprep.mubr.bf16.mxu0 0
        %1956 = vmatmul.mubr.bf16.gmra.mxu0 %v303
        %v1957 = vpop.f32.mrf.mxu0
        %v1958 = vadd.f32 %v1917, %v1957
        %v1959 = vpop.f32.mrf.mxu0
        %v1960 = vadd.f32 %v1919, %v1959
        %v1961 = vpop.f32.mrf.mxu0
        %v1962 = vpop.f32.mrf.mxu0
        %1963 = vdwg.mxu0
        %v1964 = vmax.f32 %v1876, 0.0
        %v1965 = vmax.f32 %v1878, 0.0
        %v1966 = vmax.f32 %v1958, 0.0
        %v1967 = vmax.f32 %v1960, 0.0
        %v1968 = vpack.c.bf16 %v1964, %v1964
        %v1969 = vpack.c.bf16 %v1965, %v1965
        %v1970 = vpack.c.bf16 %v1966, %v1966
        %v1971 = vpack.c.bf16 %v1967, %v1967
        %v1972 = vld [vmem:[#allocation10 + $0x300] sm:$0xff]
        %v1973 = vld [vmem:[#allocation10 + $0x308] sm:$0xf]
        %v1974 = vld [vmem:[#allocation10 + $0x30c] sm:$0xff]
        %v1975 = vld [vmem:[#allocation10 + $0x314] sm:$0xf]
        %v1976 = vld [vmem:[#allocation10 + $0x318] sm:$0xff]
        %v1977 = vld [vmem:[#allocation10 + $0x320] sm:$0xf]
        %v1978 = vld [vmem:[#allocation10 + $0x324] sm:$0xff]
        %v1979 = vld [vmem:[#allocation10 + $0x32c] sm:$0xf]
        %v1980 = vld [vmem:[#allocation10 + $0x330] sm:$0xff]
        %v1981 = vld [vmem:[#allocation10 + $0x338] sm:$0xf]
        %v1982 = vld [vmem:[#allocation10 + $0x33c] sm:$0xff]
        %v1983 = vld [vmem:[#allocation10 + $0x344] sm:$0xf]
        %v1984 = vld [vmem:[#allocation10 + $0x348] sm:$0xff]
        %v1985 = vld [vmem:[#allocation10 + $0x350] sm:$0xf]
        %v1986 = vld [vmem:[#allocation10 + $0x354] sm:$0xff]
        %v1987 = vld [vmem:[#allocation10 + $0x35c] sm:$0xf]
        %v1988 = vld [vmem:[#allocation10 + $0x360] sm:$0xff]
        %v1989 = vld [vmem:[#allocation10 + $0x368] sm:$0xf]
        %v1990 = vld [vmem:[#allocation10 + $0x36c] sm:$0xff]
        %v1991 = vld [vmem:[#allocation10 + $0x374] sm:$0xf]
        %v1992 = vld [vmem:[#allocation10 + $0x378] sm:$0xff]
        %v1993 = vld [vmem:[#allocation10 + $0x380] sm:$0xf]
        %v1994 = vld [vmem:[#allocation10 + $0x384] sm:$0xff]
        %v1995 = vld [vmem:[#allocation10 + $0x38c] sm:$0xf]
        %v1996 = vld [vmem:[#allocation10 + $0x390] sm:$0xff]
        %v1997 = vld [vmem:[#allocation10 + $0x398] sm:$0xf]
        %v1998 = vld [vmem:[#allocation10 + $0x39c] sm:$0xff]
        %v1999 = vld [vmem:[#allocation10 + $0x3a4] sm:$0xf]
        %v2000 = vld [vmem:[#allocation10 + $0x3a8] sm:$0xff]
        %v2001 = vld [vmem:[#allocation10 + $0x3b0] sm:$0xf]
        %v2002 = vld [vmem:[#allocation10 + $0x3b4] sm:$0xff]
        %v2003 = vld [vmem:[#allocation10 + $0x3bc] sm:$0xf]
        %v2004 = vld [vmem:[#allocation10 + $0x3c0] sm:$0xff]
        %v2005 = vld [vmem:[#allocation10 + $0x3c8] sm:$0xf]
        %v2006 = vld [vmem:[#allocation10 + $0x3cc] sm:$0xff]
        %v2007 = vld [vmem:[#allocation10 + $0x3d4] sm:$0xf]
        %v2008 = vld [vmem:[#allocation10 + $0x3d8] sm:$0xff]
        %v2009 = vld [vmem:[#allocation10 + $0x3e0] sm:$0xf]
        %v2010 = vld [vmem:[#allocation10 + $0x3e4] sm:$0xff]
        %v2011 = vld [vmem:[#allocation10 + $0x3ec] sm:$0xf]
        %v2012 = vld [vmem:[#allocation10 + $0x3f0] sm:$0xff]
        %v2013 = vld [vmem:[#allocation10 + $0x3f8] sm:$0xf]
        %v2014 = vld [vmem:[#allocation10 + $0x3fc] sm:$0xff]
        %v2015 = vld [vmem:[#allocation10 + $0x404] sm:$0xf]
        %v2016 = vld [vmem:[#allocation10 + $0x408] sm:$0xff]
        %v2017 = vld [vmem:[#allocation10 + $0x410] sm:$0xf]
        %v2018 = vld [vmem:[#allocation10 + $0x414] sm:$0xff]
        %v2019 = vld [vmem:[#allocation10 + $0x41c] sm:$0xf]
        %v2020 = vld [vmem:[#allocation10 + $0x420] sm:$0xff]
        %v2021 = vld [vmem:[#allocation10 + $0x428] sm:$0xf]
        %v2022 = vld [vmem:[#allocation10 + $0x42c] sm:$0xff]
        %v2023 = vld [vmem:[#allocation10 + $0x434] sm:$0xf]
        %v2024 = vld [vmem:[#allocation10 + $0x438] sm:$0xff]
        %v2025 = vld [vmem:[#allocation10 + $0x440] sm:$0xf]
        %v2026 = vld [vmem:[#allocation10 + $0x444] sm:$0xff]
        %v2027 = vld [vmem:[#allocation10 + $0x44c] sm:$0xf]
        %v2028 = vld [vmem:[#allocation10 + $0x450] sm:$0xff]
        %v2029 = vld [vmem:[#allocation10 + $0x458] sm:$0xf]
        %v2030 = vld [vmem:[#allocation10 + $0x45c] sm:$0xff]
        %v2031 = vld [vmem:[#allocation10 + $0x464] sm:$0xf]
        %v2032 = vld [vmem:[#allocation10 + $0x468] sm:$0xff]
        %v2033 = vld [vmem:[#allocation10 + $0x470] sm:$0xf]
        %v2034 = vld [vmem:[#allocation10 + $0x474] sm:$0xff]
        %v2035 = vld [vmem:[#allocation10 + $0x47c] sm:$0xf]
        %v2036 = vld [vmem:[#allocation10 + $0x480] sm:$0xff]
        %v2037 = vld [vmem:[#allocation10 + $0x488] sm:$0xf]
        %v2038 = vld [vmem:[#allocation10 + $0x48c] sm:$0xff]
        %v2039 = vld [vmem:[#allocation10 + $0x494] sm:$0xf]
        %v2040 = vld [vmem:[#allocation10 + $0x498] sm:$0xff]
        %v2041 = vld [vmem:[#allocation10 + $0x4a0] sm:$0xf]
        %v2042 = vld [vmem:[#allocation10 + $0x4a4] sm:$0xff]
        %v2043 = vld [vmem:[#allocation10 + $0x4ac] sm:$0xf]
        %v2044 = vld [vmem:[#allocation10 + $0x4b0] sm:$0xff]
        %v2045 = vld [vmem:[#allocation10 + $0x4b8] sm:$0xf]
        %v2046 = vld [vmem:[#allocation10 + $0x4bc] sm:$0xff]
        %v2047 = vld [vmem:[#allocation10 + $0x4c4] sm:$0xf]
        %v2048 = vld [vmem:[#allocation10 + $0x4c8] sm:$0xff]
        %v2049 = vld [vmem:[#allocation10 + $0x4d0] sm:$0xf]
        %v2050 = vld [vmem:[#allocation10 + $0x4d4] sm:$0xff]
        %v2051 = vld [vmem:[#allocation10 + $0x4dc] sm:$0xf]
        %v2052 = vld [vmem:[#allocation10 + $0x4e0] sm:$0xff]
        %v2053 = vld [vmem:[#allocation10 + $0x4e8] sm:$0xf]
        %v2054 = vld [vmem:[#allocation10 + $0x4ec] sm:$0xff]
        %v2055 = vld [vmem:[#allocation10 + $0x4f4] sm:$0xf]
        %v2056 = vld [vmem:[#allocation10 + $0x4f8] sm:$0xff]
        %v2057 = vld [vmem:[#allocation10 + $0x500] sm:$0xf]
        %v2058 = vld [vmem:[#allocation10 + $0x504] sm:$0xff]
        %v2059 = vld [vmem:[#allocation10 + $0x50c] sm:$0xf]
        %v2060 = vld [vmem:[#allocation10 + $0x510] sm:$0xff]
        %v2061 = vld [vmem:[#allocation10 + $0x518] sm:$0xf]
        %v2062 = vld [vmem:[#allocation10 + $0x51c] sm:$0xff]
        %v2063 = vld [vmem:[#allocation10 + $0x524] sm:$0xf]
        %v2064 = vld [vmem:[#allocation10 + $0x528] sm:$0xff]
        %v2065 = vld [vmem:[#allocation10 + $0x530] sm:$0xf]
        %v2066 = vld [vmem:[#allocation10 + $0x534] sm:$0xff]
        %v2067 = vld [vmem:[#allocation10 + $0x53c] sm:$0xf]
        %v2068 = vld [vmem:[#allocation10 + $0x540] sm:$0xff]
        %v2069 = vld [vmem:[#allocation10 + $0x548] sm:$0xf]
        %v2070 = vld [vmem:[#allocation10 + $0x54c] sm:$0xff]
        %v2071 = vld [vmem:[#allocation10 + $0x554] sm:$0xf]
        %v2072 = vld [vmem:[#allocation10 + $0x558] sm:$0xff]
        %v2073 = vld [vmem:[#allocation10 + $0x560] sm:$0xf]
        %v2074 = vld [vmem:[#allocation10 + $0x564] sm:$0xff]
        %v2075 = vld [vmem:[#allocation10 + $0x56c] sm:$0xf]
        %v2076 = vld [vmem:[#allocation10 + $0x570] sm:$0xff]
        %v2077 = vld [vmem:[#allocation10 + $0x578] sm:$0xf]
        %v2078 = vld [vmem:[#allocation10 + $0x57c] sm:$0xff]
        %v2079 = vld [vmem:[#allocation10 + $0x584] sm:$0xf]
        %v2080 = vld [vmem:[#allocation10 + $0x588] sm:$0xff]
        %v2081 = vld [vmem:[#allocation10 + $0x590] sm:$0xf]
        %v2082 = vld [vmem:[#allocation10 + $0x594] sm:$0xff]
        %v2083 = vld [vmem:[#allocation10 + $0x59c] sm:$0xf]
        %v2084 = vld [vmem:[#allocation10 + $0x5a0] sm:$0xff]
        %v2085 = vld [vmem:[#allocation10 + $0x5a8] sm:$0xf]
        %v2086 = vld [vmem:[#allocation10 + $0x5ac] sm:$0xff]
        %v2087 = vld [vmem:[#allocation10 + $0x5b4] sm:$0xf]
        %v2088 = vld [vmem:[#allocation10 + $0x5b8] sm:$0xff]
        %v2089 = vld [vmem:[#allocation10 + $0x5c0] sm:$0xf]
        %v2090 = vld [vmem:[#allocation10 + $0x5c4] sm:$0xff]
        %v2091 = vld [vmem:[#allocation10 + $0x5cc] sm:$0xf]
        %v2092 = vld [vmem:[#allocation10 + $0x5d0] sm:$0xff]
        %v2093 = vld [vmem:[#allocation10 + $0x5d8] sm:$0xf]
        %v2094 = vld [vmem:[#allocation10 + $0x5dc] sm:$0xff]
        %v2095 = vld [vmem:[#allocation10 + $0x5e4] sm:$0xf]
        %v2096 = vld [vmem:[#allocation10 + $0x5e8] sm:$0xff]
        %v2097 = vld [vmem:[#allocation10 + $0x5f0] sm:$0xf]
        %v2098 = vld [vmem:[#allocation10 + $0x5f4] sm:$0xff]
        %v2099 = vld [vmem:[#allocation10 + $0x5fc] sm:$0xf]
        %v2228 = vunpack.c.l.b16 %v1972
        %v2229 = vunpack.c.h.b16 %v1972
        %v2230 = vunpack.c.l.b16 %v1973
        %v2231 = vunpack.c.l.b16 %v1974
        %v2232 = vunpack.c.h.b16 %v1974
        %v2233 = vunpack.c.l.b16 %v1975
        %v2234 = vunpack.c.l.b16 %v1976
        %v2235 = vunpack.c.h.b16 %v1976
        %v2236 = vunpack.c.l.b16 %v1977
        %v2237 = vunpack.c.l.b16 %v1978
        %v2238 = vunpack.c.h.b16 %v1978
        %v2239 = vunpack.c.l.b16 %v1979
        %v2240 = vunpack.c.l.b16 %v1980
        %v2241 = vunpack.c.h.b16 %v1980
        %v2242 = vunpack.c.l.b16 %v1981
        %v2243 = vunpack.c.l.b16 %v1982
        %v2244 = vunpack.c.h.b16 %v1982
        %v2245 = vunpack.c.l.b16 %v1983
        %v2246 = vunpack.c.l.b16 %v1984
        %v2247 = vunpack.c.h.b16 %v1984
        %v2248 = vunpack.c.l.b16 %v1985
        %v2249 = vunpack.c.l.b16 %v1986
        %v2250 = vunpack.c.h.b16 %v1986
        %v2251 = vunpack.c.l.b16 %v1987
        %v2252 = vunpack.c.l.b16 %v1988
        %v2253 = vunpack.c.h.b16 %v1988
        %v2254 = vunpack.c.l.b16 %v1989
        %v2255 = vunpack.c.l.b16 %v1990
        %v2256 = vunpack.c.h.b16 %v1990
        %v2257 = vunpack.c.l.b16 %v1991
        %v2258 = vunpack.c.l.b16 %v1992
        %v2259 = vunpack.c.h.b16 %v1992
        %v2260 = vunpack.c.l.b16 %v1993
        %v2261 = vunpack.c.l.b16 %v1994
        %v2262 = vunpack.c.h.b16 %v1994
        %v2263 = vunpack.c.l.b16 %v1995
        %v2264 = vunpack.c.l.b16 %v1996
        %v2265 = vunpack.c.h.b16 %v1996
        %v2266 = vunpack.c.l.b16 %v1997
        %v2267 = vunpack.c.l.b16 %v1998
        %v2268 = vunpack.c.h.b16 %v1998
        %v2269 = vunpack.c.l.b16 %v1999
        %v2270 = vunpack.c.l.b16 %v2000
        %v2271 = vunpack.c.h.b16 %v2000
        %v2272 = vunpack.c.l.b16 %v2001
        %v2273 = vunpack.c.l.b16 %v2002
        %v2274 = vunpack.c.h.b16 %v2002
        %v2275 = vunpack.c.l.b16 %v2003
        %v2276 = vunpack.c.l.b16 %v2004
        %v2277 = vunpack.c.h.b16 %v2004
        %v2278 = vunpack.c.l.b16 %v2005
        %v2279 = vunpack.c.l.b16 %v2006
        %v2280 = vunpack.c.h.b16 %v2006
        %v2281 = vunpack.c.l.b16 %v2007
        %v2282 = vunpack.c.l.b16 %v2008
        %v2283 = vunpack.c.h.b16 %v2008
        %v2284 = vunpack.c.l.b16 %v2009
        %v2285 = vunpack.c.l.b16 %v2010
        %v2286 = vunpack.c.h.b16 %v2010
        %v2287 = vunpack.c.l.b16 %v2011
        %v2288 = vunpack.c.l.b16 %v2012
        %v2289 = vunpack.c.h.b16 %v2012
        %v2290 = vunpack.c.l.b16 %v2013
        %v2291 = vunpack.c.l.b16 %v2014
        %v2292 = vunpack.c.h.b16 %v2014
        %v2293 = vunpack.c.l.b16 %v2015
        %v2294 = vunpack.c.l.b16 %v2016
        %v2295 = vunpack.c.h.b16 %v2016
        %v2296 = vunpack.c.l.b16 %v2017
        %v2297 = vunpack.c.l.b16 %v2018
        %v2298 = vunpack.c.h.b16 %v2018
        %v2299 = vunpack.c.l.b16 %v2019
        %v2300 = vunpack.c.l.b16 %v2020
        %v2301 = vunpack.c.h.b16 %v2020
        %v2302 = vunpack.c.l.b16 %v2021
        %v2303 = vunpack.c.l.b16 %v2022
        %v2304 = vunpack.c.h.b16 %v2022
        %v2305 = vunpack.c.l.b16 %v2023
        %v2306 = vunpack.c.l.b16 %v2024
        %v2307 = vunpack.c.h.b16 %v2024
        %v2308 = vunpack.c.l.b16 %v2025
        %v2309 = vunpack.c.l.b16 %v2026
        %v2310 = vunpack.c.h.b16 %v2026
        %v2311 = vunpack.c.l.b16 %v2027
        %v2312 = vunpack.c.l.b16 %v2028
        %v2313 = vunpack.c.h.b16 %v2028
        %v2314 = vunpack.c.l.b16 %v2029
        %v2315 = vunpack.c.l.b16 %v2030
        %v2316 = vunpack.c.h.b16 %v2030
        %v2317 = vunpack.c.l.b16 %v2031
        %v2318 = vunpack.c.l.b16 %v2032
        %v2319 = vunpack.c.h.b16 %v2032
        %v2320 = vunpack.c.l.b16 %v2033
        %v2321 = vunpack.c.l.b16 %v2034
        %v2322 = vunpack.c.h.b16 %v2034
        %v2323 = vunpack.c.l.b16 %v2035
        %v2324 = vunpack.c.l.b16 %v2036
        %v2325 = vunpack.c.h.b16 %v2036
        %v2326 = vunpack.c.l.b16 %v2037
        %v2327 = vunpack.c.l.b16 %v2038
        %v2328 = vunpack.c.h.b16 %v2038
        %v2329 = vunpack.c.l.b16 %v2039
        %v2330 = vunpack.c.l.b16 %v2040
        %v2331 = vunpack.c.h.b16 %v2040
        %v2332 = vunpack.c.l.b16 %v2041
        %v2333 = vunpack.c.l.b16 %v2042
        %v2334 = vunpack.c.h.b16 %v2042
        %v2335 = vunpack.c.l.b16 %v2043
        %v2336 = vunpack.c.l.b16 %v2044
        %v2337 = vunpack.c.h.b16 %v2044
        %v2338 = vunpack.c.l.b16 %v2045
        %v2339 = vunpack.c.l.b16 %v2046
        %v2340 = vunpack.c.h.b16 %v2046
        %v2341 = vunpack.c.l.b16 %v2047
        %v2342 = vunpack.c.l.b16 %v2048
        %v2343 = vunpack.c.h.b16 %v2048
        %v2344 = vunpack.c.l.b16 %v2049
        %v2345 = vunpack.c.l.b16 %v2050
        %v2346 = vunpack.c.h.b16 %v2050
        %v2347 = vunpack.c.l.b16 %v2051
        %v2348 = vunpack.c.l.b16 %v2052
        %v2349 = vunpack.c.h.b16 %v2052
        %v2350 = vunpack.c.l.b16 %v2053
        %v2351 = vunpack.c.l.b16 %v2054
        %v2352 = vunpack.c.h.b16 %v2054
        %v2353 = vunpack.c.l.b16 %v2055
        %v2354 = vunpack.c.l.b16 %v2056
        %v2355 = vunpack.c.h.b16 %v2056
        %v2356 = vunpack.c.l.b16 %v2057
        %v2357 = vunpack.c.l.b16 %v2058
        %v2358 = vunpack.c.h.b16 %v2058
        %v2359 = vunpack.c.l.b16 %v2059
        %v2360 = vunpack.c.l.b16 %v2060
        %v2361 = vunpack.c.h.b16 %v2060
        %v2362 = vunpack.c.l.b16 %v2061
        %v2363 = vunpack.c.l.b16 %v2062
        %v2364 = vunpack.c.h.b16 %v2062
        %v2365 = vunpack.c.l.b16 %v2063
        %v2366 = vunpack.c.l.b16 %v2064
        %v2367 = vunpack.c.h.b16 %v2064
        %v2368 = vunpack.c.l.b16 %v2065
        %v2369 = vunpack.c.l.b16 %v2066
        %v2370 = vunpack.c.h.b16 %v2066
        %v2371 = vunpack.c.l.b16 %v2067
        %v2372 = vunpack.c.l.b16 %v2068
        %v2373 = vunpack.c.h.b16 %v2068
        %v2374 = vunpack.c.l.b16 %v2069
        %v2375 = vunpack.c.l.b16 %v2070
        %v2376 = vunpack.c.h.b16 %v2070
        %v2377 = vunpack.c.l.b16 %v2071
        %v2378 = vunpack.c.l.b16 %v2072
        %v2379 = vunpack.c.h.b16 %v2072
        %v2380 = vunpack.c.l.b16 %v2073
        %v2381 = vunpack.c.l.b16 %v2074
        %v2382 = vunpack.c.h.b16 %v2074
        %v2383 = vunpack.c.l.b16 %v2075
        %v2384 = vunpack.c.l.b16 %v2076
        %v2385 = vunpack.c.h.b16 %v2076
        %v2386 = vunpack.c.l.b16 %v2077
        %v2387 = vunpack.c.l.b16 %v2078
        %v2388 = vunpack.c.h.b16 %v2078
        %v2389 = vunpack.c.l.b16 %v2079
        %v2390 = vunpack.c.l.b16 %v2080
        %v2391 = vunpack.c.h.b16 %v2080
        %v2392 = vunpack.c.l.b16 %v2081
        %v2393 = vunpack.c.l.b16 %v2082
        %v2394 = vunpack.c.h.b16 %v2082
        %v2395 = vunpack.c.l.b16 %v2083
        %v2396 = vunpack.c.l.b16 %v2084
        %v2397 = vunpack.c.h.b16 %v2084
        %v2398 = vunpack.c.l.b16 %v2085
        %v2399 = vunpack.c.l.b16 %v2086
        %v2400 = vunpack.c.h.b16 %v2086
        %v2401 = vunpack.c.l.b16 %v2087
        %v2402 = vunpack.c.l.b16 %v2088
        %v2403 = vunpack.c.h.b16 %v2088
        %v2404 = vunpack.c.l.b16 %v2089
        %v2405 = vunpack.c.l.b16 %v2090
        %v2406 = vunpack.c.h.b16 %v2090
        %v2407 = vunpack.c.l.b16 %v2091
        %v2408 = vunpack.c.l.b16 %v2092
        %v2409 = vunpack.c.h.b16 %v2092
        %v2410 = vunpack.c.l.b16 %v2093
        %v2411 = vunpack.c.l.b16 %v2094
        %v2412 = vunpack.c.h.b16 %v2094
        %v2413 = vunpack.c.l.b16 %v2095
        %v2414 = vunpack.c.l.b16 %v2096
        %v2415 = vunpack.c.h.b16 %v2096
        %v2416 = vunpack.c.l.b16 %v2097
        %v2417 = vunpack.c.l.b16 %v2098
        %v2418 = vunpack.c.h.b16 %v2098
        %v2419 = vunpack.c.l.b16 %v2099
        %v2420 = vpack.c.b16 %v2231, %v2228
        %v2421 = vpack.c.b16 %v2232, %v2229
        %v2422 = vpack.c.b16 %v2233, %v2230
        %v2423 = vpack.c.b16 %v2237, %v2234
        %v2424 = vpack.c.b16 %v2238, %v2235
        %v2425 = vpack.c.b16 %v2239, %v2236
        %v2426 = vpack.c.b16 %v2243, %v2240
        %v2427 = vpack.c.b16 %v2244, %v2241
        %v2428 = vpack.c.b16 %v2245, %v2242
        %v2429 = vpack.c.b16 %v2249, %v2246
        %v2430 = vpack.c.b16 %v2250, %v2247
        %v2431 = vpack.c.b16 %v2251, %v2248
        %v2432 = vpack.c.b16 %v2255, %v2252
        %v2433 = vpack.c.b16 %v2256, %v2253
        %v2434 = vpack.c.b16 %v2257, %v2254
        %v2435 = vpack.c.b16 %v2261, %v2258
        %v2436 = vpack.c.b16 %v2262, %v2259
        %v2437 = vpack.c.b16 %v2263, %v2260
        %v2438 = vpack.c.b16 %v2267, %v2264
        %v2439 = vpack.c.b16 %v2268, %v2265
        %v2440 = vpack.c.b16 %v2269, %v2266
        %v2441 = vpack.c.b16 %v2273, %v2270
        %v2442 = vpack.c.b16 %v2274, %v2271
        %v2443 = vpack.c.b16 %v2275, %v2272
        %v2444 = vpack.c.b16 %v2279, %v2276
        %v2445 = vpack.c.b16 %v2280, %v2277
        %v2446 = vpack.c.b16 %v2281, %v2278
        %v2447 = vpack.c.b16 %v2285, %v2282
        %v2448 = vpack.c.b16 %v2286, %v2283
        %v2449 = vpack.c.b16 %v2287, %v2284
        %v2450 = vpack.c.b16 %v2291, %v2288
        %v2451 = vpack.c.b16 %v2292, %v2289
        %v2452 = vpack.c.b16 %v2293, %v2290
        %v2453 = vpack.c.b16 %v2297, %v2294
        %v2454 = vpack.c.b16 %v2298, %v2295
        %v2455 = vpack.c.b16 %v2299, %v2296
        %v2456 = vpack.c.b16 %v2303, %v2300
        %v2457 = vpack.c.b16 %v2304, %v2301
        %v2458 = vpack.c.b16 %v2305, %v2302
        %v2459 = vpack.c.b16 %v2309, %v2306
        %v2460 = vpack.c.b16 %v2310, %v2307
        %v2461 = vpack.c.b16 %v2311, %v2308
        %v2462 = vpack.c.b16 %v2315, %v2312
        %v2463 = vpack.c.b16 %v2316, %v2313
        %v2464 = vpack.c.b16 %v2317, %v2314
        %v2465 = vpack.c.b16 %v2321, %v2318
        %v2466 = vpack.c.b16 %v2322, %v2319
        %v2467 = vpack.c.b16 %v2323, %v2320
        %v2468 = vpack.c.b16 %v2327, %v2324
        %v2469 = vpack.c.b16 %v2328, %v2325
        %v2470 = vpack.c.b16 %v2329, %v2326
        %v2471 = vpack.c.b16 %v2333, %v2330
        %v2472 = vpack.c.b16 %v2334, %v2331
        %v2473 = vpack.c.b16 %v2335, %v2332
        %v2474 = vpack.c.b16 %v2339, %v2336
        %v2475 = vpack.c.b16 %v2340, %v2337
        %v2476 = vpack.c.b16 %v2341, %v2338
        %v2477 = vpack.c.b16 %v2345, %v2342
        %v2478 = vpack.c.b16 %v2346, %v2343
        %v2479 = vpack.c.b16 %v2347, %v2344
        %v2480 = vpack.c.b16 %v2351, %v2348
        %v2481 = vpack.c.b16 %v2352, %v2349
        %v2482 = vpack.c.b16 %v2353, %v2350
        %v2483 = vpack.c.b16 %v2357, %v2354
        %v2484 = vpack.c.b16 %v2358, %v2355
        %v2485 = vpack.c.b16 %v2359, %v2356
        %v2486 = vpack.c.b16 %v2363, %v2360
        %v2487 = vpack.c.b16 %v2364, %v2361
        %v2488 = vpack.c.b16 %v2365, %v2362
        %v2489 = vpack.c.b16 %v2369, %v2366
        %v2490 = vpack.c.b16 %v2370, %v2367
        %v2491 = vpack.c.b16 %v2371, %v2368
        %v2492 = vpack.c.b16 %v2375, %v2372
        %v2493 = vpack.c.b16 %v2376, %v2373
        %v2494 = vpack.c.b16 %v2377, %v2374
        %v2495 = vpack.c.b16 %v2381, %v2378
        %v2496 = vpack.c.b16 %v2382, %v2379
        %v2497 = vpack.c.b16 %v2383, %v2380
        %v2498 = vpack.c.b16 %v2387, %v2384
        %v2499 = vpack.c.b16 %v2388, %v2385
        %v2500 = vpack.c.b16 %v2389, %v2386
        %v2501 = vpack.c.b16 %v2393, %v2390
        %v2502 = vpack.c.b16 %v2394, %v2391
        %v2503 = vpack.c.b16 %v2395, %v2392
        %v2504 = vpack.c.b16 %v2399, %v2396
        %v2505 = vpack.c.b16 %v2400, %v2397
        %v2506 = vpack.c.b16 %v2401, %v2398
        %v2507 = vpack.c.b16 %v2405, %v2402
        %v2508 = vpack.c.b16 %v2406, %v2403
        %v2509 = vpack.c.b16 %v2407, %v2404
        %v2510 = vpack.c.b16 %v2411, %v2408
        %v2511 = vpack.c.b16 %v2412, %v2409
        %v2512 = vpack.c.b16 %v2413, %v2410
        %v2513 = vpack.c.b16 %v2417, %v2414
        %v2514 = vpack.c.b16 %v2418, %v2415
        %v2515 = vpack.c.b16 %v2419, %v2416
        %2612 = vmatprep.subr.bf16.mxu0 %v2442
        %2613 = vmatpush1.bf16.msra.mxu0 %v2441
        %2614 = vmatprep.subr.bf16.mxu0 %v2439
        %2615 = vmatpush1.bf16.msra.mxu0 %v2438
        %2616 = vmatprep.subr.bf16.mxu0 %v2436
        %2617 = vmatpush1.bf16.msra.mxu0 %v2435
        %2618 = vmatprep.subr.bf16.mxu0 %v2433
        %2619 = vmatpush1.bf16.msra.mxu0 %v2432
        %2620 = vmatprep.subr.bf16.mxu0 %v2430
        %2621 = vmatpush1.bf16.msra.mxu0 %v2429
        %2622 = vmatprep.subr.bf16.mxu0 %v2427
        %2623 = vmatpush1.bf16.msra.mxu0 %v2426
        %2624 = vmatprep.subr.bf16.mxu0 %v2424
        %2625 = vmatpush1.bf16.msra.mxu0 %v2423
        %2626 = vmatprep.subr.bf16.mxu0 %v2421
        %2627 = vmatpush1.bf16.msra.mxu0 %v2420
        %2628 = vmatprep.subr.bf16.mxu0 %v2466
        %2629 = vmatpush2.bf16.msra.mxu0 %v2465
        %2630 = vmatprep.subr.bf16.mxu0 %v2463
        %2631 = vmatpush2.bf16.msra.mxu0 %v2462
        %2632 = vmatprep.subr.bf16.mxu0 %v2460
        %2633 = vmatpush2.bf16.msra.mxu0 %v2459
        %2634 = vmatprep.subr.bf16.mxu0 %v2457
        %2635 = vmatpush2.bf16.msra.mxu0 %v2456
        %2636 = vmatprep.subr.bf16.mxu0 %v2454
        %2637 = vmatpush2.bf16.msra.mxu0 %v2453
        %2638 = vmatprep.subr.bf16.mxu0 %v2451
        %2639 = vmatpush2.bf16.msra.mxu0 %v2450
        %2640 = vmatprep.subr.bf16.mxu0 %v2448
        %2641 = vmatpush2.bf16.msra.mxu0 %v2447
        %2642 = vmatprep.subr.bf16.mxu0 %v2445
        %2643 = vmatpush2.bf16.msra.mxu0 %v2444
        %2644 = vmatprep.mubr.bf16.mxu0 %v1969
        %2645 = vmatmul.mubr.bf16.gmra.mxu0 %v1968
        %v2646 = vpop.f32.mrf.mxu0
        %v2647 = vadd.f32 0.0, %v2646
        %v2648 = vpop.f32.mrf.mxu0
        %v2649 = vadd.f32 0.0, %v2648
        %v2650 = vpop.f32.mrf.mxu0
        %v2651 = vpop.f32.mrf.mxu0
        %2652 = vdwg.mxu0
        %2653 = vmatprep.subr.bf16.mxu0 %v2490
        %2654 = vmatpush1.bf16.msra.mxu0 %v2489
        %2655 = vmatprep.subr.bf16.mxu0 %v2487
        %2656 = vmatpush1.bf16.msra.mxu0 %v2486
        %2657 = vmatprep.subr.bf16.mxu0 %v2484
        %2658 = vmatpush1.bf16.msra.mxu0 %v2483
        %2659 = vmatprep.subr.bf16.mxu0 %v2481
        %2660 = vmatpush1.bf16.msra.mxu0 %v2480
        %2661 = vmatprep.subr.bf16.mxu0 %v2478
        %2662 = vmatpush1.bf16.msra.mxu0 %v2477
        %2663 = vmatprep.subr.bf16.mxu0 %v2475
        %2664 = vmatpush1.bf16.msra.mxu0 %v2474
        %2665 = vmatprep.subr.bf16.mxu0 %v2472
        %2666 = vmatpush1.bf16.msra.mxu0 %v2471
        %2667 = vmatprep.subr.bf16.mxu0 %v2469
        %2668 = vmatpush1.bf16.msra.mxu0 %v2468
        %2669 = vmatprep.subr.bf16.mxu0 %v2514
        %2670 = vmatpush2.bf16.msra.mxu0 %v2513
        %2671 = vmatprep.subr.bf16.mxu0 %v2511
        %2672 = vmatpush2.bf16.msra.mxu0 %v2510
        %2673 = vmatprep.subr.bf16.mxu0 %v2508
        %2674 = vmatpush2.bf16.msra.mxu0 %v2507
        %2675 = vmatprep.subr.bf16.mxu0 %v2505
        %2676 = vmatpush2.bf16.msra.mxu0 %v2504
        %2677 = vmatprep.subr.bf16.mxu0 %v2502
        %2678 = vmatpush2.bf16.msra.mxu0 %v2501
        %2679 = vmatprep.subr.bf16.mxu0 %v2499
        %2680 = vmatpush2.bf16.msra.mxu0 %v2498
        %2681 = vmatprep.subr.bf16.mxu0 %v2496
        %2682 = vmatpush2.bf16.msra.mxu0 %v2495
        %2683 = vmatprep.subr.bf16.mxu0 %v2493
        %2684 = vmatpush2.bf16.msra.mxu0 %v2492
        %2685 = vmatprep.mubr.bf16.mxu0 %v1971
        %2686 = vmatmul.mubr.bf16.gmra.mxu0 %v1970
        %v2687 = vpop.f32.mrf.mxu0
        %v2688 = vadd.f32 %v2647, %v2687
        %v2689 = vpop.f32.mrf.mxu0
        %v2690 = vadd.f32 %v2649, %v2689
        %v2691 = vpop.f32.mrf.mxu0
        %v2692 = vpop.f32.mrf.mxu0
        %2693 = vdwg.mxu0
        %2694 = vmatprep.subr.bf16.mxu0 0
        %2695 = vmatpush1.bf16.msra.mxu0 %v2443
        %2696 = vmatprep.subr.bf16.mxu0 0
        %2697 = vmatpush1.bf16.msra.mxu0 %v2440
        %2698 = vmatprep.subr.bf16.mxu0 0
        %2699 = vmatpush1.bf16.msra.mxu0 %v2437
        %2700 = vmatprep.subr.bf16.mxu0 0
        %2701 = vmatpush1.bf16.msra.mxu0 %v2434
        %2702 = vmatprep.subr.bf16.mxu0 0
        %2703 = vmatpush1.bf16.msra.mxu0 %v2431
        %2704 = vmatprep.subr.bf16.mxu0 0
        %2705 = vmatpush1.bf16.msra.mxu0 %v2428
        %2706 = vmatprep.subr.bf16.mxu0 0
        %2707 = vmatpush1.bf16.msra.mxu0 %v2425
        %2708 = vmatprep.subr.bf16.mxu0 0
        %2709 = vmatpush1.bf16.msra.mxu0 %v2422
        %2710 = vmatprep.subr.bf16.mxu0 0
        %2711 = vmatpush2.bf16.msra.mxu0 %v2467
        %2712 = vmatprep.subr.bf16.mxu0 0
        %2713 = vmatpush2.bf16.msra.mxu0 %v2464
        %2714 = vmatprep.subr.bf16.mxu0 0
        %2715 = vmatpush2.bf16.msra.mxu0 %v2461
        %2716 = vmatprep.subr.bf16.mxu0 0
        %2717 = vmatpush2.bf16.msra.mxu0 %v2458
        %2718 = vmatprep.subr.bf16.mxu0 0
        %2719 = vmatpush2.bf16.msra.mxu0 %v2455
        %2720 = vmatprep.subr.bf16.mxu0 0
        %2721 = vmatpush2.bf16.msra.mxu0 %v2452
        %2722 = vmatprep.subr.bf16.mxu0 0
        %2723 = vmatpush2.bf16.msra.mxu0 %v2449
        %2724 = vmatprep.subr.bf16.mxu0 0
        %2725 = vmatpush2.bf16.msra.mxu0 %v2446
        %2726 = vmatprep.mubr.bf16.mxu0 %v1969
        %2727 = vmatmul.mubr.bf16.gmra.mxu0 %v1968
        %v2728 = vpop.f32.mrf.mxu0
        %v2729 = vadd.f32 0.0, %v2728
        %v2730 = vpop.f32.mrf.mxu0
        %v2731 = vpop.f32.mrf.mxu0
        %v2732 = vpop.f32.mrf.mxu0
        %2733 = vdwg.mxu0
        %2734 = vmatprep.subr.bf16.mxu0 0
        %2735 = vmatpush1.bf16.msra.mxu0 %v2491
        %2736 = vmatprep.subr.bf16.mxu0 0
        %2737 = vmatpush1.bf16.msra.mxu0 %v2488
        %2738 = vmatprep.subr.bf16.mxu0 0
        %2739 = vmatpush1.bf16.msra.mxu0 %v2485
        %2740 = vmatprep.subr.bf16.mxu0 0
        %2741 = vmatpush1.bf16.msra.mxu0 %v2482
        %2742 = vmatprep.subr.bf16.mxu0 0
        %2743 = vmatpush1.bf16.msra.mxu0 %v2479
        %2744 = vmatprep.subr.bf16.mxu0 0
        %2745 = vmatpush1.bf16.msra.mxu0 %v2476
        %2746 = vmatprep.subr.bf16.mxu0 0
        %2747 = vmatpush1.bf16.msra.mxu0 %v2473
        %2748 = vmatprep.subr.bf16.mxu0 0
        %2749 = vmatpush1.bf16.msra.mxu0 %v2470
        %2750 = vmatprep.subr.bf16.mxu0 0
        %2751 = vmatpush2.bf16.msra.mxu0 %v2515
        %2752 = vmatprep.subr.bf16.mxu0 0
        %2753 = vmatpush2.bf16.msra.mxu0 %v2512
        %2754 = vmatprep.subr.bf16.mxu0 0
        %2755 = vmatpush2.bf16.msra.mxu0 %v2509
        %2756 = vmatprep.subr.bf16.mxu0 0
        %2757 = vmatpush2.bf16.msra.mxu0 %v2506
        %2758 = vmatprep.subr.bf16.mxu0 0
        %2759 = vmatpush2.bf16.msra.mxu0 %v2503
        %2760 = vmatprep.subr.bf16.mxu0 0
        %2761 = vmatpush2.bf16.msra.mxu0 %v2500
        %2762 = vmatprep.subr.bf16.mxu0 0
        %2763 = vmatpush2.bf16.msra.mxu0 %v2497
        %2764 = vmatprep.subr.bf16.mxu0 0
        %2765 = vmatpush2.bf16.msra.mxu0 %v2494
        %2766 = vmatprep.mubr.bf16.mxu0 %v1971
        %2767 = vmatmul.mubr.bf16.gmra.mxu0 %v1970
        %v2768 = vpop.f32.mrf.mxu0
        %v2769 = vadd.f32 %v2729, %v2768
        %v2770 = vpop.f32.mrf.mxu0
        %v2771 = vpop.f32.mrf.mxu0
        %v2772 = vpop.f32.mrf.mxu0
        %2773 = vdwg.mxu0
        %v2902 = vunpack.c.l.b16 %v1074
        %v2903 = vunpack.c.h.b16 %v1074
        %v2904 = vunpack.c.l.b16 %v1075
        %v2905 = vunpack.c.l.b16 %v1076
        %v2906 = vunpack.c.h.b16 %v1076
        %v2907 = vunpack.c.l.b16 %v1077
        %v2908 = vunpack.c.l.b16 %v1078
        %v2909 = vunpack.c.h.b16 %v1078
        %v2910 = vunpack.c.l.b16 %v1079
        %v2911 = vunpack.c.l.b16 %v1080
        %v2912 = vunpack.c.h.b16 %v1080
        %v2913 = vunpack.c.l.b16 %v1081
        %v2914 = vunpack.c.l.b16 %v1082
        %v2915 = vunpack.c.h.b16 %v1082
        %v2916 = vunpack.c.l.b16 %v1083
        %v2917 = vunpack.c.l.b16 %v1084
        %v2918 = vunpack.c.h.b16 %v1084
        %v2919 = vunpack.c.l.b16 %v1085
        %v2920 = vunpack.c.l.b16 %v1086
        %v2921 = vunpack.c.h.b16 %v1086
        %v2922 = vunpack.c.l.b16 %v1087
        %v2923 = vunpack.c.l.b16 %v1088
        %v2924 = vunpack.c.h.b16 %v1088
        %v2925 = vunpack.c.l.b16 %v1089
        %v2926 = vunpack.c.l.b16 %v1090
        %v2927 = vunpack.c.h.b16 %v1090
        %v2928 = vunpack.c.l.b16 %v1091
        %v2929 = vunpack.c.l.b16 %v1092
        %v2930 = vunpack.c.h.b16 %v1092
        %v2931 = vunpack.c.l.b16 %v1093
        %v2932 = vunpack.c.l.b16 %v1094
        %v2933 = vunpack.c.h.b16 %v1094
        %v2934 = vunpack.c.l.b16 %v1095
        %v2935 = vunpack.c.l.b16 %v1096
        %v2936 = vunpack.c.h.b16 %v1096
        %v2937 = vunpack.c.l.b16 %v1097
        %v2938 = vunpack.c.l.b16 %v1098
        %v2939 = vunpack.c.h.b16 %v1098
        %v2940 = vunpack.c.l.b16 %v1099
        %v2941 = vunpack.c.l.b16 %v1100
        %v2942 = vunpack.c.h.b16 %v1100
        %v2943 = vunpack.c.l.b16 %v1101
        %v2944 = vunpack.c.l.b16 %v1102
        %v2945 = vunpack.c.h.b16 %v1102
        %v2946 = vunpack.c.l.b16 %v1103
        %v2947 = vunpack.c.l.b16 %v1104
        %v2948 = vunpack.c.h.b16 %v1104
        %v2949 = vunpack.c.l.b16 %v1105
        %v2950 = vunpack.c.l.b16 %v1106
        %v2951 = vunpack.c.h.b16 %v1106
        %v2952 = vunpack.c.l.b16 %v1107
        %v2953 = vunpack.c.l.b16 %v1108
        %v2954 = vunpack.c.h.b16 %v1108
        %v2955 = vunpack.c.l.b16 %v1109
        %v2956 = vunpack.c.l.b16 %v1110
        %v2957 = vunpack.c.h.b16 %v1110
        %v2958 = vunpack.c.l.b16 %v1111
        %v2959 = vunpack.c.l.b16 %v1112
        %v2960 = vunpack.c.h.b16 %v1112
        %v2961 = vunpack.c.l.b16 %v1113
        %v2962 = vunpack.c.l.b16 %v1114
        %v2963 = vunpack.c.h.b16 %v1114
        %v2964 = vunpack.c.l.b16 %v1115
        %v2965 = vunpack.c.l.b16 %v1116
        %v2966 = vunpack.c.h.b16 %v1116
        %v2967 = vunpack.c.l.b16 %v1117
        %v2968 = vunpack.c.l.b16 %v1118
        %v2969 = vunpack.c.h.b16 %v1118
        %v2970 = vunpack.c.l.b16 %v1119
        %v2971 = vunpack.c.l.b16 %v1120
        %v2972 = vunpack.c.h.b16 %v1120
        %v2973 = vunpack.c.l.b16 %v1121
        %v2974 = vunpack.c.l.b16 %v1122
        %v2975 = vunpack.c.h.b16 %v1122
        %v2976 = vunpack.c.l.b16 %v1123
        %v2977 = vunpack.c.l.b16 %v1124
        %v2978 = vunpack.c.h.b16 %v1124
        %v2979 = vunpack.c.l.b16 %v1125
        %v2980 = vunpack.c.l.b16 %v1126
        %v2981 = vunpack.c.h.b16 %v1126
        %v2982 = vunpack.c.l.b16 %v1127
        %v2983 = vunpack.c.l.b16 %v1128
        %v2984 = vunpack.c.h.b16 %v1128
        %v2985 = vunpack.c.l.b16 %v1129
        %v2986 = vunpack.c.l.b16 %v1130
        %v2987 = vunpack.c.h.b16 %v1130
        %v2988 = vunpack.c.l.b16 %v1131
        %v2989 = vunpack.c.l.b16 %v1132
        %v2990 = vunpack.c.h.b16 %v1132
        %v2991 = vunpack.c.l.b16 %v1133
        %v2992 = vunpack.c.l.b16 %v1134
        %v2993 = vunpack.c.h.b16 %v1134
        %v2994 = vunpack.c.l.b16 %v1135
        %v2995 = vunpack.c.l.b16 %v1136
        %v2996 = vunpack.c.h.b16 %v1136
        %v2997 = vunpack.c.l.b16 %v1137
        %v2998 = vunpack.c.l.b16 %v1138
        %v2999 = vunpack.c.h.b16 %v1138
        %v3000 = vunpack.c.l.b16 %v1139
        %v3001 = vunpack.c.l.b16 %v1140
        %v3002 = vunpack.c.h.b16 %v1140
        %v3003 = vunpack.c.l.b16 %v1141
        %v3004 = vunpack.c.l.b16 %v1142
        %v3005 = vunpack.c.h.b16 %v1142
        %v3006 = vunpack.c.l.b16 %v1143
        %v3007 = vunpack.c.l.b16 %v1144
        %v3008 = vunpack.c.h.b16 %v1144
        %v3009 = vunpack.c.l.b16 %v1145
        %v3010 = vunpack.c.l.b16 %v1146
        %v3011 = vunpack.c.h.b16 %v1146
        %v3012 = vunpack.c.l.b16 %v1147
        %v3013 = vunpack.c.l.b16 %v1148
        %v3014 = vunpack.c.h.b16 %v1148
        %v3015 = vunpack.c.l.b16 %v1149
        %v3016 = vunpack.c.l.b16 %v1150
        %v3017 = vunpack.c.h.b16 %v1150
        %v3018 = vunpack.c.l.b16 %v1151
        %v3019 = vunpack.c.l.b16 %v1152
        %v3020 = vunpack.c.h.b16 %v1152
        %v3021 = vunpack.c.l.b16 %v1153
        %v3022 = vunpack.c.l.b16 %v1154
        %v3023 = vunpack.c.h.b16 %v1154
        %v3024 = vunpack.c.l.b16 %v1155
        %v3025 = vunpack.c.l.b16 %v1156
        %v3026 = vunpack.c.h.b16 %v1156
        %v3027 = vunpack.c.l.b16 %v1157
        %v3028 = vunpack.c.l.b16 %v1158
        %v3029 = vunpack.c.h.b16 %v1158
        %v3030 = vunpack.c.l.b16 %v1159
        %v3031 = vunpack.c.l.b16 %v1160
        %v3032 = vunpack.c.h.b16 %v1160
        %v3033 = vunpack.c.l.b16 %v1161
        %v3034 = vunpack.c.l.b16 %v1162
        %v3035 = vunpack.c.h.b16 %v1162
        %v3036 = vunpack.c.l.b16 %v1163
        %v3037 = vunpack.c.l.b16 %v1164
        %v3038 = vunpack.c.h.b16 %v1164
        %v3039 = vunpack.c.l.b16 %v1165
        %v3040 = vunpack.c.l.b16 %v1166
        %v3041 = vunpack.c.h.b16 %v1166
        %v3042 = vunpack.c.l.b16 %v1167
        %v3043 = vunpack.c.l.b16 %v1168
        %v3044 = vunpack.c.h.b16 %v1168
        %v3045 = vunpack.c.l.b16 %v1169
        %v3046 = vunpack.c.l.b16 %v1170
        %v3047 = vunpack.c.h.b16 %v1170
        %v3048 = vunpack.c.l.b16 %v1171
        %v3049 = vunpack.c.l.b16 %v1172
        %v3050 = vunpack.c.h.b16 %v1172
        %v3051 = vunpack.c.l.b16 %v1173
        %v3052 = vunpack.c.l.b16 %v1174
        %v3053 = vunpack.c.h.b16 %v1174
        %v3054 = vunpack.c.l.b16 %v1175
        %v3055 = vunpack.c.l.b16 %v1176
        %v3056 = vunpack.c.h.b16 %v1176
        %v3057 = vunpack.c.l.b16 %v1177
        %v3058 = vunpack.c.l.b16 %v1178
        %v3059 = vunpack.c.h.b16 %v1178
        %v3060 = vunpack.c.l.b16 %v1179
        %v3061 = vunpack.c.l.b16 %v1180
        %v3062 = vunpack.c.h.b16 %v1180
        %v3063 = vunpack.c.l.b16 %v1181
        %v3064 = vunpack.c.l.b16 %v1182
        %v3065 = vunpack.c.h.b16 %v1182
        %v3066 = vunpack.c.l.b16 %v1183
        %v3067 = vunpack.c.l.b16 %v1184
        %v3068 = vunpack.c.h.b16 %v1184
        %v3069 = vunpack.c.l.b16 %v1185
        %v3070 = vunpack.c.l.b16 %v1186
        %v3071 = vunpack.c.h.b16 %v1186
        %v3072 = vunpack.c.l.b16 %v1187
        %v3073 = vunpack.c.l.b16 %v1188
        %v3074 = vunpack.c.h.b16 %v1188
        %v3075 = vunpack.c.l.b16 %v1189
        %v3076 = vunpack.c.l.b16 %v1190
        %v3077 = vunpack.c.h.b16 %v1190
        %v3078 = vunpack.c.l.b16 %v1191
        %v3079 = vunpack.c.l.b16 %v1192
        %v3080 = vunpack.c.h.b16 %v1192
        %v3081 = vunpack.c.l.b16 %v1193
        %v3082 = vunpack.c.l.b16 %v1194
        %v3083 = vunpack.c.h.b16 %v1194
        %v3084 = vunpack.c.l.b16 %v1195
        %v3085 = vunpack.c.l.b16 %v1196
        %v3086 = vunpack.c.h.b16 %v1196
        %v3087 = vunpack.c.l.b16 %v1197
        %v3088 = vunpack.c.l.b16 %v1198
        %v3089 = vunpack.c.h.b16 %v1198
        %v3090 = vunpack.c.l.b16 %v1199
        %v3091 = vunpack.c.l.b16 %v1200
        %v3092 = vunpack.c.h.b16 %v1200
        %v3093 = vunpack.c.l.b16 %v1201
        %v3094 = vpack.c.b16 %v2905, %v2902
        %v3095 = vpack.c.b16 %v2906, %v2903
        %v3096 = vpack.c.b16 %v2907, %v2904
        %v3097 = vpack.c.b16 %v2911, %v2908
        %v3098 = vpack.c.b16 %v2912, %v2909
        %v3099 = vpack.c.b16 %v2913, %v2910
        %v3100 = vpack.c.b16 %v2917, %v2914
        %v3101 = vpack.c.b16 %v2918, %v2915
        %v3102 = vpack.c.b16 %v2919, %v2916
        %v3103 = vpack.c.b16 %v2923, %v2920
        %v3104 = vpack.c.b16 %v2924, %v2921
        %v3105 = vpack.c.b16 %v2925, %v2922
        %v3106 = vpack.c.b16 %v2929, %v2926
        %v3107 = vpack.c.b16 %v2930, %v2927
        %v3108 = vpack.c.b16 %v2931, %v2928
        %v3109 = vpack.c.b16 %v2935, %v2932
        %v3110 = vpack.c.b16 %v2936, %v2933
        %v3111 = vpack.c.b16 %v2937, %v2934
        %v3112 = vpack.c.b16 %v2941, %v2938
        %v3113 = vpack.c.b16 %v2942, %v2939
        %v3114 = vpack.c.b16 %v2943, %v2940
        %v3115 = vpack.c.b16 %v2947, %v2944
        %v3116 = vpack.c.b16 %v2948, %v2945
        %v3117 = vpack.c.b16 %v2949, %v2946
        %v3118 = vpack.c.b16 %v2953, %v2950
        %v3119 = vpack.c.b16 %v2954, %v2951
        %v3120 = vpack.c.b16 %v2955, %v2952
        %v3121 = vpack.c.b16 %v2959, %v2956
        %v3122 = vpack.c.b16 %v2960, %v2957
        %v3123 = vpack.c.b16 %v2961, %v2958
        %v3124 = vpack.c.b16 %v2965, %v2962
        %v3125 = vpack.c.b16 %v2966, %v2963
        %v3126 = vpack.c.b16 %v2967, %v2964
        %v3127 = vpack.c.b16 %v2971, %v2968
        %v3128 = vpack.c.b16 %v2972, %v2969
        %v3129 = vpack.c.b16 %v2973, %v2970
        %v3130 = vpack.c.b16 %v2977, %v2974
        %v3131 = vpack.c.b16 %v2978, %v2975
        %v3132 = vpack.c.b16 %v2979, %v2976
        %v3133 = vpack.c.b16 %v2983, %v2980
        %v3134 = vpack.c.b16 %v2984, %v2981
        %v3135 = vpack.c.b16 %v2985, %v2982
        %v3136 = vpack.c.b16 %v2989, %v2986
        %v3137 = vpack.c.b16 %v2990, %v2987
        %v3138 = vpack.c.b16 %v2991, %v2988
        %v3139 = vpack.c.b16 %v2995, %v2992
        %v3140 = vpack.c.b16 %v2996, %v2993
        %v3141 = vpack.c.b16 %v2997, %v2994
        %v3142 = vpack.c.b16 %v3001, %v2998
        %v3143 = vpack.c.b16 %v3002, %v2999
        %v3144 = vpack.c.b16 %v3003, %v3000
        %v3145 = vpack.c.b16 %v3007, %v3004
        %v3146 = vpack.c.b16 %v3008, %v3005
        %v3147 = vpack.c.b16 %v3009, %v3006
        %v3148 = vpack.c.b16 %v3013, %v3010
        %v3149 = vpack.c.b16 %v3014, %v3011
        %v3150 = vpack.c.b16 %v3015, %v3012
        %v3151 = vpack.c.b16 %v3019, %v3016
        %v3152 = vpack.c.b16 %v3020, %v3017
        %v3153 = vpack.c.b16 %v3021, %v3018
        %v3154 = vpack.c.b16 %v3025, %v3022
        %v3155 = vpack.c.b16 %v3026, %v3023
        %v3156 = vpack.c.b16 %v3027, %v3024
        %v3157 = vpack.c.b16 %v3031, %v3028
        %v3158 = vpack.c.b16 %v3032, %v3029
        %v3159 = vpack.c.b16 %v3033, %v3030
        %v3160 = vpack.c.b16 %v3037, %v3034
        %v3161 = vpack.c.b16 %v3038, %v3035
        %v3162 = vpack.c.b16 %v3039, %v3036
        %v3163 = vpack.c.b16 %v3043, %v3040
        %v3164 = vpack.c.b16 %v3044, %v3041
        %v3165 = vpack.c.b16 %v3045, %v3042
        %v3166 = vpack.c.b16 %v3049, %v3046
        %v3167 = vpack.c.b16 %v3050, %v3047
        %v3168 = vpack.c.b16 %v3051, %v3048
        %v3169 = vpack.c.b16 %v3055, %v3052
        %v3170 = vpack.c.b16 %v3056, %v3053
        %v3171 = vpack.c.b16 %v3057, %v3054
        %v3172 = vpack.c.b16 %v3061, %v3058
        %v3173 = vpack.c.b16 %v3062, %v3059
        %v3174 = vpack.c.b16 %v3063, %v3060
        %v3175 = vpack.c.b16 %v3067, %v3064
        %v3176 = vpack.c.b16 %v3068, %v3065
        %v3177 = vpack.c.b16 %v3069, %v3066
        %v3178 = vpack.c.b16 %v3073, %v3070
        %v3179 = vpack.c.b16 %v3074, %v3071
        %v3180 = vpack.c.b16 %v3075, %v3072
        %v3181 = vpack.c.b16 %v3079, %v3076
        %v3182 = vpack.c.b16 %v3080, %v3077
        %v3183 = vpack.c.b16 %v3081, %v3078
        %v3184 = vpack.c.b16 %v3085, %v3082
        %v3185 = vpack.c.b16 %v3086, %v3083
        %v3186 = vpack.c.b16 %v3087, %v3084
        %v3187 = vpack.c.b16 %v3091, %v3088
        %v3188 = vpack.c.b16 %v3092, %v3089
        %v3189 = vpack.c.b16 %v3093, %v3090
        %3286 = vmatprep.subr.bf16.mxu0 %v3116
        %3287 = vmatpush1.bf16.msra.mxu0 %v3115
        %3288 = vmatprep.subr.bf16.mxu0 %v3113
        %3289 = vmatpush1.bf16.msra.mxu0 %v3112
        %3290 = vmatprep.subr.bf16.mxu0 %v3110
        %3291 = vmatpush1.bf16.msra.mxu0 %v3109
        %3292 = vmatprep.subr.bf16.mxu0 %v3107
        %3293 = vmatpush1.bf16.msra.mxu0 %v3106
        %3294 = vmatprep.subr.bf16.mxu0 %v3104
        %3295 = vmatpush1.bf16.msra.mxu0 %v3103
        %3296 = vmatprep.subr.bf16.mxu0 %v3101
        %3297 = vmatpush1.bf16.msra.mxu0 %v3100
        %3298 = vmatprep.subr.bf16.mxu0 %v3098
        %3299 = vmatpush1.bf16.msra.mxu0 %v3097
        %3300 = vmatprep.subr.bf16.mxu0 %v3095
        %3301 = vmatpush1.bf16.msra.mxu0 %v3094
        %3302 = vmatprep.subr.bf16.mxu0 %v3140
        %3303 = vmatpush2.bf16.msra.mxu0 %v3139
        %3304 = vmatprep.subr.bf16.mxu0 %v3137
        %3305 = vmatpush2.bf16.msra.mxu0 %v3136
        %3306 = vmatprep.subr.bf16.mxu0 %v3134
        %3307 = vmatpush2.bf16.msra.mxu0 %v3133
        %3308 = vmatprep.subr.bf16.mxu0 %v3131
        %3309 = vmatpush2.bf16.msra.mxu0 %v3130
        %3310 = vmatprep.subr.bf16.mxu0 %v3128
        %3311 = vmatpush2.bf16.msra.mxu0 %v3127
        %3312 = vmatprep.subr.bf16.mxu0 %v3125
        %3313 = vmatpush2.bf16.msra.mxu0 %v3124
        %3314 = vmatprep.subr.bf16.mxu0 %v3122
        %3315 = vmatpush2.bf16.msra.mxu0 %v3121
        %3316 = vmatprep.subr.bf16.mxu0 %v3119
        %3317 = vmatpush2.bf16.msra.mxu0 %v3118
        %3318 = vmatprep.mubr.bf16.mxu0 %v1071
        %3319 = vmatmul.mubr.bf16.gmra.mxu0 %v1070
        %v3320 = vpop.f32.mrf.mxu0
        %v3321 = vadd.f32 %v2688, %v3320
        %v3322 = vpop.f32.mrf.mxu0
        %v3323 = vadd.f32 %v2690, %v3322
        %v3324 = vpop.f32.mrf.mxu0
        %v3325 = vpop.f32.mrf.mxu0
        %3326 = vdwg.mxu0
        %3327 = vmatprep.subr.bf16.mxu0 %v3164
        %3328 = vmatpush1.bf16.msra.mxu0 %v3163
        %3329 = vmatprep.subr.bf16.mxu0 %v3161
        %3330 = vmatpush1.bf16.msra.mxu0 %v3160
        %3331 = vmatprep.subr.bf16.mxu0 %v3158
        %3332 = vmatpush1.bf16.msra.mxu0 %v3157
        %3333 = vmatprep.subr.bf16.mxu0 %v3155
        %3334 = vmatpush1.bf16.msra.mxu0 %v3154
        %3335 = vmatprep.subr.bf16.mxu0 %v3152
        %3336 = vmatpush1.bf16.msra.mxu0 %v3151
        %3337 = vmatprep.subr.bf16.mxu0 %v3149
        %3338 = vmatpush1.bf16.msra.mxu0 %v3148
        %3339 = vmatprep.subr.bf16.mxu0 %v3146
        %3340 = vmatpush1.bf16.msra.mxu0 %v3145
        %3341 = vmatprep.subr.bf16.mxu0 %v3143
        %3342 = vmatpush1.bf16.msra.mxu0 %v3142
        %3343 = vmatprep.subr.bf16.mxu0 %v3188
        %3344 = vmatpush2.bf16.msra.mxu0 %v3187
        %3345 = vmatprep.subr.bf16.mxu0 %v3185
        %3346 = vmatpush2.bf16.msra.mxu0 %v3184
        %3347 = vmatprep.subr.bf16.mxu0 %v3182
        %3348 = vmatpush2.bf16.msra.mxu0 %v3181
        %3349 = vmatprep.subr.bf16.mxu0 %v3179
        %3350 = vmatpush2.bf16.msra.mxu0 %v3178
        %3351 = vmatprep.subr.bf16.mxu0 %v3176
        %3352 = vmatpush2.bf16.msra.mxu0 %v3175
        %3353 = vmatprep.subr.bf16.mxu0 %v3173
        %3354 = vmatpush2.bf16.msra.mxu0 %v3172
        %3355 = vmatprep.subr.bf16.mxu0 %v3170
        %3356 = vmatpush2.bf16.msra.mxu0 %v3169
        %3357 = vmatprep.subr.bf16.mxu0 %v3167
        %3358 = vmatpush2.bf16.msra.mxu0 %v3166
        %3359 = vmatprep.mubr.bf16.mxu0 %v1073
        %3360 = vmatmul.mubr.bf16.gmra.mxu0 %v1072
        %v3361 = vpop.f32.mrf.mxu0
        %v3362 = vadd.f32 %v3321, %v3361
        %v3363 = vpop.f32.mrf.mxu0
        %v3364 = vadd.f32 %v3323, %v3363
        %v3365 = vpop.f32.mrf.mxu0
        %v3366 = vpop.f32.mrf.mxu0
        %3367 = vdwg.mxu0
        %3368 = vmatprep.subr.bf16.mxu0 0
        %3369 = vmatpush1.bf16.msra.mxu0 %v3117
        %3370 = vmatprep.subr.bf16.mxu0 0
        %3371 = vmatpush1.bf16.msra.mxu0 %v3114
        %3372 = vmatprep.subr.bf16.mxu0 0
        %3373 = vmatpush1.bf16.msra.mxu0 %v3111
        %3374 = vmatprep.subr.bf16.mxu0 0
        %3375 = vmatpush1.bf16.msra.mxu0 %v3108
        %3376 = vmatprep.subr.bf16.mxu0 0
        %3377 = vmatpush1.bf16.msra.mxu0 %v3105
        %3378 = vmatprep.subr.bf16.mxu0 0
        %3379 = vmatpush1.bf16.msra.mxu0 %v3102
        %3380 = vmatprep.subr.bf16.mxu0 0
        %3381 = vmatpush1.bf16.msra.mxu0 %v3099
        %3382 = vmatprep.subr.bf16.mxu0 0
        %3383 = vmatpush1.bf16.msra.mxu0 %v3096
        %3384 = vmatprep.subr.bf16.mxu0 0
        %3385 = vmatpush2.bf16.msra.mxu0 %v3141
        %3386 = vmatprep.subr.bf16.mxu0 0
        %3387 = vmatpush2.bf16.msra.mxu0 %v3138
        %3388 = vmatprep.subr.bf16.mxu0 0
        %3389 = vmatpush2.bf16.msra.mxu0 %v3135
        %3390 = vmatprep.subr.bf16.mxu0 0
        %3391 = vmatpush2.bf16.msra.mxu0 %v3132
        %3392 = vmatprep.subr.bf16.mxu0 0
        %3393 = vmatpush2.bf16.msra.mxu0 %v3129
        %3394 = vmatprep.subr.bf16.mxu0 0
        %3395 = vmatpush2.bf16.msra.mxu0 %v3126
        %3396 = vmatprep.subr.bf16.mxu0 0
        %3397 = vmatpush2.bf16.msra.mxu0 %v3123
        %3398 = vmatprep.subr.bf16.mxu0 0
        %3399 = vmatpush2.bf16.msra.mxu0 %v3120
        %3400 = vmatprep.mubr.bf16.mxu0 %v1071
        %3401 = vmatmul.mubr.bf16.gmra.mxu0 %v1070
        %v3402 = vpop.f32.mrf.mxu0
        %v3403 = vadd.f32 %v2769, %v3402
        %v3404 = vpop.f32.mrf.mxu0
        %v3405 = vpop.f32.mrf.mxu0
        %v3406 = vpop.f32.mrf.mxu0
        %3407 = vdwg.mxu0
        %3408 = vmatprep.subr.bf16.mxu0 0
        %3409 = vmatpush1.bf16.msra.mxu0 %v3165
        %3410 = vmatprep.subr.bf16.mxu0 0
        %3411 = vmatpush1.bf16.msra.mxu0 %v3162
        %3412 = vmatprep.subr.bf16.mxu0 0
        %3413 = vmatpush1.bf16.msra.mxu0 %v3159
        %3414 = vmatprep.subr.bf16.mxu0 0
        %3415 = vmatpush1.bf16.msra.mxu0 %v3156
        %3416 = vmatprep.subr.bf16.mxu0 0
        %3417 = vmatpush1.bf16.msra.mxu0 %v3153
        %3418 = vmatprep.subr.bf16.mxu0 0
        %3419 = vmatpush1.bf16.msra.mxu0 %v3150
        %3420 = vmatprep.subr.bf16.mxu0 0
        %3421 = vmatpush1.bf16.msra.mxu0 %v3147
        %3422 = vmatprep.subr.bf16.mxu0 0
        %3423 = vmatpush1.bf16.msra.mxu0 %v3144
        %3424 = vmatprep.subr.bf16.mxu0 0
        %3425 = vmatpush2.bf16.msra.mxu0 %v3189
        %3426 = vmatprep.subr.bf16.mxu0 0
        %3427 = vmatpush2.bf16.msra.mxu0 %v3186
        %3428 = vmatprep.subr.bf16.mxu0 0
        %3429 = vmatpush2.bf16.msra.mxu0 %v3183
        %3430 = vmatprep.subr.bf16.mxu0 0
        %3431 = vmatpush2.bf16.msra.mxu0 %v3180
        %3432 = vmatprep.subr.bf16.mxu0 0
        %3433 = vmatpush2.bf16.msra.mxu0 %v3177
        %3434 = vmatprep.subr.bf16.mxu0 0
        %3435 = vmatpush2.bf16.msra.mxu0 %v3174
        %3436 = vmatprep.subr.bf16.mxu0 0
        %3437 = vmatpush2.bf16.msra.mxu0 %v3171
        %3438 = vmatprep.subr.bf16.mxu0 0
        %3439 = vmatpush2.bf16.msra.mxu0 %v3168
        %3440 = vmatprep.mubr.bf16.mxu0 %v1073
        %3441 = vmatmul.mubr.bf16.gmra.mxu0 %v1072
        %v3442 = vpop.f32.mrf.mxu0
        %v3443 = vadd.f32 %v3403, %v3442
        %v3444 = vpop.f32.mrf.mxu0
        %v3445 = vpop.f32.mrf.mxu0
        %v3446 = vpop.f32.mrf.mxu0
        %3447 = vdwg.mxu0
        %v3448 = vld [vmem:[#allocation7 + $0x20] sm:$0xff]
        %v3449 = vld [vmem:[#allocation7 + $0x28] sm:$0xff]
        %v3450 = vld [vmem:[#allocation7 + $0x50] sm:$0xff]
        %v3451 = vld [vmem:[#allocation7 + $0x58] sm:$0xff]
        %v3452 = vld [vmem:[#allocation7 + $0x80] sm:$0xff]
        %v3453 = vld [vmem:[#allocation7 + $0x88] sm:$0xff]
        %v3454 = vld [vmem:[#allocation7 + $0xb0] sm:$0xff]
        %v3455 = vld [vmem:[#allocation7 + $0xb8] sm:$0xff]
        %v3456 = vld [vmem:[#allocation7 + $0xe0] sm:$0xff]
        %v3457 = vld [vmem:[#allocation7 + $0xe8] sm:$0xff]
        %v3458 = vld [vmem:[#allocation7 + $0x110] sm:$0xff]
        %v3459 = vld [vmem:[#allocation7 + $0x118] sm:$0xff]
        %v3460 = vld [vmem:[#allocation7 + $0x140] sm:$0xff]
        %v3461 = vld [vmem:[#allocation7 + $0x148] sm:$0xff]
        %v3462 = vld [vmem:[#allocation7 + $0x170] sm:$0xff]
        %v3463 = vld [vmem:[#allocation7 + $0x178] sm:$0xff]
        %v3464 = vld [vmem:[#allocation7 + $0x1a0] sm:$0xff]
        %v3465 = vld [vmem:[#allocation7 + $0x1a8] sm:$0xff]
        %v3466 = vld [vmem:[#allocation7 + $0x1d0] sm:$0xff]
        %v3467 = vld [vmem:[#allocation7 + $0x1d8] sm:$0xff]
        %v3468 = vld [vmem:[#allocation7 + $0x200] sm:$0xff]
        %v3469 = vld [vmem:[#allocation7 + $0x208] sm:$0xff]
        %v3470 = vld [vmem:[#allocation7 + $0x230] sm:$0xff]
        %v3471 = vld [vmem:[#allocation7 + $0x238] sm:$0xff]
        %v3472 = vld [vmem:[#allocation7 + $0x260] sm:$0xff]
        %v3473 = vld [vmem:[#allocation7 + $0x268] sm:$0xff]
        %v3474 = vld [vmem:[#allocation7 + $0x290] sm:$0xff]
        %v3475 = vld [vmem:[#allocation7 + $0x298] sm:$0xff]
        %v3476 = vld [vmem:[#allocation7 + $0x2c0] sm:$0xff]
        %v3477 = vld [vmem:[#allocation7 + $0x2c8] sm:$0xff]
        %v3478 = vld [vmem:[#allocation7 + $0x2f0] sm:$0xff]
        %v3479 = vld [vmem:[#allocation7 + $0x2f8] sm:$0xff]
        %v3480 = vld [vmem:[#allocation7 + $0x320] sm:$0xff]
        %v3481 = vld [vmem:[#allocation7 + $0x328] sm:$0xff]
        %v3482 = vld [vmem:[#allocation7 + $0x350] sm:$0xff]
        %v3483 = vld [vmem:[#allocation7 + $0x358] sm:$0xff]
        %v3484 = vld [vmem:[#allocation7 + $0x380] sm:$0xff]
        %v3485 = vld [vmem:[#allocation7 + $0x388] sm:$0xff]
        %v3486 = vld [vmem:[#allocation7 + $0x3b0] sm:$0xff]
        %v3487 = vld [vmem:[#allocation7 + $0x3b8] sm:$0xff]
        %v3488 = vld [vmem:[#allocation7 + $0x3e0] sm:$0xff]
        %v3489 = vld [vmem:[#allocation7 + $0x3e8] sm:$0xff]
        %v3490 = vld [vmem:[#allocation7 + $0x410] sm:$0xff]
        %v3491 = vld [vmem:[#allocation7 + $0x418] sm:$0xff]
        %v3492 = vld [vmem:[#allocation7 + $0x440] sm:$0xff]
        %v3493 = vld [vmem:[#allocation7 + $0x448] sm:$0xff]
        %v3494 = vld [vmem:[#allocation7 + $0x470] sm:$0xff]
        %v3495 = vld [vmem:[#allocation7 + $0x478] sm:$0xff]
        %v3496 = vld [vmem:[#allocation7 + $0x4a0] sm:$0xff]
        %v3497 = vld [vmem:[#allocation7 + $0x4a8] sm:$0xff]
        %v3498 = vld [vmem:[#allocation7 + $0x4d0] sm:$0xff]
        %v3499 = vld [vmem:[#allocation7 + $0x4d8] sm:$0xff]
        %v3500 = vld [vmem:[#allocation7 + $0x500] sm:$0xff]
        %v3501 = vld [vmem:[#allocation7 + $0x508] sm:$0xff]
        %v3502 = vld [vmem:[#allocation7 + $0x530] sm:$0xff]
        %v3503 = vld [vmem:[#allocation7 + $0x538] sm:$0xff]
        %v3504 = vld [vmem:[#allocation7 + $0x560] sm:$0xff]
        %v3505 = vld [vmem:[#allocation7 + $0x568] sm:$0xff]
        %v3506 = vld [vmem:[#allocation7 + $0x590] sm:$0xff]
        %v3507 = vld [vmem:[#allocation7 + $0x598] sm:$0xff]
        %v3508 = vld [vmem:[#allocation7 + $0x5c0] sm:$0xff]
        %v3509 = vld [vmem:[#allocation7 + $0x5c8] sm:$0xff]
        %v3510 = vld [vmem:[#allocation7 + $0x5f0] sm:$0xff]
        %v3511 = vld [vmem:[#allocation7 + $0x5f8] sm:$0xff]
        %v3512 = vld [vmem:[#allocation7 + $0x620] sm:$0xff]
        %v3513 = vld [vmem:[#allocation7 + $0x628] sm:$0xff]
        %v3514 = vld [vmem:[#allocation7 + $0x650] sm:$0xff]
        %v3515 = vld [vmem:[#allocation7 + $0x658] sm:$0xff]
        %v3516 = vld [vmem:[#allocation7 + $0x680] sm:$0xff]
        %v3517 = vld [vmem:[#allocation7 + $0x688] sm:$0xff]
        %v3518 = vld [vmem:[#allocation7 + $0x6b0] sm:$0xff]
        %v3519 = vld [vmem:[#allocation7 + $0x6b8] sm:$0xff]
        %v3520 = vld [vmem:[#allocation7 + $0x6e0] sm:$0xff]
        %v3521 = vld [vmem:[#allocation7 + $0x6e8] sm:$0xff]
        %v3522 = vld [vmem:[#allocation7 + $0x710] sm:$0xff]
        %v3523 = vld [vmem:[#allocation7 + $0x718] sm:$0xff]
        %v3524 = vld [vmem:[#allocation7 + $0x740] sm:$0xff]
        %v3525 = vld [vmem:[#allocation7 + $0x748] sm:$0xff]
        %v3526 = vld [vmem:[#allocation7 + $0x770] sm:$0xff]
        %v3527 = vld [vmem:[#allocation7 + $0x778] sm:$0xff]
        %v3528 = vld [vmem:[#allocation7 + $0x7a0] sm:$0xff]
        %v3529 = vld [vmem:[#allocation7 + $0x7a8] sm:$0xff]
        %v3530 = vld [vmem:[#allocation7 + $0x7d0] sm:$0xff]
        %v3531 = vld [vmem:[#allocation7 + $0x7d8] sm:$0xff]
        %v3532 = vld [vmem:[#allocation7 + $0x800] sm:$0xff]
        %v3533 = vld [vmem:[#allocation7 + $0x808] sm:$0xff]
        %v3534 = vld [vmem:[#allocation7 + $0x830] sm:$0xff]
        %v3535 = vld [vmem:[#allocation7 + $0x838] sm:$0xff]
        %v3536 = vld [vmem:[#allocation7 + $0x860] sm:$0xff]
        %v3537 = vld [vmem:[#allocation7 + $0x868] sm:$0xff]
        %v3538 = vld [vmem:[#allocation7 + $0x890] sm:$0xff]
        %v3539 = vld [vmem:[#allocation7 + $0x898] sm:$0xff]
        %v3540 = vld [vmem:[#allocation7 + $0x8c0] sm:$0xff]
        %v3541 = vld [vmem:[#allocation7 + $0x8c8] sm:$0xff]
        %v3542 = vld [vmem:[#allocation7 + $0x8f0] sm:$0xff]
        %v3543 = vld [vmem:[#allocation7 + $0x8f8] sm:$0xff]
        %v3544 = vld [vmem:[#allocation9 + $0x8] sm:$0xf]
        %v3546 = vlaneseq
        %v3547 = vshrl.u32 %v3546, 7
        %v3548 = vsub.s32 0, %v3547
        %v3549 = vrot.slane %v3544, %v3548
        %v3550 = vlaneseq
        %v3551 = vshrl.u32 %v3550, 7
        %v3552 = vsub.s32 1, %v3551
        %v3553 = vrot.slane %v3544, %v3552
        %v3554 = vlaneseq
        %v3555 = vshrl.u32 %v3554, 7
        %v3556 = vsub.s32 2, %v3555
        %v3557 = vrot.slane %v3544, %v3556
        %v3558 = vlaneseq
        %v3559 = vshrl.u32 %v3558, 7
        %v3560 = vsub.s32 3, %v3559
        %v3561 = vrot.slane %v3544, %v3560
        %v3662 = vunpack.c.l.b16 %v3448
        %v3663 = vunpack.c.h.b16 %v3448
        %v3664 = vunpack.c.l.b16 %v3449
        %v3665 = vunpack.c.h.b16 %v3449
        %v3666 = vunpack.c.l.b16 %v3450
        %v3667 = vunpack.c.h.b16 %v3450
        %v3668 = vunpack.c.l.b16 %v3451
        %v3669 = vunpack.c.h.b16 %v3451
        %v3670 = vunpack.c.l.b16 %v3452
        %v3671 = vunpack.c.h.b16 %v3452
        %v3672 = vunpack.c.l.b16 %v3453
        %v3673 = vunpack.c.h.b16 %v3453
        %v3674 = vunpack.c.l.b16 %v3454
        %v3675 = vunpack.c.h.b16 %v3454
        %v3676 = vunpack.c.l.b16 %v3455
        %v3677 = vunpack.c.h.b16 %v3455
        %v3678 = vunpack.c.l.b16 %v3456
        %v3679 = vunpack.c.h.b16 %v3456
        %v3680 = vunpack.c.l.b16 %v3457
        %v3681 = vunpack.c.h.b16 %v3457
        %v3682 = vunpack.c.l.b16 %v3458
        %v3683 = vunpack.c.h.b16 %v3458
        %v3684 = vunpack.c.l.b16 %v3459
        %v3685 = vunpack.c.h.b16 %v3459
        %v3686 = vunpack.c.l.b16 %v3460
        %v3687 = vunpack.c.h.b16 %v3460
        %v3688 = vunpack.c.l.b16 %v3461
        %v3689 = vunpack.c.h.b16 %v3461
        %v3690 = vunpack.c.l.b16 %v3462
        %v3691 = vunpack.c.h.b16 %v3462
        %v3692 = vunpack.c.l.b16 %v3463
        %v3693 = vunpack.c.h.b16 %v3463
        %v3694 = vunpack.c.l.b16 %v3464
        %v3695 = vunpack.c.h.b16 %v3464
        %v3696 = vunpack.c.l.b16 %v3465
        %v3697 = vunpack.c.h.b16 %v3465
        %v3698 = vunpack.c.l.b16 %v3466
        %v3699 = vunpack.c.h.b16 %v3466
        %v3700 = vunpack.c.l.b16 %v3467
        %v3701 = vunpack.c.h.b16 %v3467
        %v3702 = vunpack.c.l.b16 %v3468
        %v3703 = vunpack.c.h.b16 %v3468
        %v3704 = vunpack.c.l.b16 %v3469
        %v3705 = vunpack.c.h.b16 %v3469
        %v3706 = vunpack.c.l.b16 %v3470
        %v3707 = vunpack.c.h.b16 %v3470
        %v3708 = vunpack.c.l.b16 %v3471
        %v3709 = vunpack.c.h.b16 %v3471
        %v3710 = vunpack.c.l.b16 %v3472
        %v3711 = vunpack.c.h.b16 %v3472
        %v3712 = vunpack.c.l.b16 %v3473
        %v3713 = vunpack.c.h.b16 %v3473
        %v3714 = vunpack.c.l.b16 %v3474
        %v3715 = vunpack.c.h.b16 %v3474
        %v3716 = vunpack.c.l.b16 %v3475
        %v3717 = vunpack.c.h.b16 %v3475
        %v3718 = vunpack.c.l.b16 %v3476
        %v3719 = vunpack.c.h.b16 %v3476
        %v3720 = vunpack.c.l.b16 %v3477
        %v3721 = vunpack.c.h.b16 %v3477
        %v3722 = vunpack.c.l.b16 %v3478
        %v3723 = vunpack.c.h.b16 %v3478
        %v3724 = vunpack.c.l.b16 %v3479
        %v3725 = vunpack.c.h.b16 %v3479
        %v3726 = vunpack.c.l.b16 %v3480
        %v3727 = vunpack.c.h.b16 %v3480
        %v3728 = vunpack.c.l.b16 %v3481
        %v3729 = vunpack.c.h.b16 %v3481
        %v3730 = vunpack.c.l.b16 %v3482
        %v3731 = vunpack.c.h.b16 %v3482
        %v3732 = vunpack.c.l.b16 %v3483
        %v3733 = vunpack.c.h.b16 %v3483
        %v3734 = vunpack.c.l.b16 %v3484
        %v3735 = vunpack.c.h.b16 %v3484
        %v3736 = vunpack.c.l.b16 %v3485
        %v3737 = vunpack.c.h.b16 %v3485
        %v3738 = vunpack.c.l.b16 %v3486
        %v3739 = vunpack.c.h.b16 %v3486
        %v3740 = vunpack.c.l.b16 %v3487
        %v3741 = vunpack.c.h.b16 %v3487
        %v3742 = vunpack.c.l.b16 %v3488
        %v3743 = vunpack.c.h.b16 %v3488
        %v3744 = vunpack.c.l.b16 %v3489
        %v3745 = vunpack.c.h.b16 %v3489
        %v3746 = vunpack.c.l.b16 %v3490
        %v3747 = vunpack.c.h.b16 %v3490
        %v3748 = vunpack.c.l.b16 %v3491
        %v3749 = vunpack.c.h.b16 %v3491
        %v3750 = vunpack.c.l.b16 %v3492
        %v3751 = vunpack.c.h.b16 %v3492
        %v3752 = vunpack.c.l.b16 %v3493
        %v3753 = vunpack.c.h.b16 %v3493
        %v3754 = vunpack.c.l.b16 %v3494
        %v3755 = vunpack.c.h.b16 %v3494
        %v3756 = vunpack.c.l.b16 %v3495
        %v3757 = vunpack.c.h.b16 %v3495
        %v3758 = vunpack.c.l.b16 %v3496
        %v3759 = vunpack.c.h.b16 %v3496
        %v3760 = vunpack.c.l.b16 %v3497
        %v3761 = vunpack.c.h.b16 %v3497
        %v3762 = vunpack.c.l.b16 %v3498
        %v3763 = vunpack.c.h.b16 %v3498
        %v3764 = vunpack.c.l.b16 %v3499
        %v3765 = vunpack.c.h.b16 %v3499
        %v3766 = vunpack.c.l.b16 %v3500
        %v3767 = vunpack.c.h.b16 %v3500
        %v3768 = vunpack.c.l.b16 %v3501
        %v3769 = vunpack.c.h.b16 %v3501
        %v3770 = vunpack.c.l.b16 %v3502
        %v3771 = vunpack.c.h.b16 %v3502
        %v3772 = vunpack.c.l.b16 %v3503
        %v3773 = vunpack.c.h.b16 %v3503
        %v3774 = vunpack.c.l.b16 %v3504
        %v3775 = vunpack.c.h.b16 %v3504
        %v3776 = vunpack.c.l.b16 %v3505
        %v3777 = vunpack.c.h.b16 %v3505
        %v3778 = vunpack.c.l.b16 %v3506
        %v3779 = vunpack.c.h.b16 %v3506
        %v3780 = vunpack.c.l.b16 %v3507
        %v3781 = vunpack.c.h.b16 %v3507
        %v3782 = vunpack.c.l.b16 %v3508
        %v3783 = vunpack.c.h.b16 %v3508
        %v3784 = vunpack.c.l.b16 %v3509
        %v3785 = vunpack.c.h.b16 %v3509
        %v3786 = vunpack.c.l.b16 %v3510
        %v3787 = vunpack.c.h.b16 %v3510
        %v3788 = vunpack.c.l.b16 %v3511
        %v3789 = vunpack.c.h.b16 %v3511
        %v3790 = vunpack.c.l.b16 %v3512
        %v3791 = vunpack.c.h.b16 %v3512
        %v3792 = vunpack.c.l.b16 %v3513
        %v3793 = vunpack.c.h.b16 %v3513
        %v3794 = vunpack.c.l.b16 %v3514
        %v3795 = vunpack.c.h.b16 %v3514
        %v3796 = vunpack.c.l.b16 %v3515
        %v3797 = vunpack.c.h.b16 %v3515
        %v3798 = vunpack.c.l.b16 %v3516
        %v3799 = vunpack.c.h.b16 %v3516
        %v3800 = vunpack.c.l.b16 %v3517
        %v3801 = vunpack.c.h.b16 %v3517
        %v3802 = vunpack.c.l.b16 %v3518
        %v3803 = vunpack.c.h.b16 %v3518
        %v3804 = vunpack.c.l.b16 %v3519
        %v3805 = vunpack.c.h.b16 %v3519
        %v3806 = vunpack.c.l.b16 %v3520
        %v3807 = vunpack.c.h.b16 %v3520
        %v3808 = vunpack.c.l.b16 %v3521
        %v3809 = vunpack.c.h.b16 %v3521
        %v3810 = vunpack.c.l.b16 %v3522
        %v3811 = vunpack.c.h.b16 %v3522
        %v3812 = vunpack.c.l.b16 %v3523
        %v3813 = vunpack.c.h.b16 %v3523
        %v3814 = vunpack.c.l.b16 %v3524
        %v3815 = vunpack.c.h.b16 %v3524
        %v3816 = vunpack.c.l.b16 %v3525
        %v3817 = vunpack.c.h.b16 %v3525
        %v3818 = vunpack.c.l.b16 %v3526
        %v3819 = vunpack.c.h.b16 %v3526
        %v3820 = vunpack.c.l.b16 %v3527
        %v3821 = vunpack.c.h.b16 %v3527
        %v3822 = vunpack.c.l.b16 %v3528
        %v3823 = vunpack.c.h.b16 %v3528
        %v3824 = vunpack.c.l.b16 %v3529
        %v3825 = vunpack.c.h.b16 %v3529
        %v3826 = vunpack.c.l.b16 %v3530
        %v3827 = vunpack.c.h.b16 %v3530
        %v3828 = vunpack.c.l.b16 %v3531
        %v3829 = vunpack.c.h.b16 %v3531
        %v3830 = vunpack.c.l.b16 %v3532
        %v3831 = vunpack.c.h.b16 %v3532
        %v3832 = vunpack.c.l.b16 %v3533
        %v3833 = vunpack.c.h.b16 %v3533
        %v3834 = vunpack.c.l.b16 %v3534
        %v3835 = vunpack.c.h.b16 %v3534
        %v3836 = vunpack.c.l.b16 %v3535
        %v3837 = vunpack.c.h.b16 %v3535
        %v3838 = vunpack.c.l.b16 %v3536
        %v3839 = vunpack.c.h.b16 %v3536
        %v3840 = vunpack.c.l.b16 %v3537
        %v3841 = vunpack.c.h.b16 %v3537
        %v3842 = vunpack.c.l.b16 %v3538
        %v3843 = vunpack.c.h.b16 %v3538
        %v3844 = vunpack.c.l.b16 %v3539
        %v3845 = vunpack.c.h.b16 %v3539
        %v3846 = vunpack.c.l.b16 %v3540
        %v3847 = vunpack.c.h.b16 %v3540
        %v3848 = vunpack.c.l.b16 %v3541
        %v3849 = vunpack.c.h.b16 %v3541
        %v3850 = vunpack.c.l.b16 %v3542
        %v3851 = vunpack.c.h.b16 %v3542
        %v3852 = vunpack.c.l.b16 %v3543
        %v3853 = vunpack.c.h.b16 %v3543
        %v3854 = vpack.c.b16 %v3666, %v3662
        %v3855 = vpack.c.b16 %v3667, %v3663
        %v3856 = vpack.c.b16 %v3668, %v3664
        %v3857 = vpack.c.b16 %v3669, %v3665
        %v3858 = vpack.c.b16 %v3674, %v3670
        %v3859 = vpack.c.b16 %v3675, %v3671
        %v3860 = vpack.c.b16 %v3676, %v3672
        %v3861 = vpack.c.b16 %v3677, %v3673
        %v3862 = vpack.c.b16 %v3682, %v3678
        %v3863 = vpack.c.b16 %v3683, %v3679
        %v3864 = vpack.c.b16 %v3684, %v3680
        %v3865 = vpack.c.b16 %v3685, %v3681
        %v3866 = vpack.c.b16 %v3690, %v3686
        %v3867 = vpack.c.b16 %v3691, %v3687
        %v3868 = vpack.c.b16 %v3692, %v3688
        %v3869 = vpack.c.b16 %v3693, %v3689
        %v3870 = vpack.c.b16 %v3698, %v3694
        %v3871 = vpack.c.b16 %v3699, %v3695
        %v3872 = vpack.c.b16 %v3700, %v3696
        %v3873 = vpack.c.b16 %v3701, %v3697
        %v3874 = vpack.c.b16 %v3706, %v3702
        %v3875 = vpack.c.b16 %v3707, %v3703
        %v3876 = vpack.c.b16 %v3708, %v3704
        %v3877 = vpack.c.b16 %v3709, %v3705
        %v3878 = vpack.c.b16 %v3714, %v3710
        %v3879 = vpack.c.b16 %v3715, %v3711
        %v3880 = vpack.c.b16 %v3716, %v3712
        %v3881 = vpack.c.b16 %v3717, %v3713
        %v3882 = vpack.c.b16 %v3722, %v3718
        %v3883 = vpack.c.b16 %v3723, %v3719
        %v3884 = vpack.c.b16 %v3724, %v3720
        %v3885 = vpack.c.b16 %v3725, %v3721
        %v3886 = vpack.c.b16 %v3730, %v3726
        %v3887 = vpack.c.b16 %v3731, %v3727
        %v3888 = vpack.c.b16 %v3732, %v3728
        %v3889 = vpack.c.b16 %v3733, %v3729
        %v3890 = vpack.c.b16 %v3738, %v3734
        %v3891 = vpack.c.b16 %v3739, %v3735
        %v3892 = vpack.c.b16 %v3740, %v3736
        %v3893 = vpack.c.b16 %v3741, %v3737
        %v3894 = vpack.c.b16 %v3746, %v3742
        %v3895 = vpack.c.b16 %v3747, %v3743
        %v3896 = vpack.c.b16 %v3748, %v3744
        %v3897 = vpack.c.b16 %v3749, %v3745
        %v3898 = vpack.c.b16 %v3754, %v3750
        %v3899 = vpack.c.b16 %v3755, %v3751
        %v3900 = vpack.c.b16 %v3756, %v3752
        %v3901 = vpack.c.b16 %v3757, %v3753
        %v3902 = vpack.c.b16 %v3762, %v3758
        %v3903 = vpack.c.b16 %v3763, %v3759
        %v3904 = vpack.c.b16 %v3764, %v3760
        %v3905 = vpack.c.b16 %v3765, %v3761
        %v3906 = vpack.c.b16 %v3770, %v3766
        %v3907 = vpack.c.b16 %v3771, %v3767
        %v3908 = vpack.c.b16 %v3772, %v3768
        %v3909 = vpack.c.b16 %v3773, %v3769
        %v3910 = vpack.c.b16 %v3778, %v3774
        %v3911 = vpack.c.b16 %v3779, %v3775
        %v3912 = vpack.c.b16 %v3780, %v3776
        %v3913 = vpack.c.b16 %v3781, %v3777
        %v3914 = vpack.c.b16 %v3786, %v3782
        %v3915 = vpack.c.b16 %v3787, %v3783
        %v3916 = vpack.c.b16 %v3788, %v3784
        %v3917 = vpack.c.b16 %v3789, %v3785
        %v3918 = vpack.c.b16 %v3794, %v3790
        %v3919 = vpack.c.b16 %v3795, %v3791
        %v3920 = vpack.c.b16 %v3796, %v3792
        %v3921 = vpack.c.b16 %v3797, %v3793
        %v3922 = vpack.c.b16 %v3802, %v3798
        %v3923 = vpack.c.b16 %v3803, %v3799
        %v3924 = vpack.c.b16 %v3804, %v3800
        %v3925 = vpack.c.b16 %v3805, %v3801
        %v3926 = vpack.c.b16 %v3810, %v3806
        %v3927 = vpack.c.b16 %v3811, %v3807
        %v3928 = vpack.c.b16 %v3812, %v3808
        %v3929 = vpack.c.b16 %v3813, %v3809
        %v3930 = vpack.c.b16 %v3818, %v3814
        %v3931 = vpack.c.b16 %v3819, %v3815
        %v3932 = vpack.c.b16 %v3820, %v3816
        %v3933 = vpack.c.b16 %v3821, %v3817
        %v3934 = vpack.c.b16 %v3826, %v3822
        %v3935 = vpack.c.b16 %v3827, %v3823
        %v3936 = vpack.c.b16 %v3828, %v3824
        %v3937 = vpack.c.b16 %v3829, %v3825
        %v3938 = vpack.c.b16 %v3834, %v3830
        %v3939 = vpack.c.b16 %v3835, %v3831
        %v3940 = vpack.c.b16 %v3836, %v3832
        %v3941 = vpack.c.b16 %v3837, %v3833
        %v3942 = vpack.c.b16 %v3842, %v3838
        %v3943 = vpack.c.b16 %v3843, %v3839
        %v3944 = vpack.c.b16 %v3844, %v3840
        %v3945 = vpack.c.b16 %v3845, %v3841
        %v3946 = vpack.c.b16 %v3850, %v3846
        %v3947 = vpack.c.b16 %v3851, %v3847
        %v3948 = vpack.c.b16 %v3852, %v3848
        %v3949 = vpack.c.b16 %v3853, %v3849
        %4046 = vmatprep.subr.bf16.mxu0 %v3883
        %4047 = vmatpush1.bf16.msra.mxu0 %v3882
        %4048 = vmatprep.subr.bf16.mxu0 %v3879
        %4049 = vmatpush1.bf16.msra.mxu0 %v3878
        %4050 = vmatprep.subr.bf16.mxu0 %v3875
        %4051 = vmatpush1.bf16.msra.mxu0 %v3874
        %4052 = vmatprep.subr.bf16.mxu0 %v3871
        %4053 = vmatpush1.bf16.msra.mxu0 %v3870
        %4054 = vmatprep.subr.bf16.mxu0 %v3867
        %4055 = vmatpush1.bf16.msra.mxu0 %v3866
        %4056 = vmatprep.subr.bf16.mxu0 %v3863
        %4057 = vmatpush1.bf16.msra.mxu0 %v3862
        %4058 = vmatprep.subr.bf16.mxu0 %v3859
        %4059 = vmatpush1.bf16.msra.mxu0 %v3858
        %4060 = vmatprep.subr.bf16.mxu0 %v3855
        %4061 = vmatpush1.bf16.msra.mxu0 %v3854
        %4062 = vmatprep.subr.bf16.mxu0 %v3915
        %4063 = vmatpush2.bf16.msra.mxu0 %v3914
        %4064 = vmatprep.subr.bf16.mxu0 %v3911
        %4065 = vmatpush2.bf16.msra.mxu0 %v3910
        %4066 = vmatprep.subr.bf16.mxu0 %v3907
        %4067 = vmatpush2.bf16.msra.mxu0 %v3906
        %4068 = vmatprep.subr.bf16.mxu0 %v3903
        %4069 = vmatpush2.bf16.msra.mxu0 %v3902
        %4070 = vmatprep.subr.bf16.mxu0 %v3899
        %4071 = vmatpush2.bf16.msra.mxu0 %v3898
        %4072 = vmatprep.subr.bf16.mxu0 %v3895
        %4073 = vmatpush2.bf16.msra.mxu0 %v3894
        %4074 = vmatprep.subr.bf16.mxu0 %v3891
        %4075 = vmatpush2.bf16.msra.mxu0 %v3890
        %4076 = vmatprep.subr.bf16.mxu0 %v3887
        %4077 = vmatpush2.bf16.msra.mxu0 %v3886
        %4078 = vmatprep.mubr.bf16.mxu0 %v302
        %4079 = vmatmul.mubr.bf16.gmra.mxu0 %v301
        %v4080 = vpop.f32.mrf.mxu0
        %v4081 = vadd.f32 %v3549, %v4080
        %v4082 = vpop.f32.mrf.mxu0
        %v4083 = vadd.f32 %v3553, %v4082
        %v4084 = vpop.f32.mrf.mxu0
        %v4085 = vpop.f32.mrf.mxu0
        %4086 = vdwg.mxu0
        %4087 = vmatprep.subr.bf16.mxu0 %v3947
        %4088 = vmatpush1.bf16.msra.mxu0 %v3946
        %4089 = vmatprep.subr.bf16.mxu0 %v3943
        %4090 = vmatpush1.bf16.msra.mxu0 %v3942
        %4091 = vmatprep.subr.bf16.mxu0 %v3939
        %4092 = vmatpush1.bf16.msra.mxu0 %v3938
        %4093 = vmatprep.subr.bf16.mxu0 %v3935
        %4094 = vmatpush1.bf16.msra.mxu0 %v3934
        %4095 = vmatprep.subr.bf16.mxu0 %v3931
        %4096 = vmatpush1.bf16.msra.mxu0 %v3930
        %4097 = vmatprep.subr.bf16.mxu0 %v3927
        %4098 = vmatpush1.bf16.msra.mxu0 %v3926
        %4099 = vmatprep.subr.bf16.mxu0 %v3923
        %4100 = vmatpush1.bf16.msra.mxu0 %v3922
        %4101 = vmatprep.subr.bf16.mxu0 %v3919
        %4102 = vmatpush1.bf16.msra.mxu0 %v3918
        %4103 = vmatprep.subr.bf16.mxu0 0
        %4104 = vmatpush2.bf16.msra.mxu0 0
        %4105 = vmatprep.subr.bf16.mxu0 0
        %4106 = vmatpush2.bf16.msra.mxu0 0
        %4107 = vmatprep.subr.bf16.mxu0 0
        %4108 = vmatpush2.bf16.msra.mxu0 0
        %4109 = vmatprep.subr.bf16.mxu0 0
        %4110 = vmatpush2.bf16.msra.mxu0 0
        %4111 = vmatprep.subr.bf16.mxu0 0
        %4112 = vmatpush2.bf16.msra.mxu0 0
        %4113 = vmatprep.subr.bf16.mxu0 0
        %4114 = vmatpush2.bf16.msra.mxu0 0
        %4115 = vmatprep.subr.bf16.mxu0 0
        %4116 = vmatpush2.bf16.msra.mxu0 0
        %4117 = vmatprep.subr.bf16.mxu0 0
        %4118 = vmatpush2.bf16.msra.mxu0 0
        %4119 = vmatprep.mubr.bf16.mxu0 0
        %4120 = vmatmul.mubr.bf16.gmra.mxu0 %v303
        %v4121 = vpop.f32.mrf.mxu0
        %v4122 = vadd.f32 %v4081, %v4121
        %v4123 = vpop.f32.mrf.mxu0
        %v4124 = vadd.f32 %v4083, %v4123
        %v4125 = vpop.f32.mrf.mxu0
        %v4126 = vpop.f32.mrf.mxu0
        %4127 = vdwg.mxu0
        %4128 = vmatprep.subr.bf16.mxu0 %v3885
        %4129 = vmatpush1.bf16.msra.mxu0 %v3884
        %4130 = vmatprep.subr.bf16.mxu0 %v3881
        %4131 = vmatpush1.bf16.msra.mxu0 %v3880
        %4132 = vmatprep.subr.bf16.mxu0 %v3877
        %4133 = vmatpush1.bf16.msra.mxu0 %v3876
        %4134 = vmatprep.subr.bf16.mxu0 %v3873
        %4135 = vmatpush1.bf16.msra.mxu0 %v3872
        %4136 = vmatprep.subr.bf16.mxu0 %v3869
        %4137 = vmatpush1.bf16.msra.mxu0 %v3868
        %4138 = vmatprep.subr.bf16.mxu0 %v3865
        %4139 = vmatpush1.bf16.msra.mxu0 %v3864
        %4140 = vmatprep.subr.bf16.mxu0 %v3861
        %4141 = vmatpush1.bf16.msra.mxu0 %v3860
        %4142 = vmatprep.subr.bf16.mxu0 %v3857
        %4143 = vmatpush1.bf16.msra.mxu0 %v3856
        %4144 = vmatprep.subr.bf16.mxu0 %v3917
        %4145 = vmatpush2.bf16.msra.mxu0 %v3916
        %4146 = vmatprep.subr.bf16.mxu0 %v3913
        %4147 = vmatpush2.bf16.msra.mxu0 %v3912
        %4148 = vmatprep.subr.bf16.mxu0 %v3909
        %4149 = vmatpush2.bf16.msra.mxu0 %v3908
        %4150 = vmatprep.subr.bf16.mxu0 %v3905
        %4151 = vmatpush2.bf16.msra.mxu0 %v3904
        %4152 = vmatprep.subr.bf16.mxu0 %v3901
        %4153 = vmatpush2.bf16.msra.mxu0 %v3900
        %4154 = vmatprep.subr.bf16.mxu0 %v3897
        %4155 = vmatpush2.bf16.msra.mxu0 %v3896
        %4156 = vmatprep.subr.bf16.mxu0 %v3893
        %4157 = vmatpush2.bf16.msra.mxu0 %v3892
        %4158 = vmatprep.subr.bf16.mxu0 %v3889
        %4159 = vmatpush2.bf16.msra.mxu0 %v3888
        %4160 = vmatprep.mubr.bf16.mxu0 %v302
        %4161 = vmatmul.mubr.bf16.gmra.mxu0 %v301
        %v4162 = vpop.f32.mrf.mxu0
        %v4163 = vadd.f32 %v3557, %v4162
        %v4164 = vpop.f32.mrf.mxu0
        %v4165 = vadd.f32 %v3561, %v4164
        %v4166 = vpop.f32.mrf.mxu0
        %v4167 = vpop.f32.mrf.mxu0
        %4168 = vdwg.mxu0
        %4169 = vmatprep.subr.bf16.mxu0 %v3949
        %4170 = vmatpush1.bf16.msra.mxu0 %v3948
        %4171 = vmatprep.subr.bf16.mxu0 %v3945
        %4172 = vmatpush1.bf16.msra.mxu0 %v3944
        %4173 = vmatprep.subr.bf16.mxu0 %v3941
        %4174 = vmatpush1.bf16.msra.mxu0 %v3940
        %4175 = vmatprep.subr.bf16.mxu0 %v3937
        %4176 = vmatpush1.bf16.msra.mxu0 %v3936
        %4177 = vmatprep.subr.bf16.mxu0 %v3933
        %4178 = vmatpush1.bf16.msra.mxu0 %v3932
        %4179 = vmatprep.subr.bf16.mxu0 %v3929
        %4180 = vmatpush1.bf16.msra.mxu0 %v3928
        %4181 = vmatprep.subr.bf16.mxu0 %v3925
        %4182 = vmatpush1.bf16.msra.mxu0 %v3924
        %4183 = vmatprep.subr.bf16.mxu0 %v3921
        %4184 = vmatpush1.bf16.msra.mxu0 %v3920
        %4185 = vmatprep.subr.bf16.mxu0 0
        %4186 = vmatpush2.bf16.msra.mxu0 0
        %4187 = vmatprep.subr.bf16.mxu0 0
        %4188 = vmatpush2.bf16.msra.mxu0 0
        %4189 = vmatprep.subr.bf16.mxu0 0
        %4190 = vmatpush2.bf16.msra.mxu0 0
        %4191 = vmatprep.subr.bf16.mxu0 0
        %4192 = vmatpush2.bf16.msra.mxu0 0
        %4193 = vmatprep.subr.bf16.mxu0 0
        %4194 = vmatpush2.bf16.msra.mxu0 0
        %4195 = vmatprep.subr.bf16.mxu0 0
        %4196 = vmatpush2.bf16.msra.mxu0 0
        %4197 = vmatprep.subr.bf16.mxu0 0
        %4198 = vmatpush2.bf16.msra.mxu0 0
        %4199 = vmatprep.subr.bf16.mxu0 0
        %4200 = vmatpush2.bf16.msra.mxu0 0
        %4201 = vmatprep.mubr.bf16.mxu0 0
        %4202 = vmatmul.mubr.bf16.gmra.mxu0 %v303
        %v4203 = vpop.f32.mrf.mxu0
        %v4204 = vadd.f32 %v4163, %v4203
        %v4205 = vpop.f32.mrf.mxu0
        %v4206 = vadd.f32 %v4165, %v4205
        %v4207 = vpop.f32.mrf.mxu0
        %v4208 = vpop.f32.mrf.mxu0
        %4209 = vdwg.mxu0
        %v4210 = vmax.f32 %v4122, 0.0
        %v4211 = vmax.f32 %v4124, 0.0
        %v4212 = vmax.f32 %v4204, 0.0
        %v4213 = vmax.f32 %v4206, 0.0
        %v4214 = vpack.c.bf16 %v4210, %v4210
        %v4215 = vpack.c.bf16 %v4211, %v4211
        %v4216 = vpack.c.bf16 %v4212, %v4212
        %v4217 = vpack.c.bf16 %v4213, %v4213
        %v4218 = vld [vmem:[#allocation10 + $0x600] sm:$0xff]
        %v4219 = vld [vmem:[#allocation10 + $0x608] sm:$0xf]
        %v4220 = vld [vmem:[#allocation10 + $0x60c] sm:$0xff]
        %v4221 = vld [vmem:[#allocation10 + $0x614] sm:$0xf]
        %v4222 = vld [vmem:[#allocation10 + $0x618] sm:$0xff]
        %v4223 = vld [vmem:[#allocation10 + $0x620] sm:$0xf]
        %v4224 = vld [vmem:[#allocation10 + $0x624] sm:$0xff]
        %v4225 = vld [vmem:[#allocation10 + $0x62c] sm:$0xf]
        %v4226 = vld [vmem:[#allocation10 + $0x630] sm:$0xff]
        %v4227 = vld [vmem:[#allocation10 + $0x638] sm:$0xf]
        %v4228 = vld [vmem:[#allocation10 + $0x63c] sm:$0xff]
        %v4229 = vld [vmem:[#allocation10 + $0x644] sm:$0xf]
        %v4230 = vld [vmem:[#allocation10 + $0x648] sm:$0xff]
        %v4231 = vld [vmem:[#allocation10 + $0x650] sm:$0xf]
        %v4232 = vld [vmem:[#allocation10 + $0x654] sm:$0xff]
        %v4233 = vld [vmem:[#allocation10 + $0x65c] sm:$0xf]
        %v4234 = vld [vmem:[#allocation10 + $0x660] sm:$0xff]
        %v4235 = vld [vmem:[#allocation10 + $0x668] sm:$0xf]
        %v4236 = vld [vmem:[#allocation10 + $0x66c] sm:$0xff]
        %v4237 = vld [vmem:[#allocation10 + $0x674] sm:$0xf]
        %v4238 = vld [vmem:[#allocation10 + $0x678] sm:$0xff]
        %v4239 = vld [vmem:[#allocation10 + $0x680] sm:$0xf]
        %v4240 = vld [vmem:[#allocation10 + $0x684] sm:$0xff]
        %v4241 = vld [vmem:[#allocation10 + $0x68c] sm:$0xf]
        %v4242 = vld [vmem:[#allocation10 + $0x690] sm:$0xff]
        %v4243 = vld [vmem:[#allocation10 + $0x698] sm:$0xf]
        %v4244 = vld [vmem:[#allocation10 + $0x69c] sm:$0xff]
        %v4245 = vld [vmem:[#allocation10 + $0x6a4] sm:$0xf]
        %v4246 = vld [vmem:[#allocation10 + $0x6a8] sm:$0xff]
        %v4247 = vld [vmem:[#allocation10 + $0x6b0] sm:$0xf]
        %v4248 = vld [vmem:[#allocation10 + $0x6b4] sm:$0xff]
        %v4249 = vld [vmem:[#allocation10 + $0x6bc] sm:$0xf]
        %v4250 = vld [vmem:[#allocation10 + $0x6c0] sm:$0xff]
        %v4251 = vld [vmem:[#allocation10 + $0x6c8] sm:$0xf]
        %v4252 = vld [vmem:[#allocation10 + $0x6cc] sm:$0xff]
        %v4253 = vld [vmem:[#allocation10 + $0x6d4] sm:$0xf]
        %v4254 = vld [vmem:[#allocation10 + $0x6d8] sm:$0xff]
        %v4255 = vld [vmem:[#allocation10 + $0x6e0] sm:$0xf]
        %v4256 = vld [vmem:[#allocation10 + $0x6e4] sm:$0xff]
        %v4257 = vld [vmem:[#allocation10 + $0x6ec] sm:$0xf]
        %v4258 = vld [vmem:[#allocation10 + $0x6f0] sm:$0xff]
        %v4259 = vld [vmem:[#allocation10 + $0x6f8] sm:$0xf]
        %v4260 = vld [vmem:[#allocation10 + $0x6fc] sm:$0xff]
        %v4261 = vld [vmem:[#allocation10 + $0x704] sm:$0xf]
        %v4262 = vld [vmem:[#allocation10 + $0x708] sm:$0xff]
        %v4263 = vld [vmem:[#allocation10 + $0x710] sm:$0xf]
        %v4264 = vld [vmem:[#allocation10 + $0x714] sm:$0xff]
        %v4265 = vld [vmem:[#allocation10 + $0x71c] sm:$0xf]
        %v4266 = vld [vmem:[#allocation10 + $0x720] sm:$0xff]
        %v4267 = vld [vmem:[#allocation10 + $0x728] sm:$0xf]
        %v4268 = vld [vmem:[#allocation10 + $0x72c] sm:$0xff]
        %v4269 = vld [vmem:[#allocation10 + $0x734] sm:$0xf]
        %v4270 = vld [vmem:[#allocation10 + $0x738] sm:$0xff]
        %v4271 = vld [vmem:[#allocation10 + $0x740] sm:$0xf]
        %v4272 = vld [vmem:[#allocation10 + $0x744] sm:$0xff]
        %v4273 = vld [vmem:[#allocation10 + $0x74c] sm:$0xf]
        %v4274 = vld [vmem:[#allocation10 + $0x750] sm:$0xff]
        %v4275 = vld [vmem:[#allocation10 + $0x758] sm:$0xf]
        %v4276 = vld [vmem:[#allocation10 + $0x75c] sm:$0xff]
        %v4277 = vld [vmem:[#allocation10 + $0x764] sm:$0xf]
        %v4278 = vld [vmem:[#allocation10 + $0x768] sm:$0xff]
        %v4279 = vld [vmem:[#allocation10 + $0x770] sm:$0xf]
        %v4280 = vld [vmem:[#allocation10 + $0x774] sm:$0xff]
        %v4281 = vld [vmem:[#allocation10 + $0x77c] sm:$0xf]
        %v4282 = vld [vmem:[#allocation10 + $0x780] sm:$0xff]
        %v4283 = vld [vmem:[#allocation10 + $0x788] sm:$0xf]
        %v4284 = vld [vmem:[#allocation10 + $0x78c] sm:$0xff]
        %v4285 = vld [vmem:[#allocation10 + $0x794] sm:$0xf]
        %v4286 = vld [vmem:[#allocation10 + $0x798] sm:$0xff]
        %v4287 = vld [vmem:[#allocation10 + $0x7a0] sm:$0xf]
        %v4288 = vld [vmem:[#allocation10 + $0x7a4] sm:$0xff]
        %v4289 = vld [vmem:[#allocation10 + $0x7ac] sm:$0xf]
        %v4290 = vld [vmem:[#allocation10 + $0x7b0] sm:$0xff]
        %v4291 = vld [vmem:[#allocation10 + $0x7b8] sm:$0xf]
        %v4292 = vld [vmem:[#allocation10 + $0x7bc] sm:$0xff]
        %v4293 = vld [vmem:[#allocation10 + $0x7c4] sm:$0xf]
        %v4294 = vld [vmem:[#allocation10 + $0x7c8] sm:$0xff]
        %v4295 = vld [vmem:[#allocation10 + $0x7d0] sm:$0xf]
        %v4296 = vld [vmem:[#allocation10 + $0x7d4] sm:$0xff]
        %v4297 = vld [vmem:[#allocation10 + $0x7dc] sm:$0xf]
        %v4298 = vld [vmem:[#allocation10 + $0x7e0] sm:$0xff]
        %v4299 = vld [vmem:[#allocation10 + $0x7e8] sm:$0xf]
        %v4300 = vld [vmem:[#allocation10 + $0x7ec] sm:$0xff]
        %v4301 = vld [vmem:[#allocation10 + $0x7f4] sm:$0xf]
        %v4302 = vld [vmem:[#allocation10 + $0x7f8] sm:$0xff]
        %v4303 = vld [vmem:[#allocation10 + $0x800] sm:$0xf]
        %v4304 = vld [vmem:[#allocation10 + $0x804] sm:$0xff]
        %v4305 = vld [vmem:[#allocation10 + $0x80c] sm:$0xf]
        %v4306 = vld [vmem:[#allocation10 + $0x810] sm:$0xff]
        %v4307 = vld [vmem:[#allocation10 + $0x818] sm:$0xf]
        %v4308 = vld [vmem:[#allocation10 + $0x81c] sm:$0xff]
        %v4309 = vld [vmem:[#allocation10 + $0x824] sm:$0xf]
        %v4310 = vld [vmem:[#allocation10 + $0x828] sm:$0xff]
        %v4311 = vld [vmem:[#allocation10 + $0x830] sm:$0xf]
        %v4312 = vld [vmem:[#allocation10 + $0x834] sm:$0xff]
        %v4313 = vld [vmem:[#allocation10 + $0x83c] sm:$0xf]
        %v4314 = vld [vmem:[#allocation10 + $0x840] sm:$0xff]
        %v4315 = vld [vmem:[#allocation10 + $0x848] sm:$0xf]
        %v4316 = vld [vmem:[#allocation10 + $0x84c] sm:$0xff]
        %v4317 = vld [vmem:[#allocation10 + $0x854] sm:$0xf]
        %v4318 = vld [vmem:[#allocation10 + $0x858] sm:$0xff]
        %v4319 = vld [vmem:[#allocation10 + $0x860] sm:$0xf]
        %v4320 = vld [vmem:[#allocation10 + $0x864] sm:$0xff]
        %v4321 = vld [vmem:[#allocation10 + $0x86c] sm:$0xf]
        %v4322 = vld [vmem:[#allocation10 + $0x870] sm:$0xff]
        %v4323 = vld [vmem:[#allocation10 + $0x878] sm:$0xf]
        %v4324 = vld [vmem:[#allocation10 + $0x87c] sm:$0xff]
        %v4325 = vld [vmem:[#allocation10 + $0x884] sm:$0xf]
        %v4326 = vld [vmem:[#allocation10 + $0x888] sm:$0xff]
        %v4327 = vld [vmem:[#allocation10 + $0x890] sm:$0xf]
        %v4328 = vld [vmem:[#allocation10 + $0x894] sm:$0xff]
        %v4329 = vld [vmem:[#allocation10 + $0x89c] sm:$0xf]
        %v4330 = vld [vmem:[#allocation10 + $0x8a0] sm:$0xff]
        %v4331 = vld [vmem:[#allocation10 + $0x8a8] sm:$0xf]
        %v4332 = vld [vmem:[#allocation10 + $0x8ac] sm:$0xff]
        %v4333 = vld [vmem:[#allocation10 + $0x8b4] sm:$0xf]
        %v4334 = vld [vmem:[#allocation10 + $0x8b8] sm:$0xff]
        %v4335 = vld [vmem:[#allocation10 + $0x8c0] sm:$0xf]
        %v4336 = vld [vmem:[#allocation10 + $0x8c4] sm:$0xff]
        %v4337 = vld [vmem:[#allocation10 + $0x8cc] sm:$0xf]
        %v4338 = vld [vmem:[#allocation10 + $0x8d0] sm:$0xff]
        %v4339 = vld [vmem:[#allocation10 + $0x8d8] sm:$0xf]
        %v4340 = vld [vmem:[#allocation10 + $0x8dc] sm:$0xff]
        %v4341 = vld [vmem:[#allocation10 + $0x8e4] sm:$0xf]
        %v4342 = vld [vmem:[#allocation10 + $0x8e8] sm:$0xff]
        %v4343 = vld [vmem:[#allocation10 + $0x8f0] sm:$0xf]
        %v4344 = vld [vmem:[#allocation10 + $0x8f4] sm:$0xff]
        %v4345 = vld [vmem:[#allocation10 + $0x8fc] sm:$0xf]
        %v4474 = vunpack.c.l.b16 %v4218
        %v4475 = vunpack.c.h.b16 %v4218
        %v4476 = vunpack.c.l.b16 %v4219
        %v4477 = vunpack.c.l.b16 %v4220
        %v4478 = vunpack.c.h.b16 %v4220
        %v4479 = vunpack.c.l.b16 %v4221
        %v4480 = vunpack.c.l.b16 %v4222
        %v4481 = vunpack.c.h.b16 %v4222
        %v4482 = vunpack.c.l.b16 %v4223
        %v4483 = vunpack.c.l.b16 %v4224
        %v4484 = vunpack.c.h.b16 %v4224
        %v4485 = vunpack.c.l.b16 %v4225
        %v4486 = vunpack.c.l.b16 %v4226
        %v4487 = vunpack.c.h.b16 %v4226
        %v4488 = vunpack.c.l.b16 %v4227
        %v4489 = vunpack.c.l.b16 %v4228
        %v4490 = vunpack.c.h.b16 %v4228
        %v4491 = vunpack.c.l.b16 %v4229
        %v4492 = vunpack.c.l.b16 %v4230
        %v4493 = vunpack.c.h.b16 %v4230
        %v4494 = vunpack.c.l.b16 %v4231
        %v4495 = vunpack.c.l.b16 %v4232
        %v4496 = vunpack.c.h.b16 %v4232
        %v4497 = vunpack.c.l.b16 %v4233
        %v4498 = vunpack.c.l.b16 %v4234
        %v4499 = vunpack.c.h.b16 %v4234
        %v4500 = vunpack.c.l.b16 %v4235
        %v4501 = vunpack.c.l.b16 %v4236
        %v4502 = vunpack.c.h.b16 %v4236
        %v4503 = vunpack.c.l.b16 %v4237
        %v4504 = vunpack.c.l.b16 %v4238
        %v4505 = vunpack.c.h.b16 %v4238
        %v4506 = vunpack.c.l.b16 %v4239
        %v4507 = vunpack.c.l.b16 %v4240
        %v4508 = vunpack.c.h.b16 %v4240
        %v4509 = vunpack.c.l.b16 %v4241
        %v4510 = vunpack.c.l.b16 %v4242
        %v4511 = vunpack.c.h.b16 %v4242
        %v4512 = vunpack.c.l.b16 %v4243
        %v4513 = vunpack.c.l.b16 %v4244
        %v4514 = vunpack.c.h.b16 %v4244
        %v4515 = vunpack.c.l.b16 %v4245
        %v4516 = vunpack.c.l.b16 %v4246
        %v4517 = vunpack.c.h.b16 %v4246
        %v4518 = vunpack.c.l.b16 %v4247
        %v4519 = vunpack.c.l.b16 %v4248
        %v4520 = vunpack.c.h.b16 %v4248
        %v4521 = vunpack.c.l.b16 %v4249
        %v4522 = vunpack.c.l.b16 %v4250
        %v4523 = vunpack.c.h.b16 %v4250
        %v4524 = vunpack.c.l.b16 %v4251
        %v4525 = vunpack.c.l.b16 %v4252
        %v4526 = vunpack.c.h.b16 %v4252
        %v4527 = vunpack.c.l.b16 %v4253
        %v4528 = vunpack.c.l.b16 %v4254
        %v4529 = vunpack.c.h.b16 %v4254
        %v4530 = vunpack.c.l.b16 %v4255
        %v4531 = vunpack.c.l.b16 %v4256
        %v4532 = vunpack.c.h.b16 %v4256
        %v4533 = vunpack.c.l.b16 %v4257
        %v4534 = vunpack.c.l.b16 %v4258
        %v4535 = vunpack.c.h.b16 %v4258
        %v4536 = vunpack.c.l.b16 %v4259
        %v4537 = vunpack.c.l.b16 %v4260
        %v4538 = vunpack.c.h.b16 %v4260
        %v4539 = vunpack.c.l.b16 %v4261
        %v4540 = vunpack.c.l.b16 %v4262
        %v4541 = vunpack.c.h.b16 %v4262
        %v4542 = vunpack.c.l.b16 %v4263
        %v4543 = vunpack.c.l.b16 %v4264
        %v4544 = vunpack.c.h.b16 %v4264
        %v4545 = vunpack.c.l.b16 %v4265
        %v4546 = vunpack.c.l.b16 %v4266
        %v4547 = vunpack.c.h.b16 %v4266
        %v4548 = vunpack.c.l.b16 %v4267
        %v4549 = vunpack.c.l.b16 %v4268
        %v4550 = vunpack.c.h.b16 %v4268
        %v4551 = vunpack.c.l.b16 %v4269
        %v4552 = vunpack.c.l.b16 %v4270
        %v4553 = vunpack.c.h.b16 %v4270
        %v4554 = vunpack.c.l.b16 %v4271
        %v4555 = vunpack.c.l.b16 %v4272
        %v4556 = vunpack.c.h.b16 %v4272
        %v4557 = vunpack.c.l.b16 %v4273
        %v4558 = vunpack.c.l.b16 %v4274
        %v4559 = vunpack.c.h.b16 %v4274
        %v4560 = vunpack.c.l.b16 %v4275
        %v4561 = vunpack.c.l.b16 %v4276
        %v4562 = vunpack.c.h.b16 %v4276
        %v4563 = vunpack.c.l.b16 %v4277
        %v4564 = vunpack.c.l.b16 %v4278
        %v4565 = vunpack.c.h.b16 %v4278
        %v4566 = vunpack.c.l.b16 %v4279
        %v4567 = vunpack.c.l.b16 %v4280
        %v4568 = vunpack.c.h.b16 %v4280
        %v4569 = vunpack.c.l.b16 %v4281
        %v4570 = vunpack.c.l.b16 %v4282
        %v4571 = vunpack.c.h.b16 %v4282
        %v4572 = vunpack.c.l.b16 %v4283
        %v4573 = vunpack.c.l.b16 %v4284
        %v4574 = vunpack.c.h.b16 %v4284
        %v4575 = vunpack.c.l.b16 %v4285
        %v4576 = vunpack.c.l.b16 %v4286
        %v4577 = vunpack.c.h.b16 %v4286
        %v4578 = vunpack.c.l.b16 %v4287
        %v4579 = vunpack.c.l.b16 %v4288
        %v4580 = vunpack.c.h.b16 %v4288
        %v4581 = vunpack.c.l.b16 %v4289
        %v4582 = vunpack.c.l.b16 %v4290
        %v4583 = vunpack.c.h.b16 %v4290
        %v4584 = vunpack.c.l.b16 %v4291
        %v4585 = vunpack.c.l.b16 %v4292
        %v4586 = vunpack.c.h.b16 %v4292
        %v4587 = vunpack.c.l.b16 %v4293
        %v4588 = vunpack.c.l.b16 %v4294
        %v4589 = vunpack.c.h.b16 %v4294
        %v4590 = vunpack.c.l.b16 %v4295
        %v4591 = vunpack.c.l.b16 %v4296
        %v4592 = vunpack.c.h.b16 %v4296
        %v4593 = vunpack.c.l.b16 %v4297
        %v4594 = vunpack.c.l.b16 %v4298
        %v4595 = vunpack.c.h.b16 %v4298
        %v4596 = vunpack.c.l.b16 %v4299
        %v4597 = vunpack.c.l.b16 %v4300
        %v4598 = vunpack.c.h.b16 %v4300
        %v4599 = vunpack.c.l.b16 %v4301
        %v4600 = vunpack.c.l.b16 %v4302
        %v4601 = vunpack.c.h.b16 %v4302
        %v4602 = vunpack.c.l.b16 %v4303
        %v4603 = vunpack.c.l.b16 %v4304
        %v4604 = vunpack.c.h.b16 %v4304
        %v4605 = vunpack.c.l.b16 %v4305
        %v4606 = vunpack.c.l.b16 %v4306
        %v4607 = vunpack.c.h.b16 %v4306
        %v4608 = vunpack.c.l.b16 %v4307
        %v4609 = vunpack.c.l.b16 %v4308
        %v4610 = vunpack.c.h.b16 %v4308
        %v4611 = vunpack.c.l.b16 %v4309
        %v4612 = vunpack.c.l.b16 %v4310
        %v4613 = vunpack.c.h.b16 %v4310
        %v4614 = vunpack.c.l.b16 %v4311
        %v4615 = vunpack.c.l.b16 %v4312
        %v4616 = vunpack.c.h.b16 %v4312
        %v4617 = vunpack.c.l.b16 %v4313
        %v4618 = vunpack.c.l.b16 %v4314
        %v4619 = vunpack.c.h.b16 %v4314
        %v4620 = vunpack.c.l.b16 %v4315
        %v4621 = vunpack.c.l.b16 %v4316
        %v4622 = vunpack.c.h.b16 %v4316
        %v4623 = vunpack.c.l.b16 %v4317
        %v4624 = vunpack.c.l.b16 %v4318
        %v4625 = vunpack.c.h.b16 %v4318
        %v4626 = vunpack.c.l.b16 %v4319
        %v4627 = vunpack.c.l.b16 %v4320
        %v4628 = vunpack.c.h.b16 %v4320
        %v4629 = vunpack.c.l.b16 %v4321
        %v4630 = vunpack.c.l.b16 %v4322
        %v4631 = vunpack.c.h.b16 %v4322
        %v4632 = vunpack.c.l.b16 %v4323
        %v4633 = vunpack.c.l.b16 %v4324
        %v4634 = vunpack.c.h.b16 %v4324
        %v4635 = vunpack.c.l.b16 %v4325
        %v4636 = vunpack.c.l.b16 %v4326
        %v4637 = vunpack.c.h.b16 %v4326
        %v4638 = vunpack.c.l.b16 %v4327
        %v4639 = vunpack.c.l.b16 %v4328
        %v4640 = vunpack.c.h.b16 %v4328
        %v4641 = vunpack.c.l.b16 %v4329
        %v4642 = vunpack.c.l.b16 %v4330
        %v4643 = vunpack.c.h.b16 %v4330
        %v4644 = vunpack.c.l.b16 %v4331
        %v4645 = vunpack.c.l.b16 %v4332
        %v4646 = vunpack.c.h.b16 %v4332
        %v4647 = vunpack.c.l.b16 %v4333
        %v4648 = vunpack.c.l.b16 %v4334
        %v4649 = vunpack.c.h.b16 %v4334
        %v4650 = vunpack.c.l.b16 %v4335
        %v4651 = vunpack.c.l.b16 %v4336
        %v4652 = vunpack.c.h.b16 %v4336
        %v4653 = vunpack.c.l.b16 %v4337
        %v4654 = vunpack.c.l.b16 %v4338
        %v4655 = vunpack.c.h.b16 %v4338
        %v4656 = vunpack.c.l.b16 %v4339
        %v4657 = vunpack.c.l.b16 %v4340
        %v4658 = vunpack.c.h.b16 %v4340
        %v4659 = vunpack.c.l.b16 %v4341
        %v4660 = vunpack.c.l.b16 %v4342
        %v4661 = vunpack.c.h.b16 %v4342
        %v4662 = vunpack.c.l.b16 %v4343
        %v4663 = vunpack.c.l.b16 %v4344
        %v4664 = vunpack.c.h.b16 %v4344
        %v4665 = vunpack.c.l.b16 %v4345
        %v4666 = vpack.c.b16 %v4477, %v4474
        %v4667 = vpack.c.b16 %v4478, %v4475
        %v4668 = vpack.c.b16 %v4479, %v4476
        %v4669 = vpack.c.b16 %v4483, %v4480
        %v4670 = vpack.c.b16 %v4484, %v4481
        %v4671 = vpack.c.b16 %v4485, %v4482
        %v4672 = vpack.c.b16 %v4489, %v4486
        %v4673 = vpack.c.b16 %v4490, %v4487
        %v4674 = vpack.c.b16 %v4491, %v4488
        %v4675 = vpack.c.b16 %v4495, %v4492
        %v4676 = vpack.c.b16 %v4496, %v4493
        %v4677 = vpack.c.b16 %v4497, %v4494
        %v4678 = vpack.c.b16 %v4501, %v4498
        %v4679 = vpack.c.b16 %v4502, %v4499
        %v4680 = vpack.c.b16 %v4503, %v4500
        %v4681 = vpack.c.b16 %v4507, %v4504
        %v4682 = vpack.c.b16 %v4508, %v4505
        %v4683 = vpack.c.b16 %v4509, %v4506
        %v4684 = vpack.c.b16 %v4513, %v4510
        %v4685 = vpack.c.b16 %v4514, %v4511
        %v4686 = vpack.c.b16 %v4515, %v4512
        %v4687 = vpack.c.b16 %v4519, %v4516
        %v4688 = vpack.c.b16 %v4520, %v4517
        %v4689 = vpack.c.b16 %v4521, %v4518
        %v4690 = vpack.c.b16 %v4525, %v4522
        %v4691 = vpack.c.b16 %v4526, %v4523
        %v4692 = vpack.c.b16 %v4527, %v4524
        %v4693 = vpack.c.b16 %v4531, %v4528
        %v4694 = vpack.c.b16 %v4532, %v4529
        %v4695 = vpack.c.b16 %v4533, %v4530
        %v4696 = vpack.c.b16 %v4537, %v4534
        %v4697 = vpack.c.b16 %v4538, %v4535
        %v4698 = vpack.c.b16 %v4539, %v4536
        %v4699 = vpack.c.b16 %v4543, %v4540
        %v4700 = vpack.c.b16 %v4544, %v4541
        %v4701 = vpack.c.b16 %v4545, %v4542
        %v4702 = vpack.c.b16 %v4549, %v4546
        %v4703 = vpack.c.b16 %v4550, %v4547
        %v4704 = vpack.c.b16 %v4551, %v4548
        %v4705 = vpack.c.b16 %v4555, %v4552
        %v4706 = vpack.c.b16 %v4556, %v4553
        %v4707 = vpack.c.b16 %v4557, %v4554
        %v4708 = vpack.c.b16 %v4561, %v4558
        %v4709 = vpack.c.b16 %v4562, %v4559
        %v4710 = vpack.c.b16 %v4563, %v4560
        %v4711 = vpack.c.b16 %v4567, %v4564
        %v4712 = vpack.c.b16 %v4568, %v4565
        %v4713 = vpack.c.b16 %v4569, %v4566
        %v4714 = vpack.c.b16 %v4573, %v4570
        %v4715 = vpack.c.b16 %v4574, %v4571
        %v4716 = vpack.c.b16 %v4575, %v4572
        %v4717 = vpack.c.b16 %v4579, %v4576
        %v4718 = vpack.c.b16 %v4580, %v4577
        %v4719 = vpack.c.b16 %v4581, %v4578
        %v4720 = vpack.c.b16 %v4585, %v4582
        %v4721 = vpack.c.b16 %v4586, %v4583
        %v4722 = vpack.c.b16 %v4587, %v4584
        %v4723 = vpack.c.b16 %v4591, %v4588
        %v4724 = vpack.c.b16 %v4592, %v4589
        %v4725 = vpack.c.b16 %v4593, %v4590
        %v4726 = vpack.c.b16 %v4597, %v4594
        %v4727 = vpack.c.b16 %v4598, %v4595
        %v4728 = vpack.c.b16 %v4599, %v4596
        %v4729 = vpack.c.b16 %v4603, %v4600
        %v4730 = vpack.c.b16 %v4604, %v4601
        %v4731 = vpack.c.b16 %v4605, %v4602
        %v4732 = vpack.c.b16 %v4609, %v4606
        %v4733 = vpack.c.b16 %v4610, %v4607
        %v4734 = vpack.c.b16 %v4611, %v4608
        %v4735 = vpack.c.b16 %v4615, %v4612
        %v4736 = vpack.c.b16 %v4616, %v4613
        %v4737 = vpack.c.b16 %v4617, %v4614
        %v4738 = vpack.c.b16 %v4621, %v4618
        %v4739 = vpack.c.b16 %v4622, %v4619
        %v4740 = vpack.c.b16 %v4623, %v4620
        %v4741 = vpack.c.b16 %v4627, %v4624
        %v4742 = vpack.c.b16 %v4628, %v4625
        %v4743 = vpack.c.b16 %v4629, %v4626
        %v4744 = vpack.c.b16 %v4633, %v4630
        %v4745 = vpack.c.b16 %v4634, %v4631
        %v4746 = vpack.c.b16 %v4635, %v4632
        %v4747 = vpack.c.b16 %v4639, %v4636
        %v4748 = vpack.c.b16 %v4640, %v4637
        %v4749 = vpack.c.b16 %v4641, %v4638
        %v4750 = vpack.c.b16 %v4645, %v4642
        %v4751 = vpack.c.b16 %v4646, %v4643
        %v4752 = vpack.c.b16 %v4647, %v4644
        %v4753 = vpack.c.b16 %v4651, %v4648
        %v4754 = vpack.c.b16 %v4652, %v4649
        %v4755 = vpack.c.b16 %v4653, %v4650
        %v4756 = vpack.c.b16 %v4657, %v4654
        %v4757 = vpack.c.b16 %v4658, %v4655
        %v4758 = vpack.c.b16 %v4659, %v4656
        %v4759 = vpack.c.b16 %v4663, %v4660
        %v4760 = vpack.c.b16 %v4664, %v4661
        %v4761 = vpack.c.b16 %v4665, %v4662
        %4858 = vmatprep.subr.bf16.mxu0 %v4688
        %4859 = vmatpush1.bf16.msra.mxu0 %v4687
        %4860 = vmatprep.subr.bf16.mxu0 %v4685
        %4861 = vmatpush1.bf16.msra.mxu0 %v4684
        %4862 = vmatprep.subr.bf16.mxu0 %v4682
        %4863 = vmatpush1.bf16.msra.mxu0 %v4681
        %4864 = vmatprep.subr.bf16.mxu0 %v4679
        %4865 = vmatpush1.bf16.msra.mxu0 %v4678
        %4866 = vmatprep.subr.bf16.mxu0 %v4676
        %4867 = vmatpush1.bf16.msra.mxu0 %v4675
        %4868 = vmatprep.subr.bf16.mxu0 %v4673
        %4869 = vmatpush1.bf16.msra.mxu0 %v4672
        %4870 = vmatprep.subr.bf16.mxu0 %v4670
        %4871 = vmatpush1.bf16.msra.mxu0 %v4669
        %4872 = vmatprep.subr.bf16.mxu0 %v4667
        %4873 = vmatpush1.bf16.msra.mxu0 %v4666
        %4874 = vmatprep.subr.bf16.mxu0 %v4712
        %4875 = vmatpush2.bf16.msra.mxu0 %v4711
        %4876 = vmatprep.subr.bf16.mxu0 %v4709
        %4877 = vmatpush2.bf16.msra.mxu0 %v4708
        %4878 = vmatprep.subr.bf16.mxu0 %v4706
        %4879 = vmatpush2.bf16.msra.mxu0 %v4705
        %4880 = vmatprep.subr.bf16.mxu0 %v4703
        %4881 = vmatpush2.bf16.msra.mxu0 %v4702
        %4882 = vmatprep.subr.bf16.mxu0 %v4700
        %4883 = vmatpush2.bf16.msra.mxu0 %v4699
        %4884 = vmatprep.subr.bf16.mxu0 %v4697
        %4885 = vmatpush2.bf16.msra.mxu0 %v4696
        %4886 = vmatprep.subr.bf16.mxu0 %v4694
        %4887 = vmatpush2.bf16.msra.mxu0 %v4693
        %4888 = vmatprep.subr.bf16.mxu0 %v4691
        %4889 = vmatpush2.bf16.msra.mxu0 %v4690
        %4890 = vmatprep.mubr.bf16.mxu0 %v4215
        %4891 = vmatmul.mubr.bf16.gmra.mxu0 %v4214
        %v4892 = vpop.f32.mrf.mxu0
        %v4893 = vadd.f32 0.0, %v4892
        %v4894 = vpop.f32.mrf.mxu0
        %v4895 = vadd.f32 0.0, %v4894
        %v4896 = vpop.f32.mrf.mxu0
        %v4897 = vpop.f32.mrf.mxu0
        %4898 = vdwg.mxu0
        %4899 = vmatprep.subr.bf16.mxu0 %v4736
        %4900 = vmatpush1.bf16.msra.mxu0 %v4735
        %4901 = vmatprep.subr.bf16.mxu0 %v4733
        %4902 = vmatpush1.bf16.msra.mxu0 %v4732
        %4903 = vmatprep.subr.bf16.mxu0 %v4730
        %4904 = vmatpush1.bf16.msra.mxu0 %v4729
        %4905 = vmatprep.subr.bf16.mxu0 %v4727
        %4906 = vmatpush1.bf16.msra.mxu0 %v4726
        %4907 = vmatprep.subr.bf16.mxu0 %v4724
        %4908 = vmatpush1.bf16.msra.mxu0 %v4723
        %4909 = vmatprep.subr.bf16.mxu0 %v4721
        %4910 = vmatpush1.bf16.msra.mxu0 %v4720
        %4911 = vmatprep.subr.bf16.mxu0 %v4718
        %4912 = vmatpush1.bf16.msra.mxu0 %v4717
        %4913 = vmatprep.subr.bf16.mxu0 %v4715
        %4914 = vmatpush1.bf16.msra.mxu0 %v4714
        %4915 = vmatprep.subr.bf16.mxu0 %v4760
        %4916 = vmatpush2.bf16.msra.mxu0 %v4759
        %4917 = vmatprep.subr.bf16.mxu0 %v4757
        %4918 = vmatpush2.bf16.msra.mxu0 %v4756
        %4919 = vmatprep.subr.bf16.mxu0 %v4754
        %4920 = vmatpush2.bf16.msra.mxu0 %v4753
        %4921 = vmatprep.subr.bf16.mxu0 %v4751
        %4922 = vmatpush2.bf16.msra.mxu0 %v4750
        %4923 = vmatprep.subr.bf16.mxu0 %v4748
        %4924 = vmatpush2.bf16.msra.mxu0 %v4747
        %4925 = vmatprep.subr.bf16.mxu0 %v4745
        %4926 = vmatpush2.bf16.msra.mxu0 %v4744
        %4927 = vmatprep.subr.bf16.mxu0 %v4742
        %4928 = vmatpush2.bf16.msra.mxu0 %v4741
        %4929 = vmatprep.subr.bf16.mxu0 %v4739
        %4930 = vmatpush2.bf16.msra.mxu0 %v4738
        %4931 = vmatprep.mubr.bf16.mxu0 %v4217
        %4932 = vmatmul.mubr.bf16.gmra.mxu0 %v4216
        %v4933 = vpop.f32.mrf.mxu0
        %v4934 = vadd.f32 %v4893, %v4933
        %v4935 = vpop.f32.mrf.mxu0
        %v4936 = vadd.f32 %v4895, %v4935
        %v4937 = vpop.f32.mrf.mxu0
        %v4938 = vpop.f32.mrf.mxu0
        %4939 = vdwg.mxu0
        %4940 = vmatprep.subr.bf16.mxu0 0
        %4941 = vmatpush1.bf16.msra.mxu0 %v4689
        %4942 = vmatprep.subr.bf16.mxu0 0
        %4943 = vmatpush1.bf16.msra.mxu0 %v4686
        %4944 = vmatprep.subr.bf16.mxu0 0
        %4945 = vmatpush1.bf16.msra.mxu0 %v4683
        %4946 = vmatprep.subr.bf16.mxu0 0
        %4947 = vmatpush1.bf16.msra.mxu0 %v4680
        %4948 = vmatprep.subr.bf16.mxu0 0
        %4949 = vmatpush1.bf16.msra.mxu0 %v4677
        %4950 = vmatprep.subr.bf16.mxu0 0
        %4951 = vmatpush1.bf16.msra.mxu0 %v4674
        %4952 = vmatprep.subr.bf16.mxu0 0
        %4953 = vmatpush1.bf16.msra.mxu0 %v4671
        %4954 = vmatprep.subr.bf16.mxu0 0
        %4955 = vmatpush1.bf16.msra.mxu0 %v4668
        %4956 = vmatprep.subr.bf16.mxu0 0
        %4957 = vmatpush2.bf16.msra.mxu0 %v4713
        %4958 = vmatprep.subr.bf16.mxu0 0
        %4959 = vmatpush2.bf16.msra.mxu0 %v4710
        %4960 = vmatprep.subr.bf16.mxu0 0
        %4961 = vmatpush2.bf16.msra.mxu0 %v4707
        %4962 = vmatprep.subr.bf16.mxu0 0
        %4963 = vmatpush2.bf16.msra.mxu0 %v4704
        %4964 = vmatprep.subr.bf16.mxu0 0
        %4965 = vmatpush2.bf16.msra.mxu0 %v4701
        %4966 = vmatprep.subr.bf16.mxu0 0
        %4967 = vmatpush2.bf16.msra.mxu0 %v4698
        %4968 = vmatprep.subr.bf16.mxu0 0
        %4969 = vmatpush2.bf16.msra.mxu0 %v4695
        %4970 = vmatprep.subr.bf16.mxu0 0
        %4971 = vmatpush2.bf16.msra.mxu0 %v4692
        %4972 = vmatprep.mubr.bf16.mxu0 %v4215
        %4973 = vmatmul.mubr.bf16.gmra.mxu0 %v4214
        %v4974 = vpop.f32.mrf.mxu0
        %v4975 = vadd.f32 0.0, %v4974
        %v4976 = vpop.f32.mrf.mxu0
        %v4977 = vpop.f32.mrf.mxu0
        %v4978 = vpop.f32.mrf.mxu0
        %4979 = vdwg.mxu0
        %4980 = vmatprep.subr.bf16.mxu0 0
        %4981 = vmatpush1.bf16.msra.mxu0 %v4737
        %4982 = vmatprep.subr.bf16.mxu0 0
        %4983 = vmatpush1.bf16.msra.mxu0 %v4734
        %4984 = vmatprep.subr.bf16.mxu0 0
        %4985 = vmatpush1.bf16.msra.mxu0 %v4731
        %4986 = vmatprep.subr.bf16.mxu0 0
        %4987 = vmatpush1.bf16.msra.mxu0 %v4728
        %4988 = vmatprep.subr.bf16.mxu0 0
        %4989 = vmatpush1.bf16.msra.mxu0 %v4725
        %4990 = vmatprep.subr.bf16.mxu0 0
        %4991 = vmatpush1.bf16.msra.mxu0 %v4722
        %4992 = vmatprep.subr.bf16.mxu0 0
        %4993 = vmatpush1.bf16.msra.mxu0 %v4719
        %4994 = vmatprep.subr.bf16.mxu0 0
        %4995 = vmatpush1.bf16.msra.mxu0 %v4716
        %4996 = vmatprep.subr.bf16.mxu0 0
        %4997 = vmatpush2.bf16.msra.mxu0 %v4761
        %4998 = vmatprep.subr.bf16.mxu0 0
        %4999 = vmatpush2.bf16.msra.mxu0 %v4758
        %5000 = vmatprep.subr.bf16.mxu0 0
        %5001 = vmatpush2.bf16.msra.mxu0 %v4755
        %5002 = vmatprep.subr.bf16.mxu0 0
        %5003 = vmatpush2.bf16.msra.mxu0 %v4752
        %5004 = vmatprep.subr.bf16.mxu0 0
        %5005 = vmatpush2.bf16.msra.mxu0 %v4749
        %5006 = vmatprep.subr.bf16.mxu0 0
        %5007 = vmatpush2.bf16.msra.mxu0 %v4746
        %5008 = vmatprep.subr.bf16.mxu0 0
        %5009 = vmatpush2.bf16.msra.mxu0 %v4743
        %5010 = vmatprep.subr.bf16.mxu0 0
        %5011 = vmatpush2.bf16.msra.mxu0 %v4740
        %5012 = vmatprep.mubr.bf16.mxu0 %v4217
        %5013 = vmatmul.mubr.bf16.gmra.mxu0 %v4216
        %v5014 = vpop.f32.mrf.mxu0
        %v5015 = vadd.f32 %v4975, %v5014
        %v5016 = vpop.f32.mrf.mxu0
        %v5017 = vpop.f32.mrf.mxu0
        %v5018 = vpop.f32.mrf.mxu0
        %5019 = vdwg.mxu0
        %v5020 = vadd.f32 %v3362, %v4934
        %v5021 = vadd.f32 %v3364, %v4936
        %v5022 = vadd.f32 %v3443, %v5015
        %v5023 = vld [vmem:[#allocation12] sm:$0x7]
        %v5025 = vlaneseq
        %v5026 = vshrl.u32 %v5025, 7
        %v5027 = vsub.s32 0, %v5026
        %v5028 = vrot.slane %v5023, %v5027
        %v5029 = vlaneseq
        %v5030 = vshrl.u32 %v5029, 7
        %v5031 = vsub.s32 1, %v5030
        %v5032 = vrot.slane %v5023, %v5031
        %v5033 = vlaneseq
        %v5034 = vshrl.u32 %v5033, 7
        %v5035 = vsub.s32 2, %v5034
        %v5036 = vrot.slane %v5023, %v5035
        %v5040 = vadd.f32 %v5020, %v5028
        %v5041 = vadd.f32 %v5021, %v5032
        %v5042 = vadd.f32 %v5022, %v5036
        %5043 = vst [vmem:[%s296] sm:$0xff] %v5040
        %5044 = vst [vmem:[%s296 + $0x8] sm:$0xff] %v5041
        %5045 = vst [vmem:[%s296 + $0x10] sm:$0xff] %v5042
        %s5046 = sand.u32 %s144, 1
        %s5047 = scalar_lea.sflag [#allocation6], %s5046
        %s5048 = sand.u32 %s144, 1
        %s5049 = smul.addr %s5048, 24
        %s5050 = scalar_lea.vmem [#allocation13], %s5049
        // Predicated region
        $region61: #{tpu_custom_call.1} parent=39 // pred_check
          %p5051 = pneg %p154
        $region62: #{tpu_custom_call.1} parent=39 // pred_check_branch
          %5053 = sbr.rel (%p5051) target = $region64
        $region63: #{tpu_custom_call.1} parent=39 // pred_region
          %s5055 = ssub.s32 384, 384
          %5056 = vsyncadd %s5047, %s5055
          %s5057 = smul.addr %s26, 3
          %s5058 = smul.addr %s5057, 128
          %s5059 = scalar_lea.hbm %s6, %s5058
          %s5061 = sshll.u32 %s5050, 4
          %s5062 = int_to_ptr.vmem [resolvable:$true] %s5061
          %5064 = dma.vmem_to_hbm [thread:$0]  %s5062, 384, %s5059, %s5047
        $region64: #{tpu_custom_call.1} parent=39 // pred_fallthru
          _
      $region40: #{tpu_custom_call.1} parent=5 // pred_fallthru
        _
      %p5065 = scmp.le.s32.totalorder 2, %s21
      // Predicated region
      $region65: #{tpu_custom_call.1} parent=5 // pred_check
        %p5066 = pneg %p5065
      $region66: #{tpu_custom_call.1} parent=5 // pred_check_branch
        %5068 = sbr.rel (%p5066) target = $region68
      $region67: #{tpu_custom_call.1} parent=5 // pred_region
        %s5069 = ssub.s32 %s21, 2
        // Predicated region
        $region69: #{tpu_custom_call.1} parent=67 // pred_check
          %p5070 = pneg %p160
        $region70: #{tpu_custom_call.1} parent=67 // pred_check_branch
          %5072 = sbr.rel (%p5070) target = $region72
        $region71: #{tpu_custom_call.1} parent=67 // pred_region
          %s5073 = sand.u32 %s145, 1
          %s5074 = scalar_lea.sflag [#allocation6], %s5073
          %s5075 = sand.u32 %s145, 1
          %s5076 = smul.addr %s5075, 24
          %s5077 = scalar_lea.vmem [#allocation13], %s5076
          %5078 = dma.done %s5074, 384
        $region72: #{tpu_custom_call.1} parent=67 // pred_fallthru
          _
      $region68: #{tpu_custom_call.1} parent=5 // pred_fallthru
        _
    $region6: #{tpu_custom_call.1} parent=1 // loop_footer
      %s25 = sadd.s32 1, %s21
    $region7: #{tpu_custom_call.1} parent=1 // loop_footer_branch
      %20 = sbr.rel target = $region3
    $region8: #{tpu_custom_call.1} parent=1 // loop_exit
      _
    %5079 = vsyncpa [#allocation5], 1
    %s5080 = scalar_lea.sflag [#allocation5], 1
    %5081 = vsyncpa %s5080, 1
    %5082 = vsyncpa [#allocation8], 1
    %5083 = vsyncpa [#allocation11], 1
    %5084 = vsyncpa [#allocation6], 1
    %s5085 = scalar_lea.sflag [#allocation6], 1
    %5086 = vsyncpa %s5085, 1

</llo_original>
